<compile_context>
chip_gen: v7x
topology: tpu7x:2x2x1
jax: 0.10.0
libtpu: 0.0.40
codegen_flags: <defaults>
</compile_context>

<pallas_src>
import functools

import jax
import jax.numpy as jnp
from jax.experimental import pallas as pl
from jax.experimental.pallas import tpu as pltpu


def _round_up(x, m):
    return ((x + m - 1) // m) * m


# ----------------------------- Pallas kernel ---------------------------------
def _color_mlp_kernel(sh0_ref, g_ref, s_ref,
                      w1a_ref, w1b_ref, w1c_ref, b1_ref,
                      w2_ref, b2_ref, w3_ref,
                      o_ref, *, scale):
    # sh0_ref: [TM, 3], g_ref: [TM, G], s_ref: [TM, E]   (current row tile)
    # w1a/w1b/w1c: [3,H]/[G,H]/[E,H] row-slices of w1;   b1_ref: [1, H]
    # w2_ref: [H, H]  b2_ref: [1, H]  w3_ref: [H, 3] (final layer has no bias)
    # o_ref:  [TM, 3]
    #
    # First layer = concat(sh0, g, s) @ w1, computed as a sum of three partial
    # matmuls so the concatenated input never has to exist in HBM.
    h = jnp.dot(sh0_ref[...], w1a_ref[...], preferred_element_type=jnp.float32)
    h = h + jnp.dot(g_ref[...], w1b_ref[...], preferred_element_type=jnp.float32)
    h = h + jnp.dot(s_ref[...], w1c_ref[...], preferred_element_type=jnp.float32)
    h = jnp.maximum(h + b1_ref[...], 0.0)

    h = jnp.dot(h, w2_ref[...], preferred_element_type=jnp.float32) + b2_ref[...]
    h = jnp.maximum(h, 0.0)

    out = jnp.dot(h, w3_ref[...], preferred_element_type=jnp.float32) * scale
    o_ref[...] = out.astype(o_ref.dtype)


def color_mlp_pallas(sh0, gembedding, sembedding, split_params, *,
                     color_mlp_coeff, tm=2048):
    """sh0 [N,3], gembedding [N,G], sembedding [N,E] float32 -> [N,3] float32."""
    w1a, w1b, w1c, b1, w2, b2, w3 = split_params
    n = sh0.shape[0]
    g_dim = gembedding.shape[1]
    e_dim = sembedding.shape[1]
    h = w2.shape[0]

    # Pick an effective row tile: large (amortizes per-step overhead) but never
    # larger than the (8-aligned) problem size; pad N up to a tile multiple.
    tm_eff = min(tm, _round_up(n, 8))
    tm_eff = _round_up(tm_eff, 8)
    n_pad = _round_up(n, tm_eff)
    if n_pad != n:
        pad = n_pad - n
        sh0 = jnp.pad(sh0, ((0, pad), (0, 0)))
        gembedding = jnp.pad(gembedding, ((0, pad), (0, 0)))
        sembedding = jnp.pad(sembedding, ((0, pad), (0, 0)))

    grid = (n_pad // tm_eff,)
    kernel = functools.partial(_color_mlp_kernel, scale=color_mlp_coeff)

    out = pl.pallas_call(
        kernel,
        out_shape=jax.ShapeDtypeStruct((n_pad, 3), jnp.float32),
        grid_spec=pltpu.PrefetchScalarGridSpec(
            num_scalar_prefetch=0,
            grid=grid,
            in_specs=[
                pl.BlockSpec((tm_eff, 3), lambda i: (i, 0)),      # sh0 row tile
                pl.BlockSpec((tm_eff, g_dim), lambda i: (i, 0)),  # gembedding tile
                pl.BlockSpec((tm_eff, e_dim), lambda i: (i, 0)),  # sembedding tile
                pl.BlockSpec((3, h), lambda i: (0, 0)),           # w1[:3]
                pl.BlockSpec((g_dim, h), lambda i: (0, 0)),       # w1[3:3+G]
                pl.BlockSpec((e_dim, h), lambda i: (0, 0)),       # w1[3+G:]
                pl.BlockSpec((1, h), lambda i: (0, 0)),           # b1
                pl.BlockSpec((h, h), lambda i: (0, 0)),           # w2
                pl.BlockSpec((1, h), lambda i: (0, 0)),           # b2
                pl.BlockSpec((h, 3), lambda i: (0, 0)),           # w3
            ],
            out_specs=pl.BlockSpec((tm_eff, 3), lambda i: (i, 0)),
        ),
        compiler_params=pltpu.CompilerParams(
            dimension_semantics=("parallel",),
            vmem_limit_bytes=32 * 1024 * 1024,
        ),
    )(sh0, gembedding, sembedding, w1a, w1b, w1c, b1, w2, b2, w3)

    return out[:n] if n_pad != n else out


# --------------------------- ColorMLP forward (glue) --------------------------
def color_mlp_forward(gembedding, sembedding, sh0, params, *, color_mlp_coeff,
                      feat_in_mlp="inject", tm=2048):
    # Mirrors ColorMLP.forward. 'inject-detach' only affects gradients; the
    # forward values are identical, so both inject variants share this path.
    w1, b1, w2, b2, w3 = params
    g_dim = gembedding.shape[-1]
    if "inject" in feat_in_mlp:
        w1a, w1b, w1c = w1[:3], w1[3:3 + g_dim], w1[3 + g_dim:]
    else:
        # No sh0 injection: feed a zero sh0 block and a zero w1 row-slice so the
        # same fused kernel can be reused (contribution is exactly zero).
        sh0 = jnp.zeros((gembedding.shape[0], 3), w1.dtype)
        w1a = jnp.zeros((3, w1.shape[1]), w1.dtype)
        w1b, w1c = w1[:g_dim], w1[g_dim:]
    split_params = (w1a, w1b, w1c, b1, w2, b2, w3)
    return color_mlp_pallas(sh0, gembedding, sembedding, split_params,
                            color_mlp_coeff=color_mlp_coeff, tm=tm)


# ------------------------------ reference (pure JAX) --------------------------
def color_mlp_reference(gembedding, sembedding, sh0, params, *, color_mlp_coeff):
    w1, b1, w2, b2, w3 = params
    inp = jnp.concatenate((sh0, gembedding, sembedding), axis=-1)
    x = jnp.maximum(inp @ w1 + b1, 0.0)
    x = jnp.maximum(x @ w2 + b2, 0.0)
    return (x @ w3) * color_mlp_coeff


if __name__ == "__main__":
    # Synthetic config (small, consistent with the module):
    shot_embeddings_dim = 16          # sembedding dim
    transform_n_fourier_freqs = 2     # gembedding dim = 6 * 2 = 12
    transform_hidden_dim = 32
    transform_n_hidden_layers = 2
    color_mlp_coeff = 0.5
    feat_in = 3                       # feat_in_mlp = 'inject'

    g_dim = 6 * transform_n_fourier_freqs
    d_in = shot_embeddings_dim + feat_in + g_dim   # 16 + 3 + 12 = 31
    H = transform_hidden_dim
    N = 999                            # not a tile/8 multiple -> exercises padding

    key = jax.random.PRNGKey(0)
    k = jax.random.split(key, 8)
    gembedding = jax.random.normal(k[0], (N, g_dim), jnp.float32)
    sembedding = jax.random.normal(k[1], (N, shot_embeddings_dim), jnp.float32)
    sh0 = jax.random.normal(k[2], (N, 3), jnp.float32)

    # Deterministic parameter init. NOTE: the PyTorch module zero-inits the final
    # layer weight; we use small random weights so the kernel compute is exercised
    # (forward semantics are identical regardless of weight values).
    w1 = jax.random.normal(k[3], (d_in, H), jnp.float32) * 0.1
    b1 = jax.random.normal(k[4], (1, H), jnp.float32) * 0.1
    w2 = jax.random.normal(k[5], (H, H), jnp.float32) * 0.1
    b2 = jax.random.normal(k[6], (1, H), jnp.float32) * 0.1
    w3 = jax.random.normal(k[7], (H, 3), jnp.float32) * 0.1
    params = (w1, b1, w2, b2, w3)

    out = color_mlp_forward(gembedding, sembedding, sh0, params,
                            color_mlp_coeff=color_mlp_coeff)
    out = jax.block_until_ready(out)

    ref = color_mlp_reference(gembedding, sembedding, sh0, params,
                              color_mlp_coeff=color_mlp_coeff)
    assert out.shape == (N, 3)
    assert jnp.allclose(out, ref, atol=1e-5, rtol=1e-5), "mismatch vs JAX reference"

    print("KERNEL_OK")
</pallas_src>

<mosaic_0001>
module attributes {stable_mosaic.version = 11 : i64} {
  func.func @_color_mlp_kernel(%arg0: i32, %arg1: memref<1000x3xf32, #tpu.memory_space<vmem>>, %arg2: memref<1000x12xf32, #tpu.memory_space<vmem>>, %arg3: memref<1000x16xf32, #tpu.memory_space<vmem>>, %arg4: memref<3x32xf32, #tpu.memory_space<vmem>>, %arg5: memref<12x32xf32, #tpu.memory_space<vmem>>, %arg6: memref<16x32xf32, #tpu.memory_space<vmem>>, %arg7: memref<1x32xf32, #tpu.memory_space<vmem>>, %arg8: memref<32x32xf32, #tpu.memory_space<vmem>>, %arg9: memref<1x32xf32, #tpu.memory_space<vmem>>, %arg10: memref<32x3xf32, #tpu.memory_space<vmem>>, %arg11: memref<1000x3xf32, #tpu.memory_space<vmem>>) attributes {dimension_semantics = [#tpu.dimension_semantics<parallel>], iteration_bounds = array<i64: 1>, scalar_prefetch = 0 : i64, scratch_operands = 0 : i64, tpu.core_type = #tpu.core_type<tc>, window_params = [{transform_indices = @transform_0, window_bounds = array<i64: 1000, 3>}, {transform_indices = @transform_1, window_bounds = array<i64: 1000, 12>}, {transform_indices = @transform_2, window_bounds = array<i64: 1000, 16>}, {pipeline_mode = #tpu.pipeline_mode<synchronous>, transform_indices = @transform_3, window_bounds = array<i64: 3, 32>}, {pipeline_mode = #tpu.pipeline_mode<synchronous>, transform_indices = @transform_4, window_bounds = array<i64: 12, 32>}, {pipeline_mode = #tpu.pipeline_mode<synchronous>, transform_indices = @transform_5, window_bounds = array<i64: 16, 32>}, {pipeline_mode = #tpu.pipeline_mode<synchronous>, transform_indices = @transform_6, window_bounds = array<i64: 1, 32>}, {pipeline_mode = #tpu.pipeline_mode<synchronous>, transform_indices = @transform_7, window_bounds = array<i64: 32, 32>}, {pipeline_mode = #tpu.pipeline_mode<synchronous>, transform_indices = @transform_8, window_bounds = array<i64: 1, 32>}, {pipeline_mode = #tpu.pipeline_mode<synchronous>, transform_indices = @transform_9, window_bounds = array<i64: 32, 3>}, {transform_indices = @transform_10, window_bounds = array<i64: 1000, 3>}]} {
    %c0 = arith.constant 0 : index
    %c0_0 = arith.constant 0 : index
    %0 = vector.load %arg1[%c0, %c0_0] : memref<1000x3xf32, #tpu.memory_space<vmem>>, vector<1000x3xf32>
    %c0_1 = arith.constant 0 : index
    %c0_2 = arith.constant 0 : index
    %1 = vector.load %arg4[%c0_1, %c0_2] : memref<3x32xf32, #tpu.memory_space<vmem>>, vector<3x32xf32>
    %cst = arith.constant dense<0.000000e+00> : vector<1000x32xf32>
    %2 = tpu.matmul %0, %1, %cst {dimension_numbers = #tpu.dot_dimension_numbers<[1], [0], [0], [1], [0, 0, 1, 1], [], []>} : vector<1000x3xf32>, vector<3x32xf32>, vector<1000x32xf32> -> vector<1000x32xf32>
    %c0_3 = arith.constant 0 : index
    %c0_4 = arith.constant 0 : index
    %3 = vector.load %arg2[%c0_3, %c0_4] : memref<1000x12xf32, #tpu.memory_space<vmem>>, vector<1000x12xf32>
    %c0_5 = arith.constant 0 : index
    %c0_6 = arith.constant 0 : index
    %4 = vector.load %arg5[%c0_5, %c0_6] : memref<12x32xf32, #tpu.memory_space<vmem>>, vector<12x32xf32>
    %cst_7 = arith.constant dense<0.000000e+00> : vector<1000x32xf32>
    %5 = tpu.matmul %3, %4, %cst_7 {dimension_numbers = #tpu.dot_dimension_numbers<[1], [0], [0], [1], [0, 0, 1, 1], [], []>} : vector<1000x12xf32>, vector<12x32xf32>, vector<1000x32xf32> -> vector<1000x32xf32>
    %6 = arith.addf %2, %5 : vector<1000x32xf32>
    %c0_8 = arith.constant 0 : index
    %c0_9 = arith.constant 0 : index
    %7 = vector.load %arg3[%c0_8, %c0_9] : memref<1000x16xf32, #tpu.memory_space<vmem>>, vector<1000x16xf32>
    %c0_10 = arith.constant 0 : index
    %c0_11 = arith.constant 0 : index
    %8 = vector.load %arg6[%c0_10, %c0_11] : memref<16x32xf32, #tpu.memory_space<vmem>>, vector<16x32xf32>
    %cst_12 = arith.constant dense<0.000000e+00> : vector<1000x32xf32>
    %9 = tpu.matmul %7, %8, %cst_12 {dimension_numbers = #tpu.dot_dimension_numbers<[1], [0], [0], [1], [0, 0, 1, 1], [], []>} : vector<1000x16xf32>, vector<16x32xf32>, vector<1000x32xf32> -> vector<1000x32xf32>
    %10 = arith.addf %6, %9 : vector<1000x32xf32>
    %c0_13 = arith.constant 0 : index
    %c0_14 = arith.constant 0 : index
    %11 = vector.load %arg7[%c0_13, %c0_14] : memref<1x32xf32, #tpu.memory_space<vmem>>, vector<1x32xf32>
    %12 = vector.broadcast %11 : vector<1x32xf32> to vector<1000x32xf32>
    %13 = arith.addf %10, %12 : vector<1000x32xf32>
    %cst_15 = arith.constant 0.000000e+00 : f32
    %14 = vector.broadcast %cst_15 : f32 to vector<1000x32xf32>
    %15 = arith.maximumf %13, %14 : vector<1000x32xf32>
    %c0_16 = arith.constant 0 : index
    %c0_17 = arith.constant 0 : index
    %16 = vector.load %arg8[%c0_16, %c0_17] : memref<32x32xf32, #tpu.memory_space<vmem>>, vector<32x32xf32>
    %cst_18 = arith.constant dense<0.000000e+00> : vector<1000x32xf32>
    %17 = tpu.matmul %15, %16, %cst_18 {dimension_numbers = #tpu.dot_dimension_numbers<[1], [0], [0], [1], [0, 0, 1, 1], [], []>} : vector<1000x32xf32>, vector<32x32xf32>, vector<1000x32xf32> -> vector<1000x32xf32>
    %c0_19 = arith.constant 0 : index
    %c0_20 = arith.constant 0 : index
    %18 = vector.load %arg9[%c0_19, %c0_20] : memref<1x32xf32, #tpu.memory_space<vmem>>, vector<1x32xf32>
    %19 = vector.broadcast %18 : vector<1x32xf32> to vector<1000x32xf32>
    %20 = arith.addf %17, %19 : vector<1000x32xf32>
    %cst_21 = arith.constant 0.000000e+00 : f32
    %21 = vector.broadcast %cst_21 : f32 to vector<1000x32xf32>
    %22 = arith.maximumf %20, %21 : vector<1000x32xf32>
    %c0_22 = arith.constant 0 : index
    %c0_23 = arith.constant 0 : index
    %23 = vector.load %arg10[%c0_22, %c0_23] : memref<32x3xf32, #tpu.memory_space<vmem>>, vector<32x3xf32>
    %cst_24 = arith.constant dense<0.000000e+00> : vector<1000x3xf32>
    %24 = tpu.matmul %22, %23, %cst_24 {dimension_numbers = #tpu.dot_dimension_numbers<[1], [0], [0], [1], [0, 0, 1, 1], [], []>} : vector<1000x32xf32>, vector<32x3xf32>, vector<1000x3xf32> -> vector<1000x3xf32>
    %cst_25 = arith.constant 5.000000e-01 : f32
    %25 = vector.broadcast %cst_25 : f32 to vector<1000x3xf32>
    %26 = arith.mulf %24, %25 : vector<1000x3xf32>
    %c0_26 = arith.constant 0 : index
    %c0_27 = arith.constant 0 : index
    %27 = vector.load %arg11[%c0_26, %c0_27] : memref<1000x3xf32, #tpu.memory_space<vmem>>, vector<1000x3xf32>
    tpu.vector_store %arg11[%c0_26, %c0_27], %26 {strides = array<i32>} : memref<1000x3xf32, #tpu.memory_space<vmem>>, vector<1000x3xf32>,
    return
  }
  func.func @transform_0(%arg0: i32) -> (i32, i32) {
    %c0_i32 = arith.constant 0 : i32
    %c0_i32_0 = arith.constant 0 : i32
    return %arg0, %c0_i32 : i32, i32
  }
  func.func @transform_1(%arg0: i32) -> (i32, i32) {
    %c0_i32 = arith.constant 0 : i32
    %c0_i32_0 = arith.constant 0 : i32
    return %arg0, %c0_i32 : i32, i32
  }
  func.func @transform_2(%arg0: i32) -> (i32, i32) {
    %c0_i32 = arith.constant 0 : i32
    %c0_i32_0 = arith.constant 0 : i32
    return %arg0, %c0_i32 : i32, i32
  }
  func.func @transform_3(%arg0: i32) -> (i32, i32) {
    %c0_i32 = arith.constant 0 : i32
    %c0_i32_0 = arith.constant 0 : i32
    %c0_i32_1 = arith.constant 0 : i32
    return %c0_i32, %c0_i32_0 : i32, i32
  }
  func.func @transform_4(%arg0: i32) -> (i32, i32) {
    %c0_i32 = arith.constant 0 : i32
    %c0_i32_0 = arith.constant 0 : i32
    %c0_i32_1 = arith.constant 0 : i32
    return %c0_i32, %c0_i32_0 : i32, i32
  }
  func.func @transform_5(%arg0: i32) -> (i32, i32) {
    %c0_i32 = arith.constant 0 : i32
    %c0_i32_0 = arith.constant 0 : i32
    %c0_i32_1 = arith.constant 0 : i32
    return %c0_i32, %c0_i32_0 : i32, i32
  }
  func.func @transform_6(%arg0: i32) -> (i32, i32) {
    %c0_i32 = arith.constant 0 : i32
    %c0_i32_0 = arith.constant 0 : i32
    %c0_i32_1 = arith.constant 0 : i32
    return %c0_i32, %c0_i32_0 : i32, i32
  }
  func.func @transform_7(%arg0: i32) -> (i32, i32) {
    %c0_i32 = arith.constant 0 : i32
    %c0_i32_0 = arith.constant 0 : i32
    %c0_i32_1 = arith.constant 0 : i32
    return %c0_i32, %c0_i32_0 : i32, i32
  }
  func.func @transform_8(%arg0: i32) -> (i32, i32) {
    %c0_i32 = arith.constant 0 : i32
    %c0_i32_0 = arith.constant 0 : i32
    %c0_i32_1 = arith.constant 0 : i32
    return %c0_i32, %c0_i32_0 : i32, i32
  }
  func.func @transform_9(%arg0: i32) -> (i32, i32) {
    %c0_i32 = arith.constant 0 : i32
    %c0_i32_0 = arith.constant 0 : i32
    %c0_i32_1 = arith.constant 0 : i32
    return %c0_i32, %c0_i32_0 : i32, i32
  }
  func.func @transform_10(%arg0: i32) -> (i32, i32) {
    %c0_i32 = arith.constant 0 : i32
    %c0_i32_0 = arith.constant 0 : i32
    return %arg0, %c0_i32 : i32, i32
  }
}

</mosaic_0001>

<llo_original>
// kernel: tpu_custom_call.1
$region0: #{tpu_custom_call.1}
  #allocation0 [shape = 'u32[]', space=smem, size = 0x4, offset = 0x4, fixed_abs, tag = 'smem constant byte address 0x4 - core index']
  #allocation1 [shape = 'u32[144,128]{1,0:T(1,128)}', space=vmem, size = 0x12000, scoped, tag = 'internal scratch']
  %s0 = inlined_call_operand.vmem [shape: f32[1000,3], index: 0, kind: input, shape index: {}]
  %s1 = inlined_call_operand.vmem [shape: f32[1000,12], index: 1, kind: input, shape index: {}]
  %s2 = inlined_call_operand.vmem [shape: f32[1000,16], index: 2, kind: input, shape index: {}]
  %s3 = inlined_call_operand.vmem [shape: f32[3,32], index: 3, kind: input, shape index: {}]
  %s4 = inlined_call_operand.vmem [shape: f32[12,32], index: 4, kind: input, shape index: {}]
  %s5 = inlined_call_operand.vmem [shape: f32[16,32], index: 5, kind: input, shape index: {}]
  %s6 = inlined_call_operand.vmem [shape: f32[1,32], index: 6, kind: input, shape index: {}]
  %s7 = inlined_call_operand.vmem [shape: f32[32,32], index: 7, kind: input, shape index: {}]
  %s8 = inlined_call_operand.vmem [shape: f32[1,32], index: 8, kind: input, shape index: {}]
  %s9 = inlined_call_operand.vmem [shape: f32[32,3], index: 9, kind: input, shape index: {}]
  %s10 = inlined_call_operand.vmem [shape: f32[1000,3], index: 10, kind: output, shape index: {}]
  %s11 = sld [smem:[#allocation0]]
  $region50: #{tpu_custom_call.1} parent=0
    _
  %s13 = ssub.s32 1, %s11
  %s14 = scalar_select 0, %s13, %s11
  // Predicated region
  $region2: #{tpu_custom_call.1} parent=0 // pred_check
    _
  $region3: #{tpu_custom_call.1} parent=0 // pred_check_branch
    %16 = sbr.rel (0) target = $region5
  $region4: #{tpu_custom_call.1} parent=0 // pred_region
    _
  $region5: #{tpu_custom_call.1} parent=0 // pred_fallthru
    _
  // Predicated region
  $region6: #{tpu_custom_call.1} parent=0 // pred_check
    _
  $region7: #{tpu_custom_call.1} parent=0 // pred_check_branch
    %18 = sbr.rel (0) target = $region9
  $region8: #{tpu_custom_call.1} parent=0 // pred_region
    _
  $region9: #{tpu_custom_call.1} parent=0 // pred_fallthru
    _
  // Predicated region
  $region10: #{tpu_custom_call.1} parent=0 // pred_check
    _
  $region11: #{tpu_custom_call.1} parent=0 // pred_check_branch
    %20 = sbr.rel (0) target = $region13
  $region12: #{tpu_custom_call.1} parent=0 // pred_region
    _
  $region13: #{tpu_custom_call.1} parent=0 // pred_fallthru
    _
  // Predicated region
  $region14: #{tpu_custom_call.1} parent=0 // pred_check
    _
  $region15: #{tpu_custom_call.1} parent=0 // pred_check_branch
    %22 = sbr.rel (0) target = $region17
  $region16: #{tpu_custom_call.1} parent=0 // pred_region
    _
  $region17: #{tpu_custom_call.1} parent=0 // pred_fallthru
    _
  // Predicated region
  $region18: #{tpu_custom_call.1} parent=0 // pred_check
    _
  $region19: #{tpu_custom_call.1} parent=0 // pred_check_branch
    %24 = sbr.rel (0) target = $region21
  $region20: #{tpu_custom_call.1} parent=0 // pred_region
    _
  $region21: #{tpu_custom_call.1} parent=0 // pred_fallthru
    _
  // Predicated region
  $region22: #{tpu_custom_call.1} parent=0 // pred_check
    _
  $region23: #{tpu_custom_call.1} parent=0 // pred_check_branch
    %26 = sbr.rel (0) target = $region25
  $region24: #{tpu_custom_call.1} parent=0 // pred_region
    _
  $region25: #{tpu_custom_call.1} parent=0 // pred_fallthru
    _
  // Predicated region
  $region26: #{tpu_custom_call.1} parent=0 // pred_check
    _
  $region27: #{tpu_custom_call.1} parent=0 // pred_check_branch
    %28 = sbr.rel (0) target = $region29
  $region28: #{tpu_custom_call.1} parent=0 // pred_region
    _
  $region29: #{tpu_custom_call.1} parent=0 // pred_fallthru
    _
  // Predicated region
  $region30: #{tpu_custom_call.1} parent=0 // pred_check
    _
  $region31: #{tpu_custom_call.1} parent=0 // pred_check_branch
    %30 = sbr.rel (0) target = $region33
  $region32: #{tpu_custom_call.1} parent=0 // pred_region
    _
  $region33: #{tpu_custom_call.1} parent=0 // pred_fallthru
    _
  // Predicated region
  $region34: #{tpu_custom_call.1} parent=0 // pred_check
    _
  $region35: #{tpu_custom_call.1} parent=0 // pred_check_branch
    %32 = sbr.rel (0) target = $region37
  $region36: #{tpu_custom_call.1} parent=0 // pred_region
    _
  $region37: #{tpu_custom_call.1} parent=0 // pred_fallthru
    _
  // Predicated region
  $region38: #{tpu_custom_call.1} parent=0 // pred_check
    _
  $region39: #{tpu_custom_call.1} parent=0 // pred_check_branch
    %34 = sbr.rel (0) target = $region41
  $region40: #{tpu_custom_call.1} parent=0 // pred_region
    _
  $region41: #{tpu_custom_call.1} parent=0 // pred_fallthru
    _
  %v35 = vld [vmem:[%s0] sm:$0xff]
  %v36 = vld [vmem:[%s0 + $0x8] sm:$0xff]
  %v37 = vld [vmem:[%s0 + $0x10] sm:$0xff]
  %v38 = vld [vmem:[%s0 + $0x18] sm:$0xff]
  %v39 = vld [vmem:[%s0 + $0x20] sm:$0xff]
  %v40 = vld [vmem:[%s0 + $0x28] sm:$0xff]
  %v41 = vld [vmem:[%s0 + $0x30] sm:$0xff]
  %v42 = vld [vmem:[%s0 + $0x38] sm:$0xff]
  %v43 = vld [vmem:[%s0 + $0x40] sm:$0xff]
  %v44 = vld [vmem:[%s0 + $0x48] sm:$0xff]
  %v45 = vld [vmem:[%s0 + $0x50] sm:$0xff]
  %v46 = vld [vmem:[%s0 + $0x58] sm:$0xff]
  %v47 = vld [vmem:[%s0 + $0x60] sm:$0xff]
  %v48 = vld [vmem:[%s0 + $0x68] sm:$0xff]
  %v49 = vld [vmem:[%s0 + $0x70] sm:$0xff]
  %v50 = vld [vmem:[%s0 + $0x78] sm:$0xff]
  %v51 = vld [vmem:[%s0 + $0x80] sm:$0xff]
  %v52 = vld [vmem:[%s0 + $0x88] sm:$0xff]
  %v53 = vld [vmem:[%s0 + $0x90] sm:$0xff]
  %v54 = vld [vmem:[%s0 + $0x98] sm:$0xff]
  %v55 = vld [vmem:[%s0 + $0xa0] sm:$0xff]
  %v56 = vld [vmem:[%s0 + $0xa8] sm:$0xff]
  %v57 = vld [vmem:[%s0 + $0xb0] sm:$0xff]
  %v58 = vld [vmem:[%s0 + $0xb8] sm:$0xff]
  %v59 = vld [vmem:[%s0 + $0xc0] sm:$0xff]
  %v60 = vld [vmem:[%s0 + $0xc8] sm:$0xff]
  %v61 = vld [vmem:[%s0 + $0xd0] sm:$0xff]
  %v62 = vld [vmem:[%s0 + $0xd8] sm:$0xff]
  %v63 = vld [vmem:[%s0 + $0xe0] sm:$0xff]
  %v64 = vld [vmem:[%s0 + $0xe8] sm:$0xff]
  %v65 = vld [vmem:[%s0 + $0xf0] sm:$0xff]
  %v66 = vld [vmem:[%s0 + $0xf8] sm:$0xff]
  %v67 = vld [vmem:[%s0 + $0x100] sm:$0xff]
  %v68 = vld [vmem:[%s0 + $0x108] sm:$0xff]
  %v69 = vld [vmem:[%s0 + $0x110] sm:$0xff]
  %v70 = vld [vmem:[%s0 + $0x118] sm:$0xff]
  %v71 = vld [vmem:[%s0 + $0x120] sm:$0xff]
  %v72 = vld [vmem:[%s0 + $0x128] sm:$0xff]
  %v73 = vld [vmem:[%s0 + $0x130] sm:$0xff]
  %v74 = vld [vmem:[%s0 + $0x138] sm:$0xff]
  %v75 = vld [vmem:[%s0 + $0x140] sm:$0xff]
  %v76 = vld [vmem:[%s0 + $0x148] sm:$0xff]
  %v77 = vld [vmem:[%s0 + $0x150] sm:$0xff]
  %v78 = vld [vmem:[%s0 + $0x158] sm:$0xff]
  %v79 = vld [vmem:[%s0 + $0x160] sm:$0xff]
  %v80 = vld [vmem:[%s0 + $0x168] sm:$0xff]
  %v81 = vld [vmem:[%s0 + $0x170] sm:$0xff]
  %v82 = vld [vmem:[%s0 + $0x178] sm:$0xff]
  %v83 = vld [vmem:[%s0 + $0x180] sm:$0xff]
  %v84 = vld [vmem:[%s0 + $0x188] sm:$0xff]
  %v85 = vld [vmem:[%s0 + $0x190] sm:$0xff]
  %v86 = vld [vmem:[%s0 + $0x198] sm:$0xff]
  %v87 = vld [vmem:[%s0 + $0x1a0] sm:$0xff]
  %v88 = vld [vmem:[%s0 + $0x1a8] sm:$0xff]
  %v89 = vld [vmem:[%s0 + $0x1b0] sm:$0xff]
  %v90 = vld [vmem:[%s0 + $0x1b8] sm:$0xff]
  %v91 = vld [vmem:[%s0 + $0x1c0] sm:$0xff]
  %v92 = vld [vmem:[%s0 + $0x1c8] sm:$0xff]
  %v93 = vld [vmem:[%s0 + $0x1d0] sm:$0xff]
  %v94 = vld [vmem:[%s0 + $0x1d8] sm:$0xff]
  %v95 = vld [vmem:[%s0 + $0x1e0] sm:$0xff]
  %v96 = vld [vmem:[%s0 + $0x1e8] sm:$0xff]
  %v97 = vld [vmem:[%s0 + $0x1f0] sm:$0xff]
  %v98 = vld [vmem:[%s0 + $0x1f8] sm:$0xff]
  %v99 = vld [vmem:[%s0 + $0x200] sm:$0xff]
  %v100 = vld [vmem:[%s0 + $0x208] sm:$0xff]
  %v101 = vld [vmem:[%s0 + $0x210] sm:$0xff]
  %v102 = vld [vmem:[%s0 + $0x218] sm:$0xff]
  %v103 = vld [vmem:[%s0 + $0x220] sm:$0xff]
  %v104 = vld [vmem:[%s0 + $0x228] sm:$0xff]
  %v105 = vld [vmem:[%s0 + $0x230] sm:$0xff]
  %v106 = vld [vmem:[%s0 + $0x238] sm:$0xff]
  %v107 = vld [vmem:[%s0 + $0x240] sm:$0xff]
  %v108 = vld [vmem:[%s0 + $0x248] sm:$0xff]
  %v109 = vld [vmem:[%s0 + $0x250] sm:$0xff]
  %v110 = vld [vmem:[%s0 + $0x258] sm:$0xff]
  %v111 = vld [vmem:[%s0 + $0x260] sm:$0xff]
  %v112 = vld [vmem:[%s0 + $0x268] sm:$0xff]
  %v113 = vld [vmem:[%s0 + $0x270] sm:$0xff]
  %v114 = vld [vmem:[%s0 + $0x278] sm:$0xff]
  %v115 = vld [vmem:[%s0 + $0x280] sm:$0xff]
  %v116 = vld [vmem:[%s0 + $0x288] sm:$0xff]
  %v117 = vld [vmem:[%s0 + $0x290] sm:$0xff]
  %v118 = vld [vmem:[%s0 + $0x298] sm:$0xff]
  %v119 = vld [vmem:[%s0 + $0x2a0] sm:$0xff]
  %v120 = vld [vmem:[%s0 + $0x2a8] sm:$0xff]
  %v121 = vld [vmem:[%s0 + $0x2b0] sm:$0xff]
  %v122 = vld [vmem:[%s0 + $0x2b8] sm:$0xff]
  %v123 = vld [vmem:[%s0 + $0x2c0] sm:$0xff]
  %v124 = vld [vmem:[%s0 + $0x2c8] sm:$0xff]
  %v125 = vld [vmem:[%s0 + $0x2d0] sm:$0xff]
  %v126 = vld [vmem:[%s0 + $0x2d8] sm:$0xff]
  %v127 = vld [vmem:[%s0 + $0x2e0] sm:$0xff]
  %v128 = vld [vmem:[%s0 + $0x2e8] sm:$0xff]
  %v129 = vld [vmem:[%s0 + $0x2f0] sm:$0xff]
  %v130 = vld [vmem:[%s0 + $0x2f8] sm:$0xff]
  %v131 = vld [vmem:[%s0 + $0x300] sm:$0xff]
  %v132 = vld [vmem:[%s0 + $0x308] sm:$0xff]
  %v133 = vld [vmem:[%s0 + $0x310] sm:$0xff]
  %v134 = vld [vmem:[%s0 + $0x318] sm:$0xff]
  %v135 = vld [vmem:[%s0 + $0x320] sm:$0xff]
  %v136 = vld [vmem:[%s0 + $0x328] sm:$0xff]
  %v137 = vld [vmem:[%s0 + $0x330] sm:$0xff]
  %v138 = vld [vmem:[%s0 + $0x338] sm:$0xff]
  %v139 = vld [vmem:[%s0 + $0x340] sm:$0xff]
  %v140 = vld [vmem:[%s0 + $0x348] sm:$0xff]
  %v141 = vld [vmem:[%s0 + $0x350] sm:$0xff]
  %v142 = vld [vmem:[%s0 + $0x358] sm:$0xff]
  %v143 = vld [vmem:[%s0 + $0x360] sm:$0xff]
  %v144 = vld [vmem:[%s0 + $0x368] sm:$0xff]
  %v145 = vld [vmem:[%s0 + $0x370] sm:$0xff]
  %v146 = vld [vmem:[%s0 + $0x378] sm:$0xff]
  %v147 = vld [vmem:[%s0 + $0x380] sm:$0xff]
  %v148 = vld [vmem:[%s0 + $0x388] sm:$0xff]
  %v149 = vld [vmem:[%s0 + $0x390] sm:$0xff]
  %v150 = vld [vmem:[%s0 + $0x398] sm:$0xff]
  %v151 = vld [vmem:[%s0 + $0x3a0] sm:$0xff]
  %v152 = vld [vmem:[%s0 + $0x3a8] sm:$0xff]
  %v153 = vld [vmem:[%s0 + $0x3b0] sm:$0xff]
  %v154 = vld [vmem:[%s0 + $0x3b8] sm:$0xff]
  %v155 = vld [vmem:[%s0 + $0x3c0] sm:$0xff]
  %v156 = vld [vmem:[%s0 + $0x3c8] sm:$0xff]
  %v157 = vld [vmem:[%s0 + $0x3d0] sm:$0xff]
  %v158 = vld [vmem:[%s0 + $0x3d8] sm:$0xff]
  %v159 = vld [vmem:[%s0 + $0x3e0] sm:$0xff]
  %v160 = vld [vmem:[%s3] sm:$0x7]
  %v161 = vld [vmem:[%s1] sm:$0xff]
  %v162 = vld [vmem:[%s1 + $0x8] sm:$0xff]
  %v163 = vld [vmem:[%s1 + $0x10] sm:$0xff]
  %v164 = vld [vmem:[%s1 + $0x18] sm:$0xff]
  %v165 = vld [vmem:[%s1 + $0x20] sm:$0xff]
  %v166 = vld [vmem:[%s1 + $0x28] sm:$0xff]
  %v167 = vld [vmem:[%s1 + $0x30] sm:$0xff]
  %v168 = vld [vmem:[%s1 + $0x38] sm:$0xff]
  %v169 = vld [vmem:[%s1 + $0x40] sm:$0xff]
  %v170 = vld [vmem:[%s1 + $0x48] sm:$0xff]
  %v171 = vld [vmem:[%s1 + $0x50] sm:$0xff]
  %v172 = vld [vmem:[%s1 + $0x58] sm:$0xff]
  %v173 = vld [vmem:[%s1 + $0x60] sm:$0xff]
  %v174 = vld [vmem:[%s1 + $0x68] sm:$0xff]
  %v175 = vld [vmem:[%s1 + $0x70] sm:$0xff]
  %v176 = vld [vmem:[%s1 + $0x78] sm:$0xff]
  %v177 = vld [vmem:[%s1 + $0x80] sm:$0xff]
  %v178 = vld [vmem:[%s1 + $0x88] sm:$0xff]
  %v179 = vld [vmem:[%s1 + $0x90] sm:$0xff]
  %v180 = vld [vmem:[%s1 + $0x98] sm:$0xff]
  %v181 = vld [vmem:[%s1 + $0xa0] sm:$0xff]
  %v182 = vld [vmem:[%s1 + $0xa8] sm:$0xff]
  %v183 = vld [vmem:[%s1 + $0xb0] sm:$0xff]
  %v184 = vld [vmem:[%s1 + $0xb8] sm:$0xff]
  %v185 = vld [vmem:[%s1 + $0xc0] sm:$0xff]
  %v186 = vld [vmem:[%s1 + $0xc8] sm:$0xff]
  %v187 = vld [vmem:[%s1 + $0xd0] sm:$0xff]
  %v188 = vld [vmem:[%s1 + $0xd8] sm:$0xff]
  %v189 = vld [vmem:[%s1 + $0xe0] sm:$0xff]
  %v190 = vld [vmem:[%s1 + $0xe8] sm:$0xff]
  %v191 = vld [vmem:[%s1 + $0xf0] sm:$0xff]
  %v192 = vld [vmem:[%s1 + $0xf8] sm:$0xff]
  %v193 = vld [vmem:[%s1 + $0x100] sm:$0xff]
  %v194 = vld [vmem:[%s1 + $0x108] sm:$0xff]
  %v195 = vld [vmem:[%s1 + $0x110] sm:$0xff]
  %v196 = vld [vmem:[%s1 + $0x118] sm:$0xff]
  %v197 = vld [vmem:[%s1 + $0x120] sm:$0xff]
  %v198 = vld [vmem:[%s1 + $0x128] sm:$0xff]
  %v199 = vld [vmem:[%s1 + $0x130] sm:$0xff]
  %v200 = vld [vmem:[%s1 + $0x138] sm:$0xff]
  %v201 = vld [vmem:[%s1 + $0x140] sm:$0xff]
  %v202 = vld [vmem:[%s1 + $0x148] sm:$0xff]
  %v203 = vld [vmem:[%s1 + $0x150] sm:$0xff]
  %v204 = vld [vmem:[%s1 + $0x158] sm:$0xff]
  %v205 = vld [vmem:[%s1 + $0x160] sm:$0xff]
  %v206 = vld [vmem:[%s1 + $0x168] sm:$0xff]
  %v207 = vld [vmem:[%s1 + $0x170] sm:$0xff]
  %v208 = vld [vmem:[%s1 + $0x178] sm:$0xff]
  %v209 = vld [vmem:[%s1 + $0x180] sm:$0xff]
  %v210 = vld [vmem:[%s1 + $0x188] sm:$0xff]
  %v211 = vld [vmem:[%s1 + $0x190] sm:$0xff]
  %v212 = vld [vmem:[%s1 + $0x198] sm:$0xff]
  %v213 = vld [vmem:[%s1 + $0x1a0] sm:$0xff]
  %v214 = vld [vmem:[%s1 + $0x1a8] sm:$0xff]
  %v215 = vld [vmem:[%s1 + $0x1b0] sm:$0xff]
  %v216 = vld [vmem:[%s1 + $0x1b8] sm:$0xff]
  %v217 = vld [vmem:[%s1 + $0x1c0] sm:$0xff]
  %v218 = vld [vmem:[%s1 + $0x1c8] sm:$0xff]
  %v219 = vld [vmem:[%s1 + $0x1d0] sm:$0xff]
  %v220 = vld [vmem:[%s1 + $0x1d8] sm:$0xff]
  %v221 = vld [vmem:[%s1 + $0x1e0] sm:$0xff]
  %v222 = vld [vmem:[%s1 + $0x1e8] sm:$0xff]
  %v223 = vld [vmem:[%s1 + $0x1f0] sm:$0xff]
  %v224 = vld [vmem:[%s1 + $0x1f8] sm:$0xff]
  %v225 = vld [vmem:[%s1 + $0x200] sm:$0xff]
  %v226 = vld [vmem:[%s1 + $0x208] sm:$0xff]
  %v227 = vld [vmem:[%s1 + $0x210] sm:$0xff]
  %v228 = vld [vmem:[%s1 + $0x218] sm:$0xff]
  %v229 = vld [vmem:[%s1 + $0x220] sm:$0xff]
  %v230 = vld [vmem:[%s1 + $0x228] sm:$0xff]
  %v231 = vld [vmem:[%s1 + $0x230] sm:$0xff]
  %v232 = vld [vmem:[%s1 + $0x238] sm:$0xff]
  %v233 = vld [vmem:[%s1 + $0x240] sm:$0xff]
  %v234 = vld [vmem:[%s1 + $0x248] sm:$0xff]
  %v235 = vld [vmem:[%s1 + $0x250] sm:$0xff]
  %v236 = vld [vmem:[%s1 + $0x258] sm:$0xff]
  %v237 = vld [vmem:[%s1 + $0x260] sm:$0xff]
  %v238 = vld [vmem:[%s1 + $0x268] sm:$0xff]
  %v239 = vld [vmem:[%s1 + $0x270] sm:$0xff]
  %v240 = vld [vmem:[%s1 + $0x278] sm:$0xff]
  %v241 = vld [vmem:[%s1 + $0x280] sm:$0xff]
  %v242 = vld [vmem:[%s1 + $0x288] sm:$0xff]
  %v243 = vld [vmem:[%s1 + $0x290] sm:$0xff]
  %v244 = vld [vmem:[%s1 + $0x298] sm:$0xff]
  %v245 = vld [vmem:[%s1 + $0x2a0] sm:$0xff]
  %v246 = vld [vmem:[%s1 + $0x2a8] sm:$0xff]
  %v247 = vld [vmem:[%s1 + $0x2b0] sm:$0xff]
  %v248 = vld [vmem:[%s1 + $0x2b8] sm:$0xff]
  %v249 = vld [vmem:[%s1 + $0x2c0] sm:$0xff]
  %v250 = vld [vmem:[%s1 + $0x2c8] sm:$0xff]
  %v251 = vld [vmem:[%s1 + $0x2d0] sm:$0xff]
  %v252 = vld [vmem:[%s1 + $0x2d8] sm:$0xff]
  %v253 = vld [vmem:[%s1 + $0x2e0] sm:$0xff]
  %v254 = vld [vmem:[%s1 + $0x2e8] sm:$0xff]
  %v255 = vld [vmem:[%s1 + $0x2f0] sm:$0xff]
  %v256 = vld [vmem:[%s1 + $0x2f8] sm:$0xff]
  %v257 = vld [vmem:[%s1 + $0x300] sm:$0xff]
  %v258 = vld [vmem:[%s1 + $0x308] sm:$0xff]
  %v259 = vld [vmem:[%s1 + $0x310] sm:$0xff]
  %v260 = vld [vmem:[%s1 + $0x318] sm:$0xff]
  %v261 = vld [vmem:[%s1 + $0x320] sm:$0xff]
  %v262 = vld [vmem:[%s1 + $0x328] sm:$0xff]
  %v263 = vld [vmem:[%s1 + $0x330] sm:$0xff]
  %v264 = vld [vmem:[%s1 + $0x338] sm:$0xff]
  %v265 = vld [vmem:[%s1 + $0x340] sm:$0xff]
  %v266 = vld [vmem:[%s1 + $0x348] sm:$0xff]
  %v267 = vld [vmem:[%s1 + $0x350] sm:$0xff]
  %v268 = vld [vmem:[%s1 + $0x358] sm:$0xff]
  %v269 = vld [vmem:[%s1 + $0x360] sm:$0xff]
  %v270 = vld [vmem:[%s1 + $0x368] sm:$0xff]
  %v271 = vld [vmem:[%s1 + $0x370] sm:$0xff]
  %v272 = vld [vmem:[%s1 + $0x378] sm:$0xff]
  %v273 = vld [vmem:[%s1 + $0x380] sm:$0xff]
  %v274 = vld [vmem:[%s1 + $0x388] sm:$0xff]
  %v275 = vld [vmem:[%s1 + $0x390] sm:$0xff]
  %v276 = vld [vmem:[%s1 + $0x398] sm:$0xff]
  %v277 = vld [vmem:[%s1 + $0x3a0] sm:$0xff]
  %v278 = vld [vmem:[%s1 + $0x3a8] sm:$0xff]
  %v279 = vld [vmem:[%s1 + $0x3b0] sm:$0xff]
  %v280 = vld [vmem:[%s1 + $0x3b8] sm:$0xff]
  %v281 = vld [vmem:[%s1 + $0x3c0] sm:$0xff]
  %v282 = vld [vmem:[%s1 + $0x3c8] sm:$0xff]
  %v283 = vld [vmem:[%s1 + $0x3d0] sm:$0xff]
  %v284 = vld [vmem:[%s1 + $0x3d8] sm:$0xff]
  %v285 = vld [vmem:[%s1 + $0x3e0] sm:$0xff]
  %v286 = vld [vmem:[%s4] sm:$0xff]
  %v287 = vld [vmem:[%s4 + $0x8] sm:$0xf]
  %vm288 = vcmask 97280
  %v290 = vsel %vm288, %v161, 0
  %v293 = vsel %vm288, %v162, 0
  %v296 = vsel %vm288, %v163, 0
  %v299 = vsel %vm288, %v164, 0
  %v302 = vsel %vm288, %v165, 0
  %v305 = vsel %vm288, %v166, 0
  %v308 = vsel %vm288, %v167, 0
  %v311 = vsel %vm288, %v168, 0
  %v314 = vsel %vm288, %v169, 0
  %v317 = vsel %vm288, %v170, 0
  %v320 = vsel %vm288, %v171, 0
  %v323 = vsel %vm288, %v172, 0
  %v326 = vsel %vm288, %v173, 0
  %v329 = vsel %vm288, %v174, 0
  %v332 = vsel %vm288, %v175, 0
  %v335 = vsel %vm288, %v176, 0
  %v338 = vsel %vm288, %v177, 0
  %v341 = vsel %vm288, %v178, 0
  %v344 = vsel %vm288, %v179, 0
  %v347 = vsel %vm288, %v180, 0
  %v350 = vsel %vm288, %v181, 0
  %v353 = vsel %vm288, %v182, 0
  %v356 = vsel %vm288, %v183, 0
  %v359 = vsel %vm288, %v184, 0
  %v362 = vsel %vm288, %v185, 0
  %v365 = vsel %vm288, %v186, 0
  %v368 = vsel %vm288, %v187, 0
  %v371 = vsel %vm288, %v188, 0
  %v374 = vsel %vm288, %v189, 0
  %v377 = vsel %vm288, %v190, 0
  %v380 = vsel %vm288, %v191, 0
  %v383 = vsel %vm288, %v192, 0
  %v386 = vsel %vm288, %v193, 0
  %v389 = vsel %vm288, %v194, 0
  %v392 = vsel %vm288, %v195, 0
  %v395 = vsel %vm288, %v196, 0
  %v398 = vsel %vm288, %v197, 0
  %v401 = vsel %vm288, %v198, 0
  %v404 = vsel %vm288, %v199, 0
  %v407 = vsel %vm288, %v200, 0
  %v410 = vsel %vm288, %v201, 0
  %v413 = vsel %vm288, %v202, 0
  %v416 = vsel %vm288, %v203, 0
  %v419 = vsel %vm288, %v204, 0
  %v422 = vsel %vm288, %v205, 0
  %v425 = vsel %vm288, %v206, 0
  %v428 = vsel %vm288, %v207, 0
  %v431 = vsel %vm288, %v208, 0
  %v434 = vsel %vm288, %v209, 0
  %v437 = vsel %vm288, %v210, 0
  %v440 = vsel %vm288, %v211, 0
  %v443 = vsel %vm288, %v212, 0
  %v446 = vsel %vm288, %v213, 0
  %v449 = vsel %vm288, %v214, 0
  %v452 = vsel %vm288, %v215, 0
  %v455 = vsel %vm288, %v216, 0
  %v458 = vsel %vm288, %v217, 0
  %v461 = vsel %vm288, %v218, 0
  %v464 = vsel %vm288, %v219, 0
  %v467 = vsel %vm288, %v220, 0
  %v470 = vsel %vm288, %v221, 0
  %v473 = vsel %vm288, %v222, 0
  %v476 = vsel %vm288, %v223, 0
  %v479 = vsel %vm288, %v224, 0
  %v482 = vsel %vm288, %v225, 0
  %v485 = vsel %vm288, %v226, 0
  %v488 = vsel %vm288, %v227, 0
  %v491 = vsel %vm288, %v228, 0
  %v494 = vsel %vm288, %v229, 0
  %v497 = vsel %vm288, %v230, 0
  %v500 = vsel %vm288, %v231, 0
  %v503 = vsel %vm288, %v232, 0
  %v506 = vsel %vm288, %v233, 0
  %v509 = vsel %vm288, %v234, 0
  %v512 = vsel %vm288, %v235, 0
  %v515 = vsel %vm288, %v236, 0
  %v518 = vsel %vm288, %v237, 0
  %v521 = vsel %vm288, %v238, 0
  %v524 = vsel %vm288, %v239, 0
  %v527 = vsel %vm288, %v240, 0
  %v530 = vsel %vm288, %v241, 0
  %v533 = vsel %vm288, %v242, 0
  %v536 = vsel %vm288, %v243, 0
  %v539 = vsel %vm288, %v244, 0
  %v542 = vsel %vm288, %v245, 0
  %v545 = vsel %vm288, %v246, 0
  %v548 = vsel %vm288, %v247, 0
  %v551 = vsel %vm288, %v248, 0
  %v554 = vsel %vm288, %v249, 0
  %v557 = vsel %vm288, %v250, 0
  %v560 = vsel %vm288, %v251, 0
  %v563 = vsel %vm288, %v252, 0
  %v566 = vsel %vm288, %v253, 0
  %v569 = vsel %vm288, %v254, 0
  %v572 = vsel %vm288, %v255, 0
  %v575 = vsel %vm288, %v256, 0
  %v578 = vsel %vm288, %v257, 0
  %v581 = vsel %vm288, %v258, 0
  %v584 = vsel %vm288, %v259, 0
  %v587 = vsel %vm288, %v260, 0
  %v590 = vsel %vm288, %v261, 0
  %v593 = vsel %vm288, %v262, 0
  %v596 = vsel %vm288, %v263, 0
  %v599 = vsel %vm288, %v264, 0
  %v602 = vsel %vm288, %v265, 0
  %v605 = vsel %vm288, %v266, 0
  %v608 = vsel %vm288, %v267, 0
  %v611 = vsel %vm288, %v268, 0
  %v614 = vsel %vm288, %v269, 0
  %v617 = vsel %vm288, %v270, 0
  %v620 = vsel %vm288, %v271, 0
  %v623 = vsel %vm288, %v272, 0
  %v626 = vsel %vm288, %v273, 0
  %v629 = vsel %vm288, %v274, 0
  %v632 = vsel %vm288, %v275, 0
  %v635 = vsel %vm288, %v276, 0
  %v638 = vsel %vm288, %v277, 0
  %v641 = vsel %vm288, %v278, 0
  %v644 = vsel %vm288, %v279, 0
  %v647 = vsel %vm288, %v280, 0
  %v650 = vsel %vm288, %v281, 0
  %v653 = vsel %vm288, %v282, 0
  %v656 = vsel %vm288, %v283, 0
  %v659 = vsel %vm288, %v284, 0
  %v662 = vsel %vm288, %v285, 0
  %vm664 = vcmask 1043456
  %v666 = vsel %vm664, %v287, 0
  %668 = vmatprep.subr.mxu0 0.0
  %669 = vmatpush1.msra.mxu0 %v286
  %670 = vmatprep.subr.mxu0 0.0
  %671 = vmatpush1.msra.mxu0 %v666
  %672 = vmatprep.subr.mxu0 0.0
  %673 = vmatpush1.msra.mxu0 0.0
  %674 = vmatprep.subr.mxu0 0.0
  %675 = vmatpush1.msra.mxu0 0.0
  %676 = vmatprep.subr.mxu0 0.0
  %677 = vmatpush1.msra.mxu0 0.0
  %678 = vmatprep.subr.mxu0 0.0
  %679 = vmatpush1.msra.mxu0 0.0
  %680 = vmatprep.subr.mxu0 0.0
  %681 = vmatpush1.msra.mxu0 0.0
  %682 = vmatprep.subr.mxu0 0.0
  %683 = vmatpush1.msra.mxu0 0.0
  %684 = vmatprep.subr.mxu0 0.0
  %685 = vmatpush1.msra.mxu0 0.0
  %686 = vmatprep.subr.mxu0 0.0
  %687 = vmatpush1.msra.mxu0 0.0
  %688 = vmatprep.subr.mxu0 0.0
  %689 = vmatpush1.msra.mxu0 0.0
  %690 = vmatprep.subr.mxu0 0.0
  %691 = vmatpush1.msra.mxu0 0.0
  %692 = vmatprep.subr.mxu0 0.0
  %693 = vmatpush1.msra.mxu0 0.0
  %694 = vmatprep.subr.mxu0 0.0
  %695 = vmatpush1.msra.mxu0 0.0
  %696 = vmatprep.subr.mxu0 0.0
  %697 = vmatpush1.msra.mxu0 0.0
  %698 = vmatprep.subr.mxu0 0.0
  %699 = vmatpush1.msra.mxu0 0.0
  %700 = vmatprep.subr.mxu0 0.0
  %701 = vmatpush1.msra.mxu0 0.0
  %702 = vmatprep.subr.mxu0 0.0
  %703 = vmatpush1.msra.mxu0 0.0
  %704 = vmatprep.subr.mxu0 0.0
  %705 = vmatpush1.msra.mxu0 0.0
  %706 = vmatprep.subr.mxu0 0.0
  %707 = vmatpush1.msra.mxu0 0.0
  %708 = vmatprep.subr.mxu0 0.0
  %709 = vmatpush1.msra.mxu0 0.0
  %710 = vmatprep.subr.mxu0 0.0
  %711 = vmatpush1.msra.mxu0 0.0
  %712 = vmatprep.subr.mxu0 0.0
  %713 = vmatpush1.msra.mxu0 0.0
  %714 = vmatprep.subr.mxu0 0.0
  %715 = vmatpush1.msra.mxu0 0.0
  %716 = vmatprep.subr.mxu0 0.0
  %717 = vmatpush1.msra.mxu0 0.0
  %718 = vmatprep.subr.mxu0 0.0
  %719 = vmatpush1.msra.mxu0 0.0
  %720 = vmatprep.subr.mxu0 0.0
  %721 = vmatpush1.msra.mxu0 0.0
  %722 = vmatprep.subr.mxu0 0.0
  %723 = vmatpush1.msra.mxu0 0.0
  %724 = vmatprep.subr.mxu0 0.0
  %725 = vmatpush1.msra.mxu0 0.0
  %726 = vmatprep.subr.mxu0 0.0
  %727 = vmatpush1.msra.mxu0 0.0
  %728 = vmatprep.subr.mxu0 0.0
  %729 = vmatpush1.msra.mxu0 0.0
  %730 = vmatprep.subr.mxu0 0.0
  %731 = vmatpush1.msra.mxu0 0.0
  %732 = vmatprep.mubr.f32.mxu0 0.0
  %733 = vmatmul.mubr.f32.gmra.mrb[0].mxu0 %v290
  %v734 = vpop.f32.mrb[0].mxu0
  %v735 = vadd.f32 0.0, %v734
  %v736 = vpop.f32.mrb[0].mxu0
  %737 = vmatprep.mubr.f32.mxu0 0.0
  %738 = vmatmul.mubr.f32.gmra.mrb[0].mxu0 %v293
  %v739 = vpop.f32.mrb[0].mxu0
  %v740 = vadd.f32 0.0, %v739
  %v741 = vpop.f32.mrb[0].mxu0
  %742 = vmatprep.mubr.f32.mxu0 0.0
  %743 = vmatmul.mubr.f32.gmra.mrb[0].mxu0 %v296
  %v744 = vpop.f32.mrb[0].mxu0
  %v745 = vadd.f32 0.0, %v744
  %v746 = vpop.f32.mrb[0].mxu0
  %747 = vmatprep.mubr.f32.mxu0 0.0
  %748 = vmatmul.mubr.f32.gmra.mrb[0].mxu0 %v299
  %v749 = vpop.f32.mrb[0].mxu0
  %v750 = vadd.f32 0.0, %v749
  %v751 = vpop.f32.mrb[0].mxu0
  %752 = vmatprep.mubr.f32.mxu0 0.0
  %753 = vmatmul.mubr.f32.gmra.mrb[0].mxu0 %v302
  %v754 = vpop.f32.mrb[0].mxu0
  %v755 = vadd.f32 0.0, %v754
  %v756 = vpop.f32.mrb[0].mxu0
  %757 = vmatprep.mubr.f32.mxu0 0.0
  %758 = vmatmul.mubr.f32.gmra.mrb[0].mxu0 %v305
  %v759 = vpop.f32.mrb[0].mxu0
  %v760 = vadd.f32 0.0, %v759
  %v761 = vpop.f32.mrb[0].mxu0
  %762 = vmatprep.mubr.f32.mxu0 0.0
  %763 = vmatmul.mubr.f32.gmra.mrb[0].mxu0 %v308
  %v764 = vpop.f32.mrb[0].mxu0
  %v765 = vadd.f32 0.0, %v764
  %v766 = vpop.f32.mrb[0].mxu0
  %767 = vmatprep.mubr.f32.mxu0 0.0
  %768 = vmatmul.mubr.f32.gmra.mrb[0].mxu0 %v311
  %v769 = vpop.f32.mrb[0].mxu0
  %v770 = vadd.f32 0.0, %v769
  %v771 = vpop.f32.mrb[0].mxu0
  %772 = vmatprep.mubr.f32.mxu0 0.0
  %773 = vmatmul.mubr.f32.gmra.mrb[0].mxu0 %v314
  %v774 = vpop.f32.mrb[0].mxu0
  %v775 = vadd.f32 0.0, %v774
  %v776 = vpop.f32.mrb[0].mxu0
  %777 = vmatprep.mubr.f32.mxu0 0.0
  %778 = vmatmul.mubr.f32.gmra.mrb[0].mxu0 %v317
  %v779 = vpop.f32.mrb[0].mxu0
  %v780 = vadd.f32 0.0, %v779
  %v781 = vpop.f32.mrb[0].mxu0
  %782 = vmatprep.mubr.f32.mxu0 0.0
  %783 = vmatmul.mubr.f32.gmra.mrb[0].mxu0 %v320
  %v784 = vpop.f32.mrb[0].mxu0
  %v785 = vadd.f32 0.0, %v784
  %v786 = vpop.f32.mrb[0].mxu0
  %787 = vmatprep.mubr.f32.mxu0 0.0
  %788 = vmatmul.mubr.f32.gmra.mrb[0].mxu0 %v323
  %v789 = vpop.f32.mrb[0].mxu0
  %v790 = vadd.f32 0.0, %v789
  %v791 = vpop.f32.mrb[0].mxu0
  %792 = vmatprep.mubr.f32.mxu0 0.0
  %793 = vmatmul.mubr.f32.gmra.mrb[0].mxu0 %v326
  %v794 = vpop.f32.mrb[0].mxu0
  %v795 = vadd.f32 0.0, %v794
  %v796 = vpop.f32.mrb[0].mxu0
  %797 = vmatprep.mubr.f32.mxu0 0.0
  %798 = vmatmul.mubr.f32.gmra.mrb[0].mxu0 %v329
  %v799 = vpop.f32.mrb[0].mxu0
  %v800 = vadd.f32 0.0, %v799
  %v801 = vpop.f32.mrb[0].mxu0
  %802 = vmatprep.mubr.f32.mxu0 0.0
  %803 = vmatmul.mubr.f32.gmra.mrb[0].mxu0 %v332
  %v804 = vpop.f32.mrb[0].mxu0
  %v805 = vadd.f32 0.0, %v804
  %v806 = vpop.f32.mrb[0].mxu0
  %807 = vmatprep.mubr.f32.mxu0 0.0
  %808 = vmatmul.mubr.f32.gmra.mrb[0].mxu0 %v335
  %v809 = vpop.f32.mrb[0].mxu0
  %v810 = vadd.f32 0.0, %v809
  %v811 = vpop.f32.mrb[0].mxu0
  %812 = vmatprep.mubr.f32.mxu0 0.0
  %813 = vmatmul.mubr.f32.gmra.mrb[0].mxu0 %v338
  %v814 = vpop.f32.mrb[0].mxu0
  %v815 = vadd.f32 0.0, %v814
  %v816 = vpop.f32.mrb[0].mxu0
  %817 = vmatprep.mubr.f32.mxu0 0.0
  %818 = vmatmul.mubr.f32.gmra.mrb[0].mxu0 %v341
  %v819 = vpop.f32.mrb[0].mxu0
  %v820 = vadd.f32 0.0, %v819
  %v821 = vpop.f32.mrb[0].mxu0
  %822 = vmatprep.mubr.f32.mxu0 0.0
  %823 = vmatmul.mubr.f32.gmra.mrb[0].mxu0 %v344
  %v824 = vpop.f32.mrb[0].mxu0
  %v825 = vadd.f32 0.0, %v824
  %v826 = vpop.f32.mrb[0].mxu0
  %827 = vmatprep.mubr.f32.mxu0 0.0
  %828 = vmatmul.mubr.f32.gmra.mrb[0].mxu0 %v347
  %v829 = vpop.f32.mrb[0].mxu0
  %v830 = vadd.f32 0.0, %v829
  %v831 = vpop.f32.mrb[0].mxu0
  %832 = vmatprep.mubr.f32.mxu0 0.0
  %833 = vmatmul.mubr.f32.gmra.mrb[0].mxu0 %v350
  %v834 = vpop.f32.mrb[0].mxu0
  %v835 = vadd.f32 0.0, %v834
  %v836 = vpop.f32.mrb[0].mxu0
  %837 = vmatprep.mubr.f32.mxu0 0.0
  %838 = vmatmul.mubr.f32.gmra.mrb[0].mxu0 %v353
  %v839 = vpop.f32.mrb[0].mxu0
  %v840 = vadd.f32 0.0, %v839
  %v841 = vpop.f32.mrb[0].mxu0
  %842 = vmatprep.mubr.f32.mxu0 0.0
  %843 = vmatmul.mubr.f32.gmra.mrb[0].mxu0 %v356
  %v844 = vpop.f32.mrb[0].mxu0
  %v845 = vadd.f32 0.0, %v844
  %v846 = vpop.f32.mrb[0].mxu0
  %847 = vmatprep.mubr.f32.mxu0 0.0
  %848 = vmatmul.mubr.f32.gmra.mrb[0].mxu0 %v359
  %v849 = vpop.f32.mrb[0].mxu0
  %v850 = vadd.f32 0.0, %v849
  %v851 = vpop.f32.mrb[0].mxu0
  %852 = vmatprep.mubr.f32.mxu0 0.0
  %853 = vmatmul.mubr.f32.gmra.mrb[0].mxu0 %v362
  %v854 = vpop.f32.mrb[0].mxu0
  %v855 = vadd.f32 0.0, %v854
  %v856 = vpop.f32.mrb[0].mxu0
  %857 = vmatprep.mubr.f32.mxu0 0.0
  %858 = vmatmul.mubr.f32.gmra.mrb[0].mxu0 %v365
  %v859 = vpop.f32.mrb[0].mxu0
  %v860 = vadd.f32 0.0, %v859
  %v861 = vpop.f32.mrb[0].mxu0
  %862 = vmatprep.mubr.f32.mxu0 0.0
  %863 = vmatmul.mubr.f32.gmra.mrb[0].mxu0 %v368
  %v864 = vpop.f32.mrb[0].mxu0
  %v865 = vadd.f32 0.0, %v864
  %v866 = vpop.f32.mrb[0].mxu0
  %867 = vmatprep.mubr.f32.mxu0 0.0
  %868 = vmatmul.mubr.f32.gmra.mrb[0].mxu0 %v371
  %v869 = vpop.f32.mrb[0].mxu0
  %v870 = vadd.f32 0.0, %v869
  %v871 = vpop.f32.mrb[0].mxu0
  %872 = vmatprep.mubr.f32.mxu0 0.0
  %873 = vmatmul.mubr.f32.gmra.mrb[0].mxu0 %v374
  %v874 = vpop.f32.mrb[0].mxu0
  %v875 = vadd.f32 0.0, %v874
  %v876 = vpop.f32.mrb[0].mxu0
  %877 = vmatprep.mubr.f32.mxu0 0.0
  %878 = vmatmul.mubr.f32.gmra.mrb[0].mxu0 %v377
  %v879 = vpop.f32.mrb[0].mxu0
  %v880 = vadd.f32 0.0, %v879
  %v881 = vpop.f32.mrb[0].mxu0
  %882 = vmatprep.mubr.f32.mxu0 0.0
  %883 = vmatmul.mubr.f32.gmra.mrb[0].mxu0 %v380
  %v884 = vpop.f32.mrb[0].mxu0
  %v885 = vadd.f32 0.0, %v884
  %v886 = vpop.f32.mrb[0].mxu0
  %887 = vmatprep.mubr.f32.mxu0 0.0
  %888 = vmatmul.mubr.f32.gmra.mrb[0].mxu0 %v383
  %v889 = vpop.f32.mrb[0].mxu0
  %v890 = vadd.f32 0.0, %v889
  %v891 = vpop.f32.mrb[0].mxu0
  %892 = vmatprep.mubr.f32.mxu0 0.0
  %893 = vmatmul.mubr.f32.gmra.mrb[0].mxu0 %v386
  %v894 = vpop.f32.mrb[0].mxu0
  %v895 = vadd.f32 0.0, %v894
  %v896 = vpop.f32.mrb[0].mxu0
  %897 = vmatprep.mubr.f32.mxu0 0.0
  %898 = vmatmul.mubr.f32.gmra.mrb[0].mxu0 %v389
  %v899 = vpop.f32.mrb[0].mxu0
  %v900 = vadd.f32 0.0, %v899
  %v901 = vpop.f32.mrb[0].mxu0
  %902 = vmatprep.mubr.f32.mxu0 0.0
  %903 = vmatmul.mubr.f32.gmra.mrb[0].mxu0 %v392
  %v904 = vpop.f32.mrb[0].mxu0
  %v905 = vadd.f32 0.0, %v904
  %v906 = vpop.f32.mrb[0].mxu0
  %907 = vmatprep.mubr.f32.mxu0 0.0
  %908 = vmatmul.mubr.f32.gmra.mrb[0].mxu0 %v395
  %v909 = vpop.f32.mrb[0].mxu0
  %v910 = vadd.f32 0.0, %v909
  %v911 = vpop.f32.mrb[0].mxu0
  %912 = vmatprep.mubr.f32.mxu0 0.0
  %913 = vmatmul.mubr.f32.gmra.mrb[0].mxu0 %v398
  %v914 = vpop.f32.mrb[0].mxu0
  %v915 = vadd.f32 0.0, %v914
  %v916 = vpop.f32.mrb[0].mxu0
  %917 = vmatprep.mubr.f32.mxu0 0.0
  %918 = vmatmul.mubr.f32.gmra.mrb[0].mxu0 %v401
  %v919 = vpop.f32.mrb[0].mxu0
  %v920 = vadd.f32 0.0, %v919
  %v921 = vpop.f32.mrb[0].mxu0
  %922 = vmatprep.mubr.f32.mxu0 0.0
  %923 = vmatmul.mubr.f32.gmra.mrb[0].mxu0 %v404
  %v924 = vpop.f32.mrb[0].mxu0
  %v925 = vadd.f32 0.0, %v924
  %v926 = vpop.f32.mrb[0].mxu0
  %927 = vmatprep.mubr.f32.mxu0 0.0
  %928 = vmatmul.mubr.f32.gmra.mrb[0].mxu0 %v407
  %v929 = vpop.f32.mrb[0].mxu0
  %v930 = vadd.f32 0.0, %v929
  %v931 = vpop.f32.mrb[0].mxu0
  %932 = vmatprep.mubr.f32.mxu0 0.0
  %933 = vmatmul.mubr.f32.gmra.mrb[0].mxu0 %v410
  %v934 = vpop.f32.mrb[0].mxu0
  %v935 = vadd.f32 0.0, %v934
  %v936 = vpop.f32.mrb[0].mxu0
  %937 = vmatprep.mubr.f32.mxu0 0.0
  %938 = vmatmul.mubr.f32.gmra.mrb[0].mxu0 %v413
  %v939 = vpop.f32.mrb[0].mxu0
  %v940 = vadd.f32 0.0, %v939
  %v941 = vpop.f32.mrb[0].mxu0
  %942 = vmatprep.mubr.f32.mxu0 0.0
  %943 = vmatmul.mubr.f32.gmra.mrb[0].mxu0 %v416
  %v944 = vpop.f32.mrb[0].mxu0
  %v945 = vadd.f32 0.0, %v944
  %v946 = vpop.f32.mrb[0].mxu0
  %947 = vmatprep.mubr.f32.mxu0 0.0
  %948 = vmatmul.mubr.f32.gmra.mrb[0].mxu0 %v419
  %v949 = vpop.f32.mrb[0].mxu0
  %v950 = vadd.f32 0.0, %v949
  %v951 = vpop.f32.mrb[0].mxu0
  %952 = vmatprep.mubr.f32.mxu0 0.0
  %953 = vmatmul.mubr.f32.gmra.mrb[0].mxu0 %v422
  %v954 = vpop.f32.mrb[0].mxu0
  %v955 = vadd.f32 0.0, %v954
  %v956 = vpop.f32.mrb[0].mxu0
  %957 = vmatprep.mubr.f32.mxu0 0.0
  %958 = vmatmul.mubr.f32.gmra.mrb[0].mxu0 %v425
  %v959 = vpop.f32.mrb[0].mxu0
  %v960 = vadd.f32 0.0, %v959
  %v961 = vpop.f32.mrb[0].mxu0
  %962 = vmatprep.mubr.f32.mxu0 0.0
  %963 = vmatmul.mubr.f32.gmra.mrb[0].mxu0 %v428
  %v964 = vpop.f32.mrb[0].mxu0
  %v965 = vadd.f32 0.0, %v964
  %v966 = vpop.f32.mrb[0].mxu0
  %967 = vmatprep.mubr.f32.mxu0 0.0
  %968 = vmatmul.mubr.f32.gmra.mrb[0].mxu0 %v431
  %v969 = vpop.f32.mrb[0].mxu0
  %v970 = vadd.f32 0.0, %v969
  %v971 = vpop.f32.mrb[0].mxu0
  %972 = vmatprep.mubr.f32.mxu0 0.0
  %973 = vmatmul.mubr.f32.gmra.mrb[0].mxu0 %v434
  %v974 = vpop.f32.mrb[0].mxu0
  %v975 = vadd.f32 0.0, %v974
  %v976 = vpop.f32.mrb[0].mxu0
  %977 = vmatprep.mubr.f32.mxu0 0.0
  %978 = vmatmul.mubr.f32.gmra.mrb[0].mxu0 %v437
  %v979 = vpop.f32.mrb[0].mxu0
  %v980 = vadd.f32 0.0, %v979
  %v981 = vpop.f32.mrb[0].mxu0
  %982 = vmatprep.mubr.f32.mxu0 0.0
  %983 = vmatmul.mubr.f32.gmra.mrb[0].mxu0 %v440
  %v984 = vpop.f32.mrb[0].mxu0
  %v985 = vadd.f32 0.0, %v984
  %v986 = vpop.f32.mrb[0].mxu0
  %987 = vmatprep.mubr.f32.mxu0 0.0
  %988 = vmatmul.mubr.f32.gmra.mrb[0].mxu0 %v443
  %v989 = vpop.f32.mrb[0].mxu0
  %v990 = vadd.f32 0.0, %v989
  %v991 = vpop.f32.mrb[0].mxu0
  %992 = vmatprep.mubr.f32.mxu0 0.0
  %993 = vmatmul.mubr.f32.gmra.mrb[0].mxu0 %v446
  %v994 = vpop.f32.mrb[0].mxu0
  %v995 = vadd.f32 0.0, %v994
  %v996 = vpop.f32.mrb[0].mxu0
  %997 = vmatprep.mubr.f32.mxu0 0.0
  %998 = vmatmul.mubr.f32.gmra.mrb[0].mxu0 %v449
  %v999 = vpop.f32.mrb[0].mxu0
  %v1000 = vadd.f32 0.0, %v999
  %v1001 = vpop.f32.mrb[0].mxu0
  %1002 = vmatprep.mubr.f32.mxu0 0.0
  %1003 = vmatmul.mubr.f32.gmra.mrb[0].mxu0 %v452
  %v1004 = vpop.f32.mrb[0].mxu0
  %v1005 = vadd.f32 0.0, %v1004
  %v1006 = vpop.f32.mrb[0].mxu0
  %1007 = vmatprep.mubr.f32.mxu0 0.0
  %1008 = vmatmul.mubr.f32.gmra.mrb[0].mxu0 %v455
  %v1009 = vpop.f32.mrb[0].mxu0
  %v1010 = vadd.f32 0.0, %v1009
  %v1011 = vpop.f32.mrb[0].mxu0
  %1012 = vmatprep.mubr.f32.mxu0 0.0
  %1013 = vmatmul.mubr.f32.gmra.mrb[0].mxu0 %v458
  %v1014 = vpop.f32.mrb[0].mxu0
  %v1015 = vadd.f32 0.0, %v1014
  %v1016 = vpop.f32.mrb[0].mxu0
  %1017 = vmatprep.mubr.f32.mxu0 0.0
  %1018 = vmatmul.mubr.f32.gmra.mrb[0].mxu0 %v461
  %v1019 = vpop.f32.mrb[0].mxu0
  %v1020 = vadd.f32 0.0, %v1019
  %v1021 = vpop.f32.mrb[0].mxu0
  %1022 = vmatprep.mubr.f32.mxu0 0.0
  %1023 = vmatmul.mubr.f32.gmra.mrb[0].mxu0 %v464
  %v1024 = vpop.f32.mrb[0].mxu0
  %v1025 = vadd.f32 0.0, %v1024
  %v1026 = vpop.f32.mrb[0].mxu0
  %1027 = vmatprep.mubr.f32.mxu0 0.0
  %1028 = vmatmul.mubr.f32.gmra.mrb[0].mxu0 %v467
  %v1029 = vpop.f32.mrb[0].mxu0
  %v1030 = vadd.f32 0.0, %v1029
  %v1031 = vpop.f32.mrb[0].mxu0
  %1032 = vmatprep.mubr.f32.mxu0 0.0
  %1033 = vmatmul.mubr.f32.gmra.mrb[0].mxu0 %v470
  %v1034 = vpop.f32.mrb[0].mxu0
  %v1035 = vadd.f32 0.0, %v1034
  %v1036 = vpop.f32.mrb[0].mxu0
  %1037 = vmatprep.mubr.f32.mxu0 0.0
  %1038 = vmatmul.mubr.f32.gmra.mrb[0].mxu0 %v473
  %v1039 = vpop.f32.mrb[0].mxu0
  %v1040 = vadd.f32 0.0, %v1039
  %v1041 = vpop.f32.mrb[0].mxu0
  %1042 = vmatprep.mubr.f32.mxu0 0.0
  %1043 = vmatmul.mubr.f32.gmra.mrb[0].mxu0 %v476
  %v1044 = vpop.f32.mrb[0].mxu0
  %v1045 = vadd.f32 0.0, %v1044
  %v1046 = vpop.f32.mrb[0].mxu0
  %1047 = vmatprep.mubr.f32.mxu0 0.0
  %1048 = vmatmul.mubr.f32.gmra.mrb[0].mxu0 %v479
  %v1049 = vpop.f32.mrb[0].mxu0
  %v1050 = vadd.f32 0.0, %v1049
  %v1051 = vpop.f32.mrb[0].mxu0
  %1052 = vmatprep.mubr.f32.mxu0 0.0
  %1053 = vmatmul.mubr.f32.gmra.mrb[0].mxu0 %v482
  %v1054 = vpop.f32.mrb[0].mxu0
  %v1055 = vadd.f32 0.0, %v1054
  %v1056 = vpop.f32.mrb[0].mxu0
  %1057 = vmatprep.mubr.f32.mxu0 0.0
  %1058 = vmatmul.mubr.f32.gmra.mrb[0].mxu0 %v485
  %v1059 = vpop.f32.mrb[0].mxu0
  %v1060 = vadd.f32 0.0, %v1059
  %v1061 = vpop.f32.mrb[0].mxu0
  %1062 = vmatprep.mubr.f32.mxu0 0.0
  %1063 = vmatmul.mubr.f32.gmra.mrb[0].mxu0 %v488
  %v1064 = vpop.f32.mrb[0].mxu0
  %v1065 = vadd.f32 0.0, %v1064
  %v1066 = vpop.f32.mrb[0].mxu0
  %1067 = vmatprep.mubr.f32.mxu0 0.0
  %1068 = vmatmul.mubr.f32.gmra.mrb[0].mxu0 %v491
  %v1069 = vpop.f32.mrb[0].mxu0
  %v1070 = vadd.f32 0.0, %v1069
  %v1071 = vpop.f32.mrb[0].mxu0
  %1072 = vmatprep.mubr.f32.mxu0 0.0
  %1073 = vmatmul.mubr.f32.gmra.mrb[0].mxu0 %v494
  %v1074 = vpop.f32.mrb[0].mxu0
  %v1075 = vadd.f32 0.0, %v1074
  %v1076 = vpop.f32.mrb[0].mxu0
  %1077 = vmatprep.mubr.f32.mxu0 0.0
  %1078 = vmatmul.mubr.f32.gmra.mrb[0].mxu0 %v497
  %v1079 = vpop.f32.mrb[0].mxu0
  %v1080 = vadd.f32 0.0, %v1079
  %v1081 = vpop.f32.mrb[0].mxu0
  %1082 = vmatprep.mubr.f32.mxu0 0.0
  %1083 = vmatmul.mubr.f32.gmra.mrb[0].mxu0 %v500
  %v1084 = vpop.f32.mrb[0].mxu0
  %v1085 = vadd.f32 0.0, %v1084
  %v1086 = vpop.f32.mrb[0].mxu0
  %1087 = vmatprep.mubr.f32.mxu0 0.0
  %1088 = vmatmul.mubr.f32.gmra.mrb[0].mxu0 %v503
  %v1089 = vpop.f32.mrb[0].mxu0
  %v1090 = vadd.f32 0.0, %v1089
  %v1091 = vpop.f32.mrb[0].mxu0
  %1092 = vmatprep.mubr.f32.mxu0 0.0
  %1093 = vmatmul.mubr.f32.gmra.mrb[0].mxu0 %v506
  %v1094 = vpop.f32.mrb[0].mxu0
  %v1095 = vadd.f32 0.0, %v1094
  %v1096 = vpop.f32.mrb[0].mxu0
  %1097 = vmatprep.mubr.f32.mxu0 0.0
  %1098 = vmatmul.mubr.f32.gmra.mrb[0].mxu0 %v509
  %v1099 = vpop.f32.mrb[0].mxu0
  %v1100 = vadd.f32 0.0, %v1099
  %v1101 = vpop.f32.mrb[0].mxu0
  %1102 = vmatprep.mubr.f32.mxu0 0.0
  %1103 = vmatmul.mubr.f32.gmra.mrb[0].mxu0 %v512
  %v1104 = vpop.f32.mrb[0].mxu0
  %v1105 = vadd.f32 0.0, %v1104
  %v1106 = vpop.f32.mrb[0].mxu0
  %1107 = vmatprep.mubr.f32.mxu0 0.0
  %1108 = vmatmul.mubr.f32.gmra.mrb[0].mxu0 %v515
  %v1109 = vpop.f32.mrb[0].mxu0
  %v1110 = vadd.f32 0.0, %v1109
  %v1111 = vpop.f32.mrb[0].mxu0
  %1112 = vmatprep.mubr.f32.mxu0 0.0
  %1113 = vmatmul.mubr.f32.gmra.mrb[0].mxu0 %v518
  %v1114 = vpop.f32.mrb[0].mxu0
  %v1115 = vadd.f32 0.0, %v1114
  %v1116 = vpop.f32.mrb[0].mxu0
  %1117 = vmatprep.mubr.f32.mxu0 0.0
  %1118 = vmatmul.mubr.f32.gmra.mrb[0].mxu0 %v521
  %v1119 = vpop.f32.mrb[0].mxu0
  %v1120 = vadd.f32 0.0, %v1119
  %v1121 = vpop.f32.mrb[0].mxu0
  %1122 = vmatprep.mubr.f32.mxu0 0.0
  %1123 = vmatmul.mubr.f32.gmra.mrb[0].mxu0 %v524
  %v1124 = vpop.f32.mrb[0].mxu0
  %v1125 = vadd.f32 0.0, %v1124
  %v1126 = vpop.f32.mrb[0].mxu0
  %1127 = vmatprep.mubr.f32.mxu0 0.0
  %1128 = vmatmul.mubr.f32.gmra.mrb[0].mxu0 %v527
  %v1129 = vpop.f32.mrb[0].mxu0
  %v1130 = vadd.f32 0.0, %v1129
  %v1131 = vpop.f32.mrb[0].mxu0
  %1132 = vmatprep.mubr.f32.mxu0 0.0
  %1133 = vmatmul.mubr.f32.gmra.mrb[0].mxu0 %v530
  %v1134 = vpop.f32.mrb[0].mxu0
  %v1135 = vadd.f32 0.0, %v1134
  %v1136 = vpop.f32.mrb[0].mxu0
  %1137 = vmatprep.mubr.f32.mxu0 0.0
  %1138 = vmatmul.mubr.f32.gmra.mrb[0].mxu0 %v533
  %v1139 = vpop.f32.mrb[0].mxu0
  %v1140 = vadd.f32 0.0, %v1139
  %v1141 = vpop.f32.mrb[0].mxu0
  %1142 = vmatprep.mubr.f32.mxu0 0.0
  %1143 = vmatmul.mubr.f32.gmra.mrb[0].mxu0 %v536
  %v1144 = vpop.f32.mrb[0].mxu0
  %v1145 = vadd.f32 0.0, %v1144
  %v1146 = vpop.f32.mrb[0].mxu0
  %1147 = vmatprep.mubr.f32.mxu0 0.0
  %1148 = vmatmul.mubr.f32.gmra.mrb[0].mxu0 %v539
  %v1149 = vpop.f32.mrb[0].mxu0
  %v1150 = vadd.f32 0.0, %v1149
  %v1151 = vpop.f32.mrb[0].mxu0
  %1152 = vmatprep.mubr.f32.mxu0 0.0
  %1153 = vmatmul.mubr.f32.gmra.mrb[0].mxu0 %v542
  %v1154 = vpop.f32.mrb[0].mxu0
  %v1155 = vadd.f32 0.0, %v1154
  %v1156 = vpop.f32.mrb[0].mxu0
  %1157 = vmatprep.mubr.f32.mxu0 0.0
  %1158 = vmatmul.mubr.f32.gmra.mrb[0].mxu0 %v545
  %v1159 = vpop.f32.mrb[0].mxu0
  %v1160 = vadd.f32 0.0, %v1159
  %v1161 = vpop.f32.mrb[0].mxu0
  %1162 = vmatprep.mubr.f32.mxu0 0.0
  %1163 = vmatmul.mubr.f32.gmra.mrb[0].mxu0 %v548
  %v1164 = vpop.f32.mrb[0].mxu0
  %v1165 = vadd.f32 0.0, %v1164
  %v1166 = vpop.f32.mrb[0].mxu0
  %1167 = vmatprep.mubr.f32.mxu0 0.0
  %1168 = vmatmul.mubr.f32.gmra.mrb[0].mxu0 %v551
  %v1169 = vpop.f32.mrb[0].mxu0
  %v1170 = vadd.f32 0.0, %v1169
  %v1171 = vpop.f32.mrb[0].mxu0
  %1172 = vmatprep.mubr.f32.mxu0 0.0
  %1173 = vmatmul.mubr.f32.gmra.mrb[0].mxu0 %v554
  %v1174 = vpop.f32.mrb[0].mxu0
  %v1175 = vadd.f32 0.0, %v1174
  %v1176 = vpop.f32.mrb[0].mxu0
  %1177 = vmatprep.mubr.f32.mxu0 0.0
  %1178 = vmatmul.mubr.f32.gmra.mrb[0].mxu0 %v557
  %v1179 = vpop.f32.mrb[0].mxu0
  %v1180 = vadd.f32 0.0, %v1179
  %v1181 = vpop.f32.mrb[0].mxu0
  %1182 = vmatprep.mubr.f32.mxu0 0.0
  %1183 = vmatmul.mubr.f32.gmra.mrb[0].mxu0 %v560
  %v1184 = vpop.f32.mrb[0].mxu0
  %v1185 = vadd.f32 0.0, %v1184
  %v1186 = vpop.f32.mrb[0].mxu0
  %1187 = vmatprep.mubr.f32.mxu0 0.0
  %1188 = vmatmul.mubr.f32.gmra.mrb[0].mxu0 %v563
  %v1189 = vpop.f32.mrb[0].mxu0
  %v1190 = vadd.f32 0.0, %v1189
  %v1191 = vpop.f32.mrb[0].mxu0
  %1192 = vmatprep.mubr.f32.mxu0 0.0
  %1193 = vmatmul.mubr.f32.gmra.mrb[0].mxu0 %v566
  %v1194 = vpop.f32.mrb[0].mxu0
  %v1195 = vadd.f32 0.0, %v1194
  %v1196 = vpop.f32.mrb[0].mxu0
  %1197 = vmatprep.mubr.f32.mxu0 0.0
  %1198 = vmatmul.mubr.f32.gmra.mrb[0].mxu0 %v569
  %v1199 = vpop.f32.mrb[0].mxu0
  %v1200 = vadd.f32 0.0, %v1199
  %v1201 = vpop.f32.mrb[0].mxu0
  %1202 = vmatprep.mubr.f32.mxu0 0.0
  %1203 = vmatmul.mubr.f32.gmra.mrb[0].mxu0 %v572
  %v1204 = vpop.f32.mrb[0].mxu0
  %v1205 = vadd.f32 0.0, %v1204
  %v1206 = vpop.f32.mrb[0].mxu0
  %1207 = vmatprep.mubr.f32.mxu0 0.0
  %1208 = vmatmul.mubr.f32.gmra.mrb[0].mxu0 %v575
  %v1209 = vpop.f32.mrb[0].mxu0
  %v1210 = vadd.f32 0.0, %v1209
  %v1211 = vpop.f32.mrb[0].mxu0
  %1212 = vmatprep.mubr.f32.mxu0 0.0
  %1213 = vmatmul.mubr.f32.gmra.mrb[0].mxu0 %v578
  %v1214 = vpop.f32.mrb[0].mxu0
  %v1215 = vadd.f32 0.0, %v1214
  %v1216 = vpop.f32.mrb[0].mxu0
  %1217 = vmatprep.mubr.f32.mxu0 0.0
  %1218 = vmatmul.mubr.f32.gmra.mrb[0].mxu0 %v581
  %v1219 = vpop.f32.mrb[0].mxu0
  %v1220 = vadd.f32 0.0, %v1219
  %v1221 = vpop.f32.mrb[0].mxu0
  %1222 = vmatprep.mubr.f32.mxu0 0.0
  %1223 = vmatmul.mubr.f32.gmra.mrb[0].mxu0 %v584
  %v1224 = vpop.f32.mrb[0].mxu0
  %v1225 = vadd.f32 0.0, %v1224
  %v1226 = vpop.f32.mrb[0].mxu0
  %1227 = vmatprep.mubr.f32.mxu0 0.0
  %1228 = vmatmul.mubr.f32.gmra.mrb[0].mxu0 %v587
  %v1229 = vpop.f32.mrb[0].mxu0
  %v1230 = vadd.f32 0.0, %v1229
  %v1231 = vpop.f32.mrb[0].mxu0
  %1232 = vmatprep.mubr.f32.mxu0 0.0
  %1233 = vmatmul.mubr.f32.gmra.mrb[0].mxu0 %v590
  %v1234 = vpop.f32.mrb[0].mxu0
  %v1235 = vadd.f32 0.0, %v1234
  %v1236 = vpop.f32.mrb[0].mxu0
  %1237 = vmatprep.mubr.f32.mxu0 0.0
  %1238 = vmatmul.mubr.f32.gmra.mrb[0].mxu0 %v593
  %v1239 = vpop.f32.mrb[0].mxu0
  %v1240 = vadd.f32 0.0, %v1239
  %v1241 = vpop.f32.mrb[0].mxu0
  %1242 = vmatprep.mubr.f32.mxu0 0.0
  %1243 = vmatmul.mubr.f32.gmra.mrb[0].mxu0 %v596
  %v1244 = vpop.f32.mrb[0].mxu0
  %v1245 = vadd.f32 0.0, %v1244
  %v1246 = vpop.f32.mrb[0].mxu0
  %1247 = vmatprep.mubr.f32.mxu0 0.0
  %1248 = vmatmul.mubr.f32.gmra.mrb[0].mxu0 %v599
  %v1249 = vpop.f32.mrb[0].mxu0
  %v1250 = vadd.f32 0.0, %v1249
  %v1251 = vpop.f32.mrb[0].mxu0
  %1252 = vmatprep.mubr.f32.mxu0 0.0
  %1253 = vmatmul.mubr.f32.gmra.mrb[0].mxu0 %v602
  %v1254 = vpop.f32.mrb[0].mxu0
  %v1255 = vadd.f32 0.0, %v1254
  %v1256 = vpop.f32.mrb[0].mxu0
  %1257 = vmatprep.mubr.f32.mxu0 0.0
  %1258 = vmatmul.mubr.f32.gmra.mrb[0].mxu0 %v605
  %v1259 = vpop.f32.mrb[0].mxu0
  %v1260 = vadd.f32 0.0, %v1259
  %v1261 = vpop.f32.mrb[0].mxu0
  %1262 = vmatprep.mubr.f32.mxu0 0.0
  %1263 = vmatmul.mubr.f32.gmra.mrb[0].mxu0 %v608
  %v1264 = vpop.f32.mrb[0].mxu0
  %v1265 = vadd.f32 0.0, %v1264
  %v1266 = vpop.f32.mrb[0].mxu0
  %1267 = vmatprep.mubr.f32.mxu0 0.0
  %1268 = vmatmul.mubr.f32.gmra.mrb[0].mxu0 %v611
  %v1269 = vpop.f32.mrb[0].mxu0
  %v1270 = vadd.f32 0.0, %v1269
  %v1271 = vpop.f32.mrb[0].mxu0
  %1272 = vmatprep.mubr.f32.mxu0 0.0
  %1273 = vmatmul.mubr.f32.gmra.mrb[0].mxu0 %v614
  %v1274 = vpop.f32.mrb[0].mxu0
  %v1275 = vadd.f32 0.0, %v1274
  %v1276 = vpop.f32.mrb[0].mxu0
  %1277 = vmatprep.mubr.f32.mxu0 0.0
  %1278 = vmatmul.mubr.f32.gmra.mrb[0].mxu0 %v617
  %v1279 = vpop.f32.mrb[0].mxu0
  %v1280 = vadd.f32 0.0, %v1279
  %v1281 = vpop.f32.mrb[0].mxu0
  %1282 = vmatprep.mubr.f32.mxu0 0.0
  %1283 = vmatmul.mubr.f32.gmra.mrb[0].mxu0 %v620
  %v1284 = vpop.f32.mrb[0].mxu0
  %v1285 = vadd.f32 0.0, %v1284
  %v1286 = vpop.f32.mrb[0].mxu0
  %1287 = vmatprep.mubr.f32.mxu0 0.0
  %1288 = vmatmul.mubr.f32.gmra.mrb[0].mxu0 %v623
  %v1289 = vpop.f32.mrb[0].mxu0
  %v1290 = vadd.f32 0.0, %v1289
  %v1291 = vpop.f32.mrb[0].mxu0
  %1292 = vmatprep.mubr.f32.mxu0 0.0
  %1293 = vmatmul.mubr.f32.gmra.mrb[0].mxu0 %v626
  %v1294 = vpop.f32.mrb[0].mxu0
  %v1295 = vadd.f32 0.0, %v1294
  %v1296 = vpop.f32.mrb[0].mxu0
  %1297 = vmatprep.mubr.f32.mxu0 0.0
  %1298 = vmatmul.mubr.f32.gmra.mrb[0].mxu0 %v629
  %v1299 = vpop.f32.mrb[0].mxu0
  %v1300 = vadd.f32 0.0, %v1299
  %v1301 = vpop.f32.mrb[0].mxu0
  %1302 = vmatprep.mubr.f32.mxu0 0.0
  %1303 = vmatmul.mubr.f32.gmra.mrb[0].mxu0 %v632
  %v1304 = vpop.f32.mrb[0].mxu0
  %v1305 = vadd.f32 0.0, %v1304
  %v1306 = vpop.f32.mrb[0].mxu0
  %1307 = vmatprep.mubr.f32.mxu0 0.0
  %1308 = vmatmul.mubr.f32.gmra.mrb[0].mxu0 %v635
  %v1309 = vpop.f32.mrb[0].mxu0
  %v1310 = vadd.f32 0.0, %v1309
  %v1311 = vpop.f32.mrb[0].mxu0
  %1312 = vmatprep.mubr.f32.mxu0 0.0
  %1313 = vmatmul.mubr.f32.gmra.mrb[0].mxu0 %v638
  %v1314 = vpop.f32.mrb[0].mxu0
  %v1315 = vadd.f32 0.0, %v1314
  %v1316 = vpop.f32.mrb[0].mxu0
  %1317 = vmatprep.mubr.f32.mxu0 0.0
  %1318 = vmatmul.mubr.f32.gmra.mrb[0].mxu0 %v641
  %v1319 = vpop.f32.mrb[0].mxu0
  %v1320 = vadd.f32 0.0, %v1319
  %v1321 = vpop.f32.mrb[0].mxu0
  %1322 = vmatprep.mubr.f32.mxu0 0.0
  %1323 = vmatmul.mubr.f32.gmra.mrb[0].mxu0 %v644
  %v1324 = vpop.f32.mrb[0].mxu0
  %v1325 = vadd.f32 0.0, %v1324
  %v1326 = vpop.f32.mrb[0].mxu0
  %1327 = vmatprep.mubr.f32.mxu0 0.0
  %1328 = vmatmul.mubr.f32.gmra.mrb[0].mxu0 %v647
  %v1329 = vpop.f32.mrb[0].mxu0
  %v1330 = vadd.f32 0.0, %v1329
  %v1331 = vpop.f32.mrb[0].mxu0
  %1332 = vmatprep.mubr.f32.mxu0 0.0
  %1333 = vmatmul.mubr.f32.gmra.mrb[0].mxu0 %v650
  %v1334 = vpop.f32.mrb[0].mxu0
  %v1335 = vadd.f32 0.0, %v1334
  %v1336 = vpop.f32.mrb[0].mxu0
  %1337 = vmatprep.mubr.f32.mxu0 0.0
  %1338 = vmatmul.mubr.f32.gmra.mrb[0].mxu0 %v653
  %v1339 = vpop.f32.mrb[0].mxu0
  %v1340 = vadd.f32 0.0, %v1339
  %v1341 = vpop.f32.mrb[0].mxu0
  %1342 = vmatprep.mubr.f32.mxu0 0.0
  %1343 = vmatmul.mubr.f32.gmra.mrb[0].mxu0 %v656
  %v1344 = vpop.f32.mrb[0].mxu0
  %v1345 = vadd.f32 0.0, %v1344
  %v1346 = vpop.f32.mrb[0].mxu0
  %1347 = vmatprep.mubr.f32.mxu0 0.0
  %1348 = vmatmul.mubr.f32.gmra.mrb[0].mxu0 %v659
  %v1349 = vpop.f32.mrb[0].mxu0
  %v1350 = vadd.f32 0.0, %v1349
  %v1351 = vpop.f32.mrb[0].mxu0
  %1352 = vmatprep.mubr.f32.mxu0 0.0
  %1353 = vmatmul.mubr.f32.gmra.mrb[0].mxu0 %v662
  %v1354 = vpop.f32.mrb[0].mxu0
  %v1355 = vadd.f32 0.0, %v1354
  %v1356 = vpop.f32.mrb[0].mxu0
  %1357 = vdwg.mxu0
  %vm1358 = vcmask 23552
  %v1360 = vsel %vm1358, %v35, 0
  %v1363 = vsel %vm1358, %v36, 0
  %v1366 = vsel %vm1358, %v37, 0
  %v1369 = vsel %vm1358, %v38, 0
  %v1372 = vsel %vm1358, %v39, 0
  %v1375 = vsel %vm1358, %v40, 0
  %v1378 = vsel %vm1358, %v41, 0
  %v1381 = vsel %vm1358, %v42, 0
  %v1384 = vsel %vm1358, %v43, 0
  %v1387 = vsel %vm1358, %v44, 0
  %v1390 = vsel %vm1358, %v45, 0
  %v1393 = vsel %vm1358, %v46, 0
  %v1396 = vsel %vm1358, %v47, 0
  %v1399 = vsel %vm1358, %v48, 0
  %v1402 = vsel %vm1358, %v49, 0
  %v1405 = vsel %vm1358, %v50, 0
  %v1408 = vsel %vm1358, %v51, 0
  %v1411 = vsel %vm1358, %v52, 0
  %v1414 = vsel %vm1358, %v53, 0
  %v1417 = vsel %vm1358, %v54, 0
  %v1420 = vsel %vm1358, %v55, 0
  %v1423 = vsel %vm1358, %v56, 0
  %v1426 = vsel %vm1358, %v57, 0
  %v1429 = vsel %vm1358, %v58, 0
  %v1432 = vsel %vm1358, %v59, 0
  %v1435 = vsel %vm1358, %v60, 0
  %v1438 = vsel %vm1358, %v61, 0
  %v1441 = vsel %vm1358, %v62, 0
  %v1444 = vsel %vm1358, %v63, 0
  %v1447 = vsel %vm1358, %v64, 0
  %v1450 = vsel %vm1358, %v65, 0
  %v1453 = vsel %vm1358, %v66, 0
  %v1456 = vsel %vm1358, %v67, 0
  %v1459 = vsel %vm1358, %v68, 0
  %v1462 = vsel %vm1358, %v69, 0
  %v1465 = vsel %vm1358, %v70, 0
  %v1468 = vsel %vm1358, %v71, 0
  %v1471 = vsel %vm1358, %v72, 0
  %v1474 = vsel %vm1358, %v73, 0
  %v1477 = vsel %vm1358, %v74, 0
  %v1480 = vsel %vm1358, %v75, 0
  %v1483 = vsel %vm1358, %v76, 0
  %v1486 = vsel %vm1358, %v77, 0
  %v1489 = vsel %vm1358, %v78, 0
  %v1492 = vsel %vm1358, %v79, 0
  %v1495 = vsel %vm1358, %v80, 0
  %v1498 = vsel %vm1358, %v81, 0
  %v1501 = vsel %vm1358, %v82, 0
  %v1504 = vsel %vm1358, %v83, 0
  %v1507 = vsel %vm1358, %v84, 0
  %v1510 = vsel %vm1358, %v85, 0
  %v1513 = vsel %vm1358, %v86, 0
  %v1516 = vsel %vm1358, %v87, 0
  %v1519 = vsel %vm1358, %v88, 0
  %v1522 = vsel %vm1358, %v89, 0
  %v1525 = vsel %vm1358, %v90, 0
  %v1528 = vsel %vm1358, %v91, 0
  %v1531 = vsel %vm1358, %v92, 0
  %v1534 = vsel %vm1358, %v93, 0
  %v1537 = vsel %vm1358, %v94, 0
  %v1540 = vsel %vm1358, %v95, 0
  %v1543 = vsel %vm1358, %v96, 0
  %v1546 = vsel %vm1358, %v97, 0
  %v1549 = vsel %vm1358, %v98, 0
  %v1552 = vsel %vm1358, %v99, 0
  %v1555 = vsel %vm1358, %v100, 0
  %v1558 = vsel %vm1358, %v101, 0
  %v1561 = vsel %vm1358, %v102, 0
  %v1564 = vsel %vm1358, %v103, 0
  %v1567 = vsel %vm1358, %v104, 0
  %v1570 = vsel %vm1358, %v105, 0
  %v1573 = vsel %vm1358, %v106, 0
  %v1576 = vsel %vm1358, %v107, 0
  %v1579 = vsel %vm1358, %v108, 0
  %v1582 = vsel %vm1358, %v109, 0
  %v1585 = vsel %vm1358, %v110, 0
  %v1588 = vsel %vm1358, %v111, 0
  %v1591 = vsel %vm1358, %v112, 0
  %v1594 = vsel %vm1358, %v113, 0
  %v1597 = vsel %vm1358, %v114, 0
  %v1600 = vsel %vm1358, %v115, 0
  %v1603 = vsel %vm1358, %v116, 0
  %v1606 = vsel %vm1358, %v117, 0
  %v1609 = vsel %vm1358, %v118, 0
  %v1612 = vsel %vm1358, %v119, 0
  %v1615 = vsel %vm1358, %v120, 0
  %v1618 = vsel %vm1358, %v121, 0
  %v1621 = vsel %vm1358, %v122, 0
  %v1624 = vsel %vm1358, %v123, 0
  %v1627 = vsel %vm1358, %v124, 0
  %v1630 = vsel %vm1358, %v125, 0
  %v1633 = vsel %vm1358, %v126, 0
  %v1636 = vsel %vm1358, %v127, 0
  %v1639 = vsel %vm1358, %v128, 0
  %v1642 = vsel %vm1358, %v129, 0
  %v1645 = vsel %vm1358, %v130, 0
  %v1648 = vsel %vm1358, %v131, 0
  %v1651 = vsel %vm1358, %v132, 0
  %v1654 = vsel %vm1358, %v133, 0
  %v1657 = vsel %vm1358, %v134, 0
  %v1660 = vsel %vm1358, %v135, 0
  %v1663 = vsel %vm1358, %v136, 0
  %v1666 = vsel %vm1358, %v137, 0
  %v1669 = vsel %vm1358, %v138, 0
  %v1672 = vsel %vm1358, %v139, 0
  %v1675 = vsel %vm1358, %v140, 0
  %v1678 = vsel %vm1358, %v141, 0
  %v1681 = vsel %vm1358, %v142, 0
  %v1684 = vsel %vm1358, %v143, 0
  %v1687 = vsel %vm1358, %v144, 0
  %v1690 = vsel %vm1358, %v145, 0
  %v1693 = vsel %vm1358, %v146, 0
  %v1696 = vsel %vm1358, %v147, 0
  %v1699 = vsel %vm1358, %v148, 0
  %v1702 = vsel %vm1358, %v149, 0
  %v1705 = vsel %vm1358, %v150, 0
  %v1708 = vsel %vm1358, %v151, 0
  %v1711 = vsel %vm1358, %v152, 0
  %v1714 = vsel %vm1358, %v153, 0
  %v1717 = vsel %vm1358, %v154, 0
  %v1720 = vsel %vm1358, %v155, 0
  %v1723 = vsel %vm1358, %v156, 0
  %v1726 = vsel %vm1358, %v157, 0
  %v1729 = vsel %vm1358, %v158, 0
  %v1732 = vsel %vm1358, %v159, 0
  %vm1734 = vcmask 1042432
  %v1736 = vsel %vm1734, %v160, 0
  %1738 = vmatprep.subr.mxu0 0.0
  %1739 = vmatpush1.msra.mxu0 %v1736
  %1740 = vmatprep.subr.mxu0 0.0
  %1741 = vmatpush1.msra.mxu0 0.0
  %1742 = vmatprep.subr.mxu0 0.0
  %1743 = vmatpush1.msra.mxu0 0.0
  %1744 = vmatprep.subr.mxu0 0.0
  %1745 = vmatpush1.msra.mxu0 0.0
  %1746 = vmatprep.subr.mxu0 0.0
  %1747 = vmatpush1.msra.mxu0 0.0
  %1748 = vmatprep.subr.mxu0 0.0
  %1749 = vmatpush1.msra.mxu0 0.0
  %1750 = vmatprep.subr.mxu0 0.0
  %1751 = vmatpush1.msra.mxu0 0.0
  %1752 = vmatprep.subr.mxu0 0.0
  %1753 = vmatpush1.msra.mxu0 0.0
  %1754 = vmatprep.subr.mxu0 0.0
  %1755 = vmatpush1.msra.mxu0 0.0
  %1756 = vmatprep.subr.mxu0 0.0
  %1757 = vmatpush1.msra.mxu0 0.0
  %1758 = vmatprep.subr.mxu0 0.0
  %1759 = vmatpush1.msra.mxu0 0.0
  %1760 = vmatprep.subr.mxu0 0.0
  %1761 = vmatpush1.msra.mxu0 0.0
  %1762 = vmatprep.subr.mxu0 0.0
  %1763 = vmatpush1.msra.mxu0 0.0
  %1764 = vmatprep.subr.mxu0 0.0
  %1765 = vmatpush1.msra.mxu0 0.0
  %1766 = vmatprep.subr.mxu0 0.0
  %1767 = vmatpush1.msra.mxu0 0.0
  %1768 = vmatprep.subr.mxu0 0.0
  %1769 = vmatpush1.msra.mxu0 0.0
  %1770 = vmatprep.subr.mxu0 0.0
  %1771 = vmatpush1.msra.mxu0 0.0
  %1772 = vmatprep.subr.mxu0 0.0
  %1773 = vmatpush1.msra.mxu0 0.0
  %1774 = vmatprep.subr.mxu0 0.0
  %1775 = vmatpush1.msra.mxu0 0.0
  %1776 = vmatprep.subr.mxu0 0.0
  %1777 = vmatpush1.msra.mxu0 0.0
  %1778 = vmatprep.subr.mxu0 0.0
  %1779 = vmatpush1.msra.mxu0 0.0
  %1780 = vmatprep.subr.mxu0 0.0
  %1781 = vmatpush1.msra.mxu0 0.0
  %1782 = vmatprep.subr.mxu0 0.0
  %1783 = vmatpush1.msra.mxu0 0.0
  %1784 = vmatprep.subr.mxu0 0.0
  %1785 = vmatpush1.msra.mxu0 0.0
  %1786 = vmatprep.subr.mxu0 0.0
  %1787 = vmatpush1.msra.mxu0 0.0
  %1788 = vmatprep.subr.mxu0 0.0
  %1789 = vmatpush1.msra.mxu0 0.0
  %1790 = vmatprep.subr.mxu0 0.0
  %1791 = vmatpush1.msra.mxu0 0.0
  %1792 = vmatprep.subr.mxu0 0.0
  %1793 = vmatpush1.msra.mxu0 0.0
  %1794 = vmatprep.subr.mxu0 0.0
  %1795 = vmatpush1.msra.mxu0 0.0
  %1796 = vmatprep.subr.mxu0 0.0
  %1797 = vmatpush1.msra.mxu0 0.0
  %1798 = vmatprep.subr.mxu0 0.0
  %1799 = vmatpush1.msra.mxu0 0.0
  %1800 = vmatprep.subr.mxu0 0.0
  %1801 = vmatpush1.msra.mxu0 0.0
  %1802 = vmatprep.mubr.f32.mxu0 0.0
  %1803 = vmatmul.mubr.f32.gmra.mrb[0].mxu0 %v1360
  %v1804 = vpop.f32.mrb[0].mxu0
  %v1805 = vadd.f32 %v735, %v1804
  %v1806 = vpop.f32.mrb[0].mxu0
  %1807 = vmatprep.mubr.f32.mxu0 0.0
  %1808 = vmatmul.mubr.f32.gmra.mrb[0].mxu0 %v1363
  %v1809 = vpop.f32.mrb[0].mxu0
  %v1810 = vadd.f32 %v740, %v1809
  %v1811 = vpop.f32.mrb[0].mxu0
  %1812 = vmatprep.mubr.f32.mxu0 0.0
  %1813 = vmatmul.mubr.f32.gmra.mrb[0].mxu0 %v1366
  %v1814 = vpop.f32.mrb[0].mxu0
  %v1815 = vadd.f32 %v745, %v1814
  %v1816 = vpop.f32.mrb[0].mxu0
  %1817 = vmatprep.mubr.f32.mxu0 0.0
  %1818 = vmatmul.mubr.f32.gmra.mrb[0].mxu0 %v1369
  %v1819 = vpop.f32.mrb[0].mxu0
  %v1820 = vadd.f32 %v750, %v1819
  %v1821 = vpop.f32.mrb[0].mxu0
  %1822 = vmatprep.mubr.f32.mxu0 0.0
  %1823 = vmatmul.mubr.f32.gmra.mrb[0].mxu0 %v1372
  %v1824 = vpop.f32.mrb[0].mxu0
  %v1825 = vadd.f32 %v755, %v1824
  %v1826 = vpop.f32.mrb[0].mxu0
  %1827 = vmatprep.mubr.f32.mxu0 0.0
  %1828 = vmatmul.mubr.f32.gmra.mrb[0].mxu0 %v1375
  %v1829 = vpop.f32.mrb[0].mxu0
  %v1830 = vadd.f32 %v760, %v1829
  %v1831 = vpop.f32.mrb[0].mxu0
  %1832 = vmatprep.mubr.f32.mxu0 0.0
  %1833 = vmatmul.mubr.f32.gmra.mrb[0].mxu0 %v1378
  %v1834 = vpop.f32.mrb[0].mxu0
  %v1835 = vadd.f32 %v765, %v1834
  %v1836 = vpop.f32.mrb[0].mxu0
  %1837 = vmatprep.mubr.f32.mxu0 0.0
  %1838 = vmatmul.mubr.f32.gmra.mrb[0].mxu0 %v1381
  %v1839 = vpop.f32.mrb[0].mxu0
  %v1840 = vadd.f32 %v770, %v1839
  %v1841 = vpop.f32.mrb[0].mxu0
  %1842 = vmatprep.mubr.f32.mxu0 0.0
  %1843 = vmatmul.mubr.f32.gmra.mrb[0].mxu0 %v1384
  %v1844 = vpop.f32.mrb[0].mxu0
  %v1845 = vadd.f32 %v775, %v1844
  %v1846 = vpop.f32.mrb[0].mxu0
  %1847 = vmatprep.mubr.f32.mxu0 0.0
  %1848 = vmatmul.mubr.f32.gmra.mrb[0].mxu0 %v1387
  %v1849 = vpop.f32.mrb[0].mxu0
  %v1850 = vadd.f32 %v780, %v1849
  %v1851 = vpop.f32.mrb[0].mxu0
  %1852 = vmatprep.mubr.f32.mxu0 0.0
  %1853 = vmatmul.mubr.f32.gmra.mrb[0].mxu0 %v1390
  %v1854 = vpop.f32.mrb[0].mxu0
  %v1855 = vadd.f32 %v785, %v1854
  %v1856 = vpop.f32.mrb[0].mxu0
  %1857 = vmatprep.mubr.f32.mxu0 0.0
  %1858 = vmatmul.mubr.f32.gmra.mrb[0].mxu0 %v1393
  %v1859 = vpop.f32.mrb[0].mxu0
  %v1860 = vadd.f32 %v790, %v1859
  %v1861 = vpop.f32.mrb[0].mxu0
  %1862 = vmatprep.mubr.f32.mxu0 0.0
  %1863 = vmatmul.mubr.f32.gmra.mrb[0].mxu0 %v1396
  %v1864 = vpop.f32.mrb[0].mxu0
  %v1865 = vadd.f32 %v795, %v1864
  %v1866 = vpop.f32.mrb[0].mxu0
  %1867 = vmatprep.mubr.f32.mxu0 0.0
  %1868 = vmatmul.mubr.f32.gmra.mrb[0].mxu0 %v1399
  %v1869 = vpop.f32.mrb[0].mxu0
  %v1870 = vadd.f32 %v800, %v1869
  %v1871 = vpop.f32.mrb[0].mxu0
  %1872 = vmatprep.mubr.f32.mxu0 0.0
  %1873 = vmatmul.mubr.f32.gmra.mrb[0].mxu0 %v1402
  %v1874 = vpop.f32.mrb[0].mxu0
  %v1875 = vadd.f32 %v805, %v1874
  %v1876 = vpop.f32.mrb[0].mxu0
  %1877 = vmatprep.mubr.f32.mxu0 0.0
  %1878 = vmatmul.mubr.f32.gmra.mrb[0].mxu0 %v1405
  %v1879 = vpop.f32.mrb[0].mxu0
  %v1880 = vadd.f32 %v810, %v1879
  %v1881 = vpop.f32.mrb[0].mxu0
  %1882 = vmatprep.mubr.f32.mxu0 0.0
  %1883 = vmatmul.mubr.f32.gmra.mrb[0].mxu0 %v1408
  %v1884 = vpop.f32.mrb[0].mxu0
  %v1885 = vadd.f32 %v815, %v1884
  %v1886 = vpop.f32.mrb[0].mxu0
  %1887 = vmatprep.mubr.f32.mxu0 0.0
  %1888 = vmatmul.mubr.f32.gmra.mrb[0].mxu0 %v1411
  %v1889 = vpop.f32.mrb[0].mxu0
  %v1890 = vadd.f32 %v820, %v1889
  %v1891 = vpop.f32.mrb[0].mxu0
  %1892 = vmatprep.mubr.f32.mxu0 0.0
  %1893 = vmatmul.mubr.f32.gmra.mrb[0].mxu0 %v1414
  %v1894 = vpop.f32.mrb[0].mxu0
  %v1895 = vadd.f32 %v825, %v1894
  %v1896 = vpop.f32.mrb[0].mxu0
  %1897 = vmatprep.mubr.f32.mxu0 0.0
  %1898 = vmatmul.mubr.f32.gmra.mrb[0].mxu0 %v1417
  %v1899 = vpop.f32.mrb[0].mxu0
  %v1900 = vadd.f32 %v830, %v1899
  %v1901 = vpop.f32.mrb[0].mxu0
  %1902 = vmatprep.mubr.f32.mxu0 0.0
  %1903 = vmatmul.mubr.f32.gmra.mrb[0].mxu0 %v1420
  %v1904 = vpop.f32.mrb[0].mxu0
  %v1905 = vadd.f32 %v835, %v1904
  %v1906 = vpop.f32.mrb[0].mxu0
  %1907 = vmatprep.mubr.f32.mxu0 0.0
  %1908 = vmatmul.mubr.f32.gmra.mrb[0].mxu0 %v1423
  %v1909 = vpop.f32.mrb[0].mxu0
  %v1910 = vadd.f32 %v840, %v1909
  %v1911 = vpop.f32.mrb[0].mxu0
  %1912 = vmatprep.mubr.f32.mxu0 0.0
  %1913 = vmatmul.mubr.f32.gmra.mrb[0].mxu0 %v1426
  %v1914 = vpop.f32.mrb[0].mxu0
  %v1915 = vadd.f32 %v845, %v1914
  %v1916 = vpop.f32.mrb[0].mxu0
  %1917 = vmatprep.mubr.f32.mxu0 0.0
  %1918 = vmatmul.mubr.f32.gmra.mrb[0].mxu0 %v1429
  %v1919 = vpop.f32.mrb[0].mxu0
  %v1920 = vadd.f32 %v850, %v1919
  %v1921 = vpop.f32.mrb[0].mxu0
  %1922 = vmatprep.mubr.f32.mxu0 0.0
  %1923 = vmatmul.mubr.f32.gmra.mrb[0].mxu0 %v1432
  %v1924 = vpop.f32.mrb[0].mxu0
  %v1925 = vadd.f32 %v855, %v1924
  %v1926 = vpop.f32.mrb[0].mxu0
  %1927 = vmatprep.mubr.f32.mxu0 0.0
  %1928 = vmatmul.mubr.f32.gmra.mrb[0].mxu0 %v1435
  %v1929 = vpop.f32.mrb[0].mxu0
  %v1930 = vadd.f32 %v860, %v1929
  %v1931 = vpop.f32.mrb[0].mxu0
  %1932 = vmatprep.mubr.f32.mxu0 0.0
  %1933 = vmatmul.mubr.f32.gmra.mrb[0].mxu0 %v1438
  %v1934 = vpop.f32.mrb[0].mxu0
  %v1935 = vadd.f32 %v865, %v1934
  %v1936 = vpop.f32.mrb[0].mxu0
  %1937 = vmatprep.mubr.f32.mxu0 0.0
  %1938 = vmatmul.mubr.f32.gmra.mrb[0].mxu0 %v1441
  %v1939 = vpop.f32.mrb[0].mxu0
  %v1940 = vadd.f32 %v870, %v1939
  %v1941 = vpop.f32.mrb[0].mxu0
  %1942 = vmatprep.mubr.f32.mxu0 0.0
  %1943 = vmatmul.mubr.f32.gmra.mrb[0].mxu0 %v1444
  %v1944 = vpop.f32.mrb[0].mxu0
  %v1945 = vadd.f32 %v875, %v1944
  %v1946 = vpop.f32.mrb[0].mxu0
  %1947 = vmatprep.mubr.f32.mxu0 0.0
  %1948 = vmatmul.mubr.f32.gmra.mrb[0].mxu0 %v1447
  %v1949 = vpop.f32.mrb[0].mxu0
  %v1950 = vadd.f32 %v880, %v1949
  %v1951 = vpop.f32.mrb[0].mxu0
  %1952 = vmatprep.mubr.f32.mxu0 0.0
  %1953 = vmatmul.mubr.f32.gmra.mrb[0].mxu0 %v1450
  %v1954 = vpop.f32.mrb[0].mxu0
  %v1955 = vadd.f32 %v885, %v1954
  %v1956 = vpop.f32.mrb[0].mxu0
  %1957 = vmatprep.mubr.f32.mxu0 0.0
  %1958 = vmatmul.mubr.f32.gmra.mrb[0].mxu0 %v1453
  %v1959 = vpop.f32.mrb[0].mxu0
  %v1960 = vadd.f32 %v890, %v1959
  %v1961 = vpop.f32.mrb[0].mxu0
  %1962 = vmatprep.mubr.f32.mxu0 0.0
  %1963 = vmatmul.mubr.f32.gmra.mrb[0].mxu0 %v1456
  %v1964 = vpop.f32.mrb[0].mxu0
  %v1965 = vadd.f32 %v895, %v1964
  %v1966 = vpop.f32.mrb[0].mxu0
  %1967 = vmatprep.mubr.f32.mxu0 0.0
  %1968 = vmatmul.mubr.f32.gmra.mrb[0].mxu0 %v1459
  %v1969 = vpop.f32.mrb[0].mxu0
  %v1970 = vadd.f32 %v900, %v1969
  %v1971 = vpop.f32.mrb[0].mxu0
  %1972 = vmatprep.mubr.f32.mxu0 0.0
  %1973 = vmatmul.mubr.f32.gmra.mrb[0].mxu0 %v1462
  %v1974 = vpop.f32.mrb[0].mxu0
  %v1975 = vadd.f32 %v905, %v1974
  %v1976 = vpop.f32.mrb[0].mxu0
  %1977 = vmatprep.mubr.f32.mxu0 0.0
  %1978 = vmatmul.mubr.f32.gmra.mrb[0].mxu0 %v1465
  %v1979 = vpop.f32.mrb[0].mxu0
  %v1980 = vadd.f32 %v910, %v1979
  %v1981 = vpop.f32.mrb[0].mxu0
  %1982 = vmatprep.mubr.f32.mxu0 0.0
  %1983 = vmatmul.mubr.f32.gmra.mrb[0].mxu0 %v1468
  %v1984 = vpop.f32.mrb[0].mxu0
  %v1985 = vadd.f32 %v915, %v1984
  %v1986 = vpop.f32.mrb[0].mxu0
  %1987 = vmatprep.mubr.f32.mxu0 0.0
  %1988 = vmatmul.mubr.f32.gmra.mrb[0].mxu0 %v1471
  %v1989 = vpop.f32.mrb[0].mxu0
  %v1990 = vadd.f32 %v920, %v1989
  %v1991 = vpop.f32.mrb[0].mxu0
  %1992 = vmatprep.mubr.f32.mxu0 0.0
  %1993 = vmatmul.mubr.f32.gmra.mrb[0].mxu0 %v1474
  %v1994 = vpop.f32.mrb[0].mxu0
  %v1995 = vadd.f32 %v925, %v1994
  %v1996 = vpop.f32.mrb[0].mxu0
  %1997 = vmatprep.mubr.f32.mxu0 0.0
  %1998 = vmatmul.mubr.f32.gmra.mrb[0].mxu0 %v1477
  %v1999 = vpop.f32.mrb[0].mxu0
  %v2000 = vadd.f32 %v930, %v1999
  %v2001 = vpop.f32.mrb[0].mxu0
  %2002 = vmatprep.mubr.f32.mxu0 0.0
  %2003 = vmatmul.mubr.f32.gmra.mrb[0].mxu0 %v1480
  %v2004 = vpop.f32.mrb[0].mxu0
  %v2005 = vadd.f32 %v935, %v2004
  %v2006 = vpop.f32.mrb[0].mxu0
  %2007 = vmatprep.mubr.f32.mxu0 0.0
  %2008 = vmatmul.mubr.f32.gmra.mrb[0].mxu0 %v1483
  %v2009 = vpop.f32.mrb[0].mxu0
  %v2010 = vadd.f32 %v940, %v2009
  %v2011 = vpop.f32.mrb[0].mxu0
  %2012 = vmatprep.mubr.f32.mxu0 0.0
  %2013 = vmatmul.mubr.f32.gmra.mrb[0].mxu0 %v1486
  %v2014 = vpop.f32.mrb[0].mxu0
  %v2015 = vadd.f32 %v945, %v2014
  %v2016 = vpop.f32.mrb[0].mxu0
  %2017 = vmatprep.mubr.f32.mxu0 0.0
  %2018 = vmatmul.mubr.f32.gmra.mrb[0].mxu0 %v1489
  %v2019 = vpop.f32.mrb[0].mxu0
  %v2020 = vadd.f32 %v950, %v2019
  %v2021 = vpop.f32.mrb[0].mxu0
  %2022 = vmatprep.mubr.f32.mxu0 0.0
  %2023 = vmatmul.mubr.f32.gmra.mrb[0].mxu0 %v1492
  %v2024 = vpop.f32.mrb[0].mxu0
  %v2025 = vadd.f32 %v955, %v2024
  %v2026 = vpop.f32.mrb[0].mxu0
  %2027 = vmatprep.mubr.f32.mxu0 0.0
  %2028 = vmatmul.mubr.f32.gmra.mrb[0].mxu0 %v1495
  %v2029 = vpop.f32.mrb[0].mxu0
  %v2030 = vadd.f32 %v960, %v2029
  %v2031 = vpop.f32.mrb[0].mxu0
  %2032 = vmatprep.mubr.f32.mxu0 0.0
  %2033 = vmatmul.mubr.f32.gmra.mrb[0].mxu0 %v1498
  %v2034 = vpop.f32.mrb[0].mxu0
  %v2035 = vadd.f32 %v965, %v2034
  %v2036 = vpop.f32.mrb[0].mxu0
  %2037 = vmatprep.mubr.f32.mxu0 0.0
  %2038 = vmatmul.mubr.f32.gmra.mrb[0].mxu0 %v1501
  %v2039 = vpop.f32.mrb[0].mxu0
  %v2040 = vadd.f32 %v970, %v2039
  %v2041 = vpop.f32.mrb[0].mxu0
  %2042 = vmatprep.mubr.f32.mxu0 0.0
  %2043 = vmatmul.mubr.f32.gmra.mrb[0].mxu0 %v1504
  %v2044 = vpop.f32.mrb[0].mxu0
  %v2045 = vadd.f32 %v975, %v2044
  %v2046 = vpop.f32.mrb[0].mxu0
  %2047 = vmatprep.mubr.f32.mxu0 0.0
  %2048 = vmatmul.mubr.f32.gmra.mrb[0].mxu0 %v1507
  %v2049 = vpop.f32.mrb[0].mxu0
  %v2050 = vadd.f32 %v980, %v2049
  %v2051 = vpop.f32.mrb[0].mxu0
  %2052 = vmatprep.mubr.f32.mxu0 0.0
  %2053 = vmatmul.mubr.f32.gmra.mrb[0].mxu0 %v1510
  %v2054 = vpop.f32.mrb[0].mxu0
  %v2055 = vadd.f32 %v985, %v2054
  %v2056 = vpop.f32.mrb[0].mxu0
  %2057 = vmatprep.mubr.f32.mxu0 0.0
  %2058 = vmatmul.mubr.f32.gmra.mrb[0].mxu0 %v1513
  %v2059 = vpop.f32.mrb[0].mxu0
  %v2060 = vadd.f32 %v990, %v2059
  %v2061 = vpop.f32.mrb[0].mxu0
  %2062 = vmatprep.mubr.f32.mxu0 0.0
  %2063 = vmatmul.mubr.f32.gmra.mrb[0].mxu0 %v1516
  %v2064 = vpop.f32.mrb[0].mxu0
  %v2065 = vadd.f32 %v995, %v2064
  %v2066 = vpop.f32.mrb[0].mxu0
  %2067 = vmatprep.mubr.f32.mxu0 0.0
  %2068 = vmatmul.mubr.f32.gmra.mrb[0].mxu0 %v1519
  %v2069 = vpop.f32.mrb[0].mxu0
  %v2070 = vadd.f32 %v1000, %v2069
  %v2071 = vpop.f32.mrb[0].mxu0
  %2072 = vmatprep.mubr.f32.mxu0 0.0
  %2073 = vmatmul.mubr.f32.gmra.mrb[0].mxu0 %v1522
  %v2074 = vpop.f32.mrb[0].mxu0
  %v2075 = vadd.f32 %v1005, %v2074
  %v2076 = vpop.f32.mrb[0].mxu0
  %2077 = vmatprep.mubr.f32.mxu0 0.0
  %2078 = vmatmul.mubr.f32.gmra.mrb[0].mxu0 %v1525
  %v2079 = vpop.f32.mrb[0].mxu0
  %v2080 = vadd.f32 %v1010, %v2079
  %v2081 = vpop.f32.mrb[0].mxu0
  %2082 = vmatprep.mubr.f32.mxu0 0.0
  %2083 = vmatmul.mubr.f32.gmra.mrb[0].mxu0 %v1528
  %v2084 = vpop.f32.mrb[0].mxu0
  %v2085 = vadd.f32 %v1015, %v2084
  %v2086 = vpop.f32.mrb[0].mxu0
  %2087 = vmatprep.mubr.f32.mxu0 0.0
  %2088 = vmatmul.mubr.f32.gmra.mrb[0].mxu0 %v1531
  %v2089 = vpop.f32.mrb[0].mxu0
  %v2090 = vadd.f32 %v1020, %v2089
  %v2091 = vpop.f32.mrb[0].mxu0
  %2092 = vmatprep.mubr.f32.mxu0 0.0
  %2093 = vmatmul.mubr.f32.gmra.mrb[0].mxu0 %v1534
  %v2094 = vpop.f32.mrb[0].mxu0
  %v2095 = vadd.f32 %v1025, %v2094
  %v2096 = vpop.f32.mrb[0].mxu0
  %2097 = vmatprep.mubr.f32.mxu0 0.0
  %2098 = vmatmul.mubr.f32.gmra.mrb[0].mxu0 %v1537
  %v2099 = vpop.f32.mrb[0].mxu0
  %v2100 = vadd.f32 %v1030, %v2099
  %v2101 = vpop.f32.mrb[0].mxu0
  %2102 = vmatprep.mubr.f32.mxu0 0.0
  %2103 = vmatmul.mubr.f32.gmra.mrb[0].mxu0 %v1540
  %v2104 = vpop.f32.mrb[0].mxu0
  %v2105 = vadd.f32 %v1035, %v2104
  %v2106 = vpop.f32.mrb[0].mxu0
  %2107 = vmatprep.mubr.f32.mxu0 0.0
  %2108 = vmatmul.mubr.f32.gmra.mrb[0].mxu0 %v1543
  %v2109 = vpop.f32.mrb[0].mxu0
  %v2110 = vadd.f32 %v1040, %v2109
  %v2111 = vpop.f32.mrb[0].mxu0
  %2112 = vmatprep.mubr.f32.mxu0 0.0
  %2113 = vmatmul.mubr.f32.gmra.mrb[0].mxu0 %v1546
  %v2114 = vpop.f32.mrb[0].mxu0
  %v2115 = vadd.f32 %v1045, %v2114
  %v2116 = vpop.f32.mrb[0].mxu0
  %2117 = vmatprep.mubr.f32.mxu0 0.0
  %2118 = vmatmul.mubr.f32.gmra.mrb[0].mxu0 %v1549
  %v2119 = vpop.f32.mrb[0].mxu0
  %v2120 = vadd.f32 %v1050, %v2119
  %v2121 = vpop.f32.mrb[0].mxu0
  %2122 = vmatprep.mubr.f32.mxu0 0.0
  %2123 = vmatmul.mubr.f32.gmra.mrb[0].mxu0 %v1552
  %v2124 = vpop.f32.mrb[0].mxu0
  %v2125 = vadd.f32 %v1055, %v2124
  %v2126 = vpop.f32.mrb[0].mxu0
  %2127 = vmatprep.mubr.f32.mxu0 0.0
  %2128 = vmatmul.mubr.f32.gmra.mrb[0].mxu0 %v1555
  %v2129 = vpop.f32.mrb[0].mxu0
  %v2130 = vadd.f32 %v1060, %v2129
  %v2131 = vpop.f32.mrb[0].mxu0
  %2132 = vmatprep.mubr.f32.mxu0 0.0
  %2133 = vmatmul.mubr.f32.gmra.mrb[0].mxu0 %v1558
  %v2134 = vpop.f32.mrb[0].mxu0
  %v2135 = vadd.f32 %v1065, %v2134
  %v2136 = vpop.f32.mrb[0].mxu0
  %2137 = vmatprep.mubr.f32.mxu0 0.0
  %2138 = vmatmul.mubr.f32.gmra.mrb[0].mxu0 %v1561
  %v2139 = vpop.f32.mrb[0].mxu0
  %v2140 = vadd.f32 %v1070, %v2139
  %v2141 = vpop.f32.mrb[0].mxu0
  %2142 = vmatprep.mubr.f32.mxu0 0.0
  %2143 = vmatmul.mubr.f32.gmra.mrb[0].mxu0 %v1564
  %v2144 = vpop.f32.mrb[0].mxu0
  %v2145 = vadd.f32 %v1075, %v2144
  %v2146 = vpop.f32.mrb[0].mxu0
  %2147 = vmatprep.mubr.f32.mxu0 0.0
  %2148 = vmatmul.mubr.f32.gmra.mrb[0].mxu0 %v1567
  %v2149 = vpop.f32.mrb[0].mxu0
  %v2150 = vadd.f32 %v1080, %v2149
  %v2151 = vpop.f32.mrb[0].mxu0
  %2152 = vmatprep.mubr.f32.mxu0 0.0
  %2153 = vmatmul.mubr.f32.gmra.mrb[0].mxu0 %v1570
  %v2154 = vpop.f32.mrb[0].mxu0
  %v2155 = vadd.f32 %v1085, %v2154
  %v2156 = vpop.f32.mrb[0].mxu0
  %2157 = vmatprep.mubr.f32.mxu0 0.0
  %2158 = vmatmul.mubr.f32.gmra.mrb[0].mxu0 %v1573
  %v2159 = vpop.f32.mrb[0].mxu0
  %v2160 = vadd.f32 %v1090, %v2159
  %v2161 = vpop.f32.mrb[0].mxu0
  %2162 = vmatprep.mubr.f32.mxu0 0.0
  %2163 = vmatmul.mubr.f32.gmra.mrb[0].mxu0 %v1576
  %v2164 = vpop.f32.mrb[0].mxu0
  %v2165 = vadd.f32 %v1095, %v2164
  %v2166 = vpop.f32.mrb[0].mxu0
  %2167 = vmatprep.mubr.f32.mxu0 0.0
  %2168 = vmatmul.mubr.f32.gmra.mrb[0].mxu0 %v1579
  %v2169 = vpop.f32.mrb[0].mxu0
  %v2170 = vadd.f32 %v1100, %v2169
  %v2171 = vpop.f32.mrb[0].mxu0
  %2172 = vmatprep.mubr.f32.mxu0 0.0
  %2173 = vmatmul.mubr.f32.gmra.mrb[0].mxu0 %v1582
  %v2174 = vpop.f32.mrb[0].mxu0
  %v2175 = vadd.f32 %v1105, %v2174
  %v2176 = vpop.f32.mrb[0].mxu0
  %2177 = vmatprep.mubr.f32.mxu0 0.0
  %2178 = vmatmul.mubr.f32.gmra.mrb[0].mxu0 %v1585
  %v2179 = vpop.f32.mrb[0].mxu0
  %v2180 = vadd.f32 %v1110, %v2179
  %v2181 = vpop.f32.mrb[0].mxu0
  %2182 = vmatprep.mubr.f32.mxu0 0.0
  %2183 = vmatmul.mubr.f32.gmra.mrb[0].mxu0 %v1588
  %v2184 = vpop.f32.mrb[0].mxu0
  %v2185 = vadd.f32 %v1115, %v2184
  %v2186 = vpop.f32.mrb[0].mxu0
  %2187 = vmatprep.mubr.f32.mxu0 0.0
  %2188 = vmatmul.mubr.f32.gmra.mrb[0].mxu0 %v1591
  %v2189 = vpop.f32.mrb[0].mxu0
  %v2190 = vadd.f32 %v1120, %v2189
  %v2191 = vpop.f32.mrb[0].mxu0
  %2192 = vmatprep.mubr.f32.mxu0 0.0
  %2193 = vmatmul.mubr.f32.gmra.mrb[0].mxu0 %v1594
  %v2194 = vpop.f32.mrb[0].mxu0
  %v2195 = vadd.f32 %v1125, %v2194
  %v2196 = vpop.f32.mrb[0].mxu0
  %2197 = vmatprep.mubr.f32.mxu0 0.0
  %2198 = vmatmul.mubr.f32.gmra.mrb[0].mxu0 %v1597
  %v2199 = vpop.f32.mrb[0].mxu0
  %v2200 = vadd.f32 %v1130, %v2199
  %v2201 = vpop.f32.mrb[0].mxu0
  %2202 = vmatprep.mubr.f32.mxu0 0.0
  %2203 = vmatmul.mubr.f32.gmra.mrb[0].mxu0 %v1600
  %v2204 = vpop.f32.mrb[0].mxu0
  %v2205 = vadd.f32 %v1135, %v2204
  %v2206 = vpop.f32.mrb[0].mxu0
  %2207 = vmatprep.mubr.f32.mxu0 0.0
  %2208 = vmatmul.mubr.f32.gmra.mrb[0].mxu0 %v1603
  %v2209 = vpop.f32.mrb[0].mxu0
  %v2210 = vadd.f32 %v1140, %v2209
  %v2211 = vpop.f32.mrb[0].mxu0
  %2212 = vmatprep.mubr.f32.mxu0 0.0
  %2213 = vmatmul.mubr.f32.gmra.mrb[0].mxu0 %v1606
  %v2214 = vpop.f32.mrb[0].mxu0
  %v2215 = vadd.f32 %v1145, %v2214
  %v2216 = vpop.f32.mrb[0].mxu0
  %2217 = vmatprep.mubr.f32.mxu0 0.0
  %2218 = vmatmul.mubr.f32.gmra.mrb[0].mxu0 %v1609
  %v2219 = vpop.f32.mrb[0].mxu0
  %v2220 = vadd.f32 %v1150, %v2219
  %v2221 = vpop.f32.mrb[0].mxu0
  %2222 = vmatprep.mubr.f32.mxu0 0.0
  %2223 = vmatmul.mubr.f32.gmra.mrb[0].mxu0 %v1612
  %v2224 = vpop.f32.mrb[0].mxu0
  %v2225 = vadd.f32 %v1155, %v2224
  %v2226 = vpop.f32.mrb[0].mxu0
  %2227 = vmatprep.mubr.f32.mxu0 0.0
  %2228 = vmatmul.mubr.f32.gmra.mrb[0].mxu0 %v1615
  %v2229 = vpop.f32.mrb[0].mxu0
  %v2230 = vadd.f32 %v1160, %v2229
  %v2231 = vpop.f32.mrb[0].mxu0
  %2232 = vmatprep.mubr.f32.mxu0 0.0
  %2233 = vmatmul.mubr.f32.gmra.mrb[0].mxu0 %v1618
  %v2234 = vpop.f32.mrb[0].mxu0
  %v2235 = vadd.f32 %v1165, %v2234
  %v2236 = vpop.f32.mrb[0].mxu0
  %2237 = vmatprep.mubr.f32.mxu0 0.0
  %2238 = vmatmul.mubr.f32.gmra.mrb[0].mxu0 %v1621
  %v2239 = vpop.f32.mrb[0].mxu0
  %v2240 = vadd.f32 %v1170, %v2239
  %v2241 = vpop.f32.mrb[0].mxu0
  %2242 = vmatprep.mubr.f32.mxu0 0.0
  %2243 = vmatmul.mubr.f32.gmra.mrb[0].mxu0 %v1624
  %v2244 = vpop.f32.mrb[0].mxu0
  %v2245 = vadd.f32 %v1175, %v2244
  %v2246 = vpop.f32.mrb[0].mxu0
  %2247 = vmatprep.mubr.f32.mxu0 0.0
  %2248 = vmatmul.mubr.f32.gmra.mrb[0].mxu0 %v1627
  %v2249 = vpop.f32.mrb[0].mxu0
  %v2250 = vadd.f32 %v1180, %v2249
  %v2251 = vpop.f32.mrb[0].mxu0
  %2252 = vmatprep.mubr.f32.mxu0 0.0
  %2253 = vmatmul.mubr.f32.gmra.mrb[0].mxu0 %v1630
  %v2254 = vpop.f32.mrb[0].mxu0
  %v2255 = vadd.f32 %v1185, %v2254
  %v2256 = vpop.f32.mrb[0].mxu0
  %2257 = vmatprep.mubr.f32.mxu0 0.0
  %2258 = vmatmul.mubr.f32.gmra.mrb[0].mxu0 %v1633
  %v2259 = vpop.f32.mrb[0].mxu0
  %v2260 = vadd.f32 %v1190, %v2259
  %v2261 = vpop.f32.mrb[0].mxu0
  %2262 = vmatprep.mubr.f32.mxu0 0.0
  %2263 = vmatmul.mubr.f32.gmra.mrb[0].mxu0 %v1636
  %v2264 = vpop.f32.mrb[0].mxu0
  %v2265 = vadd.f32 %v1195, %v2264
  %v2266 = vpop.f32.mrb[0].mxu0
  %2267 = vmatprep.mubr.f32.mxu0 0.0
  %2268 = vmatmul.mubr.f32.gmra.mrb[0].mxu0 %v1639
  %v2269 = vpop.f32.mrb[0].mxu0
  %v2270 = vadd.f32 %v1200, %v2269
  %v2271 = vpop.f32.mrb[0].mxu0
  %2272 = vmatprep.mubr.f32.mxu0 0.0
  %2273 = vmatmul.mubr.f32.gmra.mrb[0].mxu0 %v1642
  %v2274 = vpop.f32.mrb[0].mxu0
  %v2275 = vadd.f32 %v1205, %v2274
  %v2276 = vpop.f32.mrb[0].mxu0
  %2277 = vmatprep.mubr.f32.mxu0 0.0
  %2278 = vmatmul.mubr.f32.gmra.mrb[0].mxu0 %v1645
  %v2279 = vpop.f32.mrb[0].mxu0
  %v2280 = vadd.f32 %v1210, %v2279
  %v2281 = vpop.f32.mrb[0].mxu0
  %2282 = vmatprep.mubr.f32.mxu0 0.0
  %2283 = vmatmul.mubr.f32.gmra.mrb[0].mxu0 %v1648
  %v2284 = vpop.f32.mrb[0].mxu0
  %v2285 = vadd.f32 %v1215, %v2284
  %v2286 = vpop.f32.mrb[0].mxu0
  %2287 = vmatprep.mubr.f32.mxu0 0.0
  %2288 = vmatmul.mubr.f32.gmra.mrb[0].mxu0 %v1651
  %v2289 = vpop.f32.mrb[0].mxu0
  %v2290 = vadd.f32 %v1220, %v2289
  %v2291 = vpop.f32.mrb[0].mxu0
  %2292 = vmatprep.mubr.f32.mxu0 0.0
  %2293 = vmatmul.mubr.f32.gmra.mrb[0].mxu0 %v1654
  %v2294 = vpop.f32.mrb[0].mxu0
  %v2295 = vadd.f32 %v1225, %v2294
  %v2296 = vpop.f32.mrb[0].mxu0
  %2297 = vmatprep.mubr.f32.mxu0 0.0
  %2298 = vmatmul.mubr.f32.gmra.mrb[0].mxu0 %v1657
  %v2299 = vpop.f32.mrb[0].mxu0
  %v2300 = vadd.f32 %v1230, %v2299
  %v2301 = vpop.f32.mrb[0].mxu0
  %2302 = vmatprep.mubr.f32.mxu0 0.0
  %2303 = vmatmul.mubr.f32.gmra.mrb[0].mxu0 %v1660
  %v2304 = vpop.f32.mrb[0].mxu0
  %v2305 = vadd.f32 %v1235, %v2304
  %v2306 = vpop.f32.mrb[0].mxu0
  %2307 = vmatprep.mubr.f32.mxu0 0.0
  %2308 = vmatmul.mubr.f32.gmra.mrb[0].mxu0 %v1663
  %v2309 = vpop.f32.mrb[0].mxu0
  %v2310 = vadd.f32 %v1240, %v2309
  %v2311 = vpop.f32.mrb[0].mxu0
  %2312 = vmatprep.mubr.f32.mxu0 0.0
  %2313 = vmatmul.mubr.f32.gmra.mrb[0].mxu0 %v1666
  %v2314 = vpop.f32.mrb[0].mxu0
  %v2315 = vadd.f32 %v1245, %v2314
  %v2316 = vpop.f32.mrb[0].mxu0
  %2317 = vmatprep.mubr.f32.mxu0 0.0
  %2318 = vmatmul.mubr.f32.gmra.mrb[0].mxu0 %v1669
  %v2319 = vpop.f32.mrb[0].mxu0
  %v2320 = vadd.f32 %v1250, %v2319
  %v2321 = vpop.f32.mrb[0].mxu0
  %2322 = vmatprep.mubr.f32.mxu0 0.0
  %2323 = vmatmul.mubr.f32.gmra.mrb[0].mxu0 %v1672
  %v2324 = vpop.f32.mrb[0].mxu0
  %v2325 = vadd.f32 %v1255, %v2324
  %v2326 = vpop.f32.mrb[0].mxu0
  %2327 = vmatprep.mubr.f32.mxu0 0.0
  %2328 = vmatmul.mubr.f32.gmra.mrb[0].mxu0 %v1675
  %v2329 = vpop.f32.mrb[0].mxu0
  %v2330 = vadd.f32 %v1260, %v2329
  %v2331 = vpop.f32.mrb[0].mxu0
  %2332 = vmatprep.mubr.f32.mxu0 0.0
  %2333 = vmatmul.mubr.f32.gmra.mrb[0].mxu0 %v1678
  %v2334 = vpop.f32.mrb[0].mxu0
  %v2335 = vadd.f32 %v1265, %v2334
  %v2336 = vpop.f32.mrb[0].mxu0
  %2337 = vmatprep.mubr.f32.mxu0 0.0
  %2338 = vmatmul.mubr.f32.gmra.mrb[0].mxu0 %v1681
  %v2339 = vpop.f32.mrb[0].mxu0
  %v2340 = vadd.f32 %v1270, %v2339
  %v2341 = vpop.f32.mrb[0].mxu0
  %2342 = vmatprep.mubr.f32.mxu0 0.0
  %2343 = vmatmul.mubr.f32.gmra.mrb[0].mxu0 %v1684
  %v2344 = vpop.f32.mrb[0].mxu0
  %v2345 = vadd.f32 %v1275, %v2344
  %v2346 = vpop.f32.mrb[0].mxu0
  %2347 = vmatprep.mubr.f32.mxu0 0.0
  %2348 = vmatmul.mubr.f32.gmra.mrb[0].mxu0 %v1687
  %v2349 = vpop.f32.mrb[0].mxu0
  %v2350 = vadd.f32 %v1280, %v2349
  %v2351 = vpop.f32.mrb[0].mxu0
  %2352 = vmatprep.mubr.f32.mxu0 0.0
  %2353 = vmatmul.mubr.f32.gmra.mrb[0].mxu0 %v1690
  %v2354 = vpop.f32.mrb[0].mxu0
  %v2355 = vadd.f32 %v1285, %v2354
  %v2356 = vpop.f32.mrb[0].mxu0
  %2357 = vmatprep.mubr.f32.mxu0 0.0
  %2358 = vmatmul.mubr.f32.gmra.mrb[0].mxu0 %v1693
  %v2359 = vpop.f32.mrb[0].mxu0
  %v2360 = vadd.f32 %v1290, %v2359
  %v2361 = vpop.f32.mrb[0].mxu0
  %2362 = vmatprep.mubr.f32.mxu0 0.0
  %2363 = vmatmul.mubr.f32.gmra.mrb[0].mxu0 %v1696
  %v2364 = vpop.f32.mrb[0].mxu0
  %v2365 = vadd.f32 %v1295, %v2364
  %v2366 = vpop.f32.mrb[0].mxu0
  %2367 = vmatprep.mubr.f32.mxu0 0.0
  %2368 = vmatmul.mubr.f32.gmra.mrb[0].mxu0 %v1699
  %v2369 = vpop.f32.mrb[0].mxu0
  %v2370 = vadd.f32 %v1300, %v2369
  %v2371 = vpop.f32.mrb[0].mxu0
  %2372 = vmatprep.mubr.f32.mxu0 0.0
  %2373 = vmatmul.mubr.f32.gmra.mrb[0].mxu0 %v1702
  %v2374 = vpop.f32.mrb[0].mxu0
  %v2375 = vadd.f32 %v1305, %v2374
  %v2376 = vpop.f32.mrb[0].mxu0
  %2377 = vmatprep.mubr.f32.mxu0 0.0
  %2378 = vmatmul.mubr.f32.gmra.mrb[0].mxu0 %v1705
  %v2379 = vpop.f32.mrb[0].mxu0
  %v2380 = vadd.f32 %v1310, %v2379
  %v2381 = vpop.f32.mrb[0].mxu0
  %2382 = vmatprep.mubr.f32.mxu0 0.0
  %2383 = vmatmul.mubr.f32.gmra.mrb[0].mxu0 %v1708
  %v2384 = vpop.f32.mrb[0].mxu0
  %v2385 = vadd.f32 %v1315, %v2384
  %v2386 = vpop.f32.mrb[0].mxu0
  %2387 = vmatprep.mubr.f32.mxu0 0.0
  %2388 = vmatmul.mubr.f32.gmra.mrb[0].mxu0 %v1711
  %v2389 = vpop.f32.mrb[0].mxu0
  %v2390 = vadd.f32 %v1320, %v2389
  %v2391 = vpop.f32.mrb[0].mxu0
  %2392 = vmatprep.mubr.f32.mxu0 0.0
  %2393 = vmatmul.mubr.f32.gmra.mrb[0].mxu0 %v1714
  %v2394 = vpop.f32.mrb[0].mxu0
  %v2395 = vadd.f32 %v1325, %v2394
  %v2396 = vpop.f32.mrb[0].mxu0
  %2397 = vmatprep.mubr.f32.mxu0 0.0
  %2398 = vmatmul.mubr.f32.gmra.mrb[0].mxu0 %v1717
  %v2399 = vpop.f32.mrb[0].mxu0
  %v2400 = vadd.f32 %v1330, %v2399
  %v2401 = vpop.f32.mrb[0].mxu0
  %2402 = vmatprep.mubr.f32.mxu0 0.0
  %2403 = vmatmul.mubr.f32.gmra.mrb[0].mxu0 %v1720
  %v2404 = vpop.f32.mrb[0].mxu0
  %v2405 = vadd.f32 %v1335, %v2404
  %v2406 = vpop.f32.mrb[0].mxu0
  %2407 = vmatprep.mubr.f32.mxu0 0.0
  %2408 = vmatmul.mubr.f32.gmra.mrb[0].mxu0 %v1723
  %v2409 = vpop.f32.mrb[0].mxu0
  %v2410 = vadd.f32 %v1340, %v2409
  %v2411 = vpop.f32.mrb[0].mxu0
  %2412 = vmatprep.mubr.f32.mxu0 0.0
  %2413 = vmatmul.mubr.f32.gmra.mrb[0].mxu0 %v1726
  %v2414 = vpop.f32.mrb[0].mxu0
  %v2415 = vadd.f32 %v1345, %v2414
  %v2416 = vpop.f32.mrb[0].mxu0
  %2417 = vmatprep.mubr.f32.mxu0 0.0
  %2418 = vmatmul.mubr.f32.gmra.mrb[0].mxu0 %v1729
  %v2419 = vpop.f32.mrb[0].mxu0
  %v2420 = vadd.f32 %v1350, %v2419
  %v2421 = vpop.f32.mrb[0].mxu0
  %2422 = vmatprep.mubr.f32.mxu0 0.0
  %2423 = vmatmul.mubr.f32.gmra.mrb[0].mxu0 %v1732
  %v2424 = vpop.f32.mrb[0].mxu0
  %v2425 = vadd.f32 %v1355, %v2424
  %v2426 = vpop.f32.mrb[0].mxu0
  %2427 = vdwg.mxu0
  %v2428 = vld [vmem:[%s2] sm:$0xff]
  %v2429 = vld [vmem:[%s2 + $0x8] sm:$0xff]
  %v2430 = vld [vmem:[%s2 + $0x10] sm:$0xff]
  %v2431 = vld [vmem:[%s2 + $0x18] sm:$0xff]
  %v2432 = vld [vmem:[%s2 + $0x20] sm:$0xff]
  %v2433 = vld [vmem:[%s2 + $0x28] sm:$0xff]
  %v2434 = vld [vmem:[%s2 + $0x30] sm:$0xff]
  %v2435 = vld [vmem:[%s2 + $0x38] sm:$0xff]
  %v2436 = vld [vmem:[%s2 + $0x40] sm:$0xff]
  %v2437 = vld [vmem:[%s2 + $0x48] sm:$0xff]
  %v2438 = vld [vmem:[%s2 + $0x50] sm:$0xff]
  %v2439 = vld [vmem:[%s2 + $0x58] sm:$0xff]
  %v2440 = vld [vmem:[%s2 + $0x60] sm:$0xff]
  %v2441 = vld [vmem:[%s2 + $0x68] sm:$0xff]
  %v2442 = vld [vmem:[%s2 + $0x70] sm:$0xff]
  %v2443 = vld [vmem:[%s2 + $0x78] sm:$0xff]
  %v2444 = vld [vmem:[%s2 + $0x80] sm:$0xff]
  %v2445 = vld [vmem:[%s2 + $0x88] sm:$0xff]
  %v2446 = vld [vmem:[%s2 + $0x90] sm:$0xff]
  %v2447 = vld [vmem:[%s2 + $0x98] sm:$0xff]
  %v2448 = vld [vmem:[%s2 + $0xa0] sm:$0xff]
  %v2449 = vld [vmem:[%s2 + $0xa8] sm:$0xff]
  %v2450 = vld [vmem:[%s2 + $0xb0] sm:$0xff]
  %v2451 = vld [vmem:[%s2 + $0xb8] sm:$0xff]
  %v2452 = vld [vmem:[%s2 + $0xc0] sm:$0xff]
  %v2453 = vld [vmem:[%s2 + $0xc8] sm:$0xff]
  %v2454 = vld [vmem:[%s2 + $0xd0] sm:$0xff]
  %v2455 = vld [vmem:[%s2 + $0xd8] sm:$0xff]
  %v2456 = vld [vmem:[%s2 + $0xe0] sm:$0xff]
  %v2457 = vld [vmem:[%s2 + $0xe8] sm:$0xff]
  %v2458 = vld [vmem:[%s2 + $0xf0] sm:$0xff]
  %v2459 = vld [vmem:[%s2 + $0xf8] sm:$0xff]
  %v2460 = vld [vmem:[%s2 + $0x100] sm:$0xff]
  %v2461 = vld [vmem:[%s2 + $0x108] sm:$0xff]
  %v2462 = vld [vmem:[%s2 + $0x110] sm:$0xff]
  %v2463 = vld [vmem:[%s2 + $0x118] sm:$0xff]
  %v2464 = vld [vmem:[%s2 + $0x120] sm:$0xff]
  %v2465 = vld [vmem:[%s2 + $0x128] sm:$0xff]
  %v2466 = vld [vmem:[%s2 + $0x130] sm:$0xff]
  %v2467 = vld [vmem:[%s2 + $0x138] sm:$0xff]
  %v2468 = vld [vmem:[%s2 + $0x140] sm:$0xff]
  %v2469 = vld [vmem:[%s2 + $0x148] sm:$0xff]
  %v2470 = vld [vmem:[%s2 + $0x150] sm:$0xff]
  %v2471 = vld [vmem:[%s2 + $0x158] sm:$0xff]
  %v2472 = vld [vmem:[%s2 + $0x160] sm:$0xff]
  %v2473 = vld [vmem:[%s2 + $0x168] sm:$0xff]
  %v2474 = vld [vmem:[%s2 + $0x170] sm:$0xff]
  %v2475 = vld [vmem:[%s2 + $0x178] sm:$0xff]
  %v2476 = vld [vmem:[%s2 + $0x180] sm:$0xff]
  %v2477 = vld [vmem:[%s2 + $0x188] sm:$0xff]
  %v2478 = vld [vmem:[%s2 + $0x190] sm:$0xff]
  %v2479 = vld [vmem:[%s2 + $0x198] sm:$0xff]
  %v2480 = vld [vmem:[%s2 + $0x1a0] sm:$0xff]
  %v2481 = vld [vmem:[%s2 + $0x1a8] sm:$0xff]
  %v2482 = vld [vmem:[%s2 + $0x1b0] sm:$0xff]
  %v2483 = vld [vmem:[%s2 + $0x1b8] sm:$0xff]
  %v2484 = vld [vmem:[%s2 + $0x1c0] sm:$0xff]
  %v2485 = vld [vmem:[%s2 + $0x1c8] sm:$0xff]
  %v2486 = vld [vmem:[%s2 + $0x1d0] sm:$0xff]
  %v2487 = vld [vmem:[%s2 + $0x1d8] sm:$0xff]
  %v2488 = vld [vmem:[%s2 + $0x1e0] sm:$0xff]
  %v2489 = vld [vmem:[%s2 + $0x1e8] sm:$0xff]
  %v2490 = vld [vmem:[%s2 + $0x1f0] sm:$0xff]
  %v2491 = vld [vmem:[%s2 + $0x1f8] sm:$0xff]
  %v2492 = vld [vmem:[%s2 + $0x200] sm:$0xff]
  %v2493 = vld [vmem:[%s2 + $0x208] sm:$0xff]
  %v2494 = vld [vmem:[%s2 + $0x210] sm:$0xff]
  %v2495 = vld [vmem:[%s2 + $0x218] sm:$0xff]
  %v2496 = vld [vmem:[%s2 + $0x220] sm:$0xff]
  %v2497 = vld [vmem:[%s2 + $0x228] sm:$0xff]
  %v2498 = vld [vmem:[%s2 + $0x230] sm:$0xff]
  %v2499 = vld [vmem:[%s2 + $0x238] sm:$0xff]
  %v2500 = vld [vmem:[%s2 + $0x240] sm:$0xff]
  %v2501 = vld [vmem:[%s2 + $0x248] sm:$0xff]
  %v2502 = vld [vmem:[%s2 + $0x250] sm:$0xff]
  %v2503 = vld [vmem:[%s2 + $0x258] sm:$0xff]
  %v2504 = vld [vmem:[%s2 + $0x260] sm:$0xff]
  %v2505 = vld [vmem:[%s2 + $0x268] sm:$0xff]
  %v2506 = vld [vmem:[%s2 + $0x270] sm:$0xff]
  %v2507 = vld [vmem:[%s2 + $0x278] sm:$0xff]
  %v2508 = vld [vmem:[%s2 + $0x280] sm:$0xff]
  %v2509 = vld [vmem:[%s2 + $0x288] sm:$0xff]
  %v2510 = vld [vmem:[%s2 + $0x290] sm:$0xff]
  %v2511 = vld [vmem:[%s2 + $0x298] sm:$0xff]
  %v2512 = vld [vmem:[%s2 + $0x2a0] sm:$0xff]
  %v2513 = vld [vmem:[%s2 + $0x2a8] sm:$0xff]
  %v2514 = vld [vmem:[%s2 + $0x2b0] sm:$0xff]
  %v2515 = vld [vmem:[%s2 + $0x2b8] sm:$0xff]
  %v2516 = vld [vmem:[%s2 + $0x2c0] sm:$0xff]
  %v2517 = vld [vmem:[%s2 + $0x2c8] sm:$0xff]
  %v2518 = vld [vmem:[%s2 + $0x2d0] sm:$0xff]
  %v2519 = vld [vmem:[%s2 + $0x2d8] sm:$0xff]
  %v2520 = vld [vmem:[%s2 + $0x2e0] sm:$0xff]
  %v2521 = vld [vmem:[%s2 + $0x2e8] sm:$0xff]
  %v2522 = vld [vmem:[%s2 + $0x2f0] sm:$0xff]
  %v2523 = vld [vmem:[%s2 + $0x2f8] sm:$0xff]
  %v2524 = vld [vmem:[%s2 + $0x300] sm:$0xff]
  %v2525 = vld [vmem:[%s2 + $0x308] sm:$0xff]
  %v2526 = vld [vmem:[%s2 + $0x310] sm:$0xff]
  %v2527 = vld [vmem:[%s2 + $0x318] sm:$0xff]
  %v2528 = vld [vmem:[%s2 + $0x320] sm:$0xff]
  %v2529 = vld [vmem:[%s2 + $0x328] sm:$0xff]
  %v2530 = vld [vmem:[%s2 + $0x330] sm:$0xff]
  %v2531 = vld [vmem:[%s2 + $0x338] sm:$0xff]
  %v2532 = vld [vmem:[%s2 + $0x340] sm:$0xff]
  %v2533 = vld [vmem:[%s2 + $0x348] sm:$0xff]
  %v2534 = vld [vmem:[%s2 + $0x350] sm:$0xff]
  %v2535 = vld [vmem:[%s2 + $0x358] sm:$0xff]
  %v2536 = vld [vmem:[%s2 + $0x360] sm:$0xff]
  %v2537 = vld [vmem:[%s2 + $0x368] sm:$0xff]
  %v2538 = vld [vmem:[%s2 + $0x370] sm:$0xff]
  %v2539 = vld [vmem:[%s2 + $0x378] sm:$0xff]
  %v2540 = vld [vmem:[%s2 + $0x380] sm:$0xff]
  %v2541 = vld [vmem:[%s2 + $0x388] sm:$0xff]
  %v2542 = vld [vmem:[%s2 + $0x390] sm:$0xff]
  %v2543 = vld [vmem:[%s2 + $0x398] sm:$0xff]
  %v2544 = vld [vmem:[%s2 + $0x3a0] sm:$0xff]
  %v2545 = vld [vmem:[%s2 + $0x3a8] sm:$0xff]
  %v2546 = vld [vmem:[%s2 + $0x3b0] sm:$0xff]
  %v2547 = vld [vmem:[%s2 + $0x3b8] sm:$0xff]
  %v2548 = vld [vmem:[%s2 + $0x3c0] sm:$0xff]
  %v2549 = vld [vmem:[%s2 + $0x3c8] sm:$0xff]
  %v2550 = vld [vmem:[%s2 + $0x3d0] sm:$0xff]
  %v2551 = vld [vmem:[%s2 + $0x3d8] sm:$0xff]
  %v2552 = vld [vmem:[%s2 + $0x3e0] sm:$0xff]
  %v2553 = vld [vmem:[%s5] sm:$0xff]
  %v2554 = vld [vmem:[%s5 + $0x8] sm:$0xff]
  %vm2555 = vcmask 130048
  %v2557 = vsel %vm2555, %v2428, 0
  %v2560 = vsel %vm2555, %v2429, 0
  %v2563 = vsel %vm2555, %v2430, 0
  %v2566 = vsel %vm2555, %v2431, 0
  %v2569 = vsel %vm2555, %v2432, 0
  %v2572 = vsel %vm2555, %v2433, 0
  %v2575 = vsel %vm2555, %v2434, 0
  %v2578 = vsel %vm2555, %v2435, 0
  %v2581 = vsel %vm2555, %v2436, 0
  %v2584 = vsel %vm2555, %v2437, 0
  %v2587 = vsel %vm2555, %v2438, 0
  %v2590 = vsel %vm2555, %v2439, 0
  %v2593 = vsel %vm2555, %v2440, 0
  %v2596 = vsel %vm2555, %v2441, 0
  %v2599 = vsel %vm2555, %v2442, 0
  %v2602 = vsel %vm2555, %v2443, 0
  %v2605 = vsel %vm2555, %v2444, 0
  %v2608 = vsel %vm2555, %v2445, 0
  %v2611 = vsel %vm2555, %v2446, 0
  %v2614 = vsel %vm2555, %v2447, 0
  %v2617 = vsel %vm2555, %v2448, 0
  %v2620 = vsel %vm2555, %v2449, 0
  %v2623 = vsel %vm2555, %v2450, 0
  %v2626 = vsel %vm2555, %v2451, 0
  %v2629 = vsel %vm2555, %v2452, 0
  %v2632 = vsel %vm2555, %v2453, 0
  %v2635 = vsel %vm2555, %v2454, 0
  %v2638 = vsel %vm2555, %v2455, 0
  %v2641 = vsel %vm2555, %v2456, 0
  %v2644 = vsel %vm2555, %v2457, 0
  %v2647 = vsel %vm2555, %v2458, 0
  %v2650 = vsel %vm2555, %v2459, 0
  %v2653 = vsel %vm2555, %v2460, 0
  %v2656 = vsel %vm2555, %v2461, 0
  %v2659 = vsel %vm2555, %v2462, 0
  %v2662 = vsel %vm2555, %v2463, 0
  %v2665 = vsel %vm2555, %v2464, 0
  %v2668 = vsel %vm2555, %v2465, 0
  %v2671 = vsel %vm2555, %v2466, 0
  %v2674 = vsel %vm2555, %v2467, 0
  %v2677 = vsel %vm2555, %v2468, 0
  %v2680 = vsel %vm2555, %v2469, 0
  %v2683 = vsel %vm2555, %v2470, 0
  %v2686 = vsel %vm2555, %v2471, 0
  %v2689 = vsel %vm2555, %v2472, 0
  %v2692 = vsel %vm2555, %v2473, 0
  %v2695 = vsel %vm2555, %v2474, 0
  %v2698 = vsel %vm2555, %v2475, 0
  %v2701 = vsel %vm2555, %v2476, 0
  %v2704 = vsel %vm2555, %v2477, 0
  %v2707 = vsel %vm2555, %v2478, 0
  %v2710 = vsel %vm2555, %v2479, 0
  %v2713 = vsel %vm2555, %v2480, 0
  %v2716 = vsel %vm2555, %v2481, 0
  %v2719 = vsel %vm2555, %v2482, 0
  %v2722 = vsel %vm2555, %v2483, 0
  %v2725 = vsel %vm2555, %v2484, 0
  %v2728 = vsel %vm2555, %v2485, 0
  %v2731 = vsel %vm2555, %v2486, 0
  %v2734 = vsel %vm2555, %v2487, 0
  %v2737 = vsel %vm2555, %v2488, 0
  %v2740 = vsel %vm2555, %v2489, 0
  %v2743 = vsel %vm2555, %v2490, 0
  %v2746 = vsel %vm2555, %v2491, 0
  %v2749 = vsel %vm2555, %v2492, 0
  %v2752 = vsel %vm2555, %v2493, 0
  %v2755 = vsel %vm2555, %v2494, 0
  %v2758 = vsel %vm2555, %v2495, 0
  %v2761 = vsel %vm2555, %v2496, 0
  %v2764 = vsel %vm2555, %v2497, 0
  %v2767 = vsel %vm2555, %v2498, 0
  %v2770 = vsel %vm2555, %v2499, 0
  %v2773 = vsel %vm2555, %v2500, 0
  %v2776 = vsel %vm2555, %v2501, 0
  %v2779 = vsel %vm2555, %v2502, 0
  %v2782 = vsel %vm2555, %v2503, 0
  %v2785 = vsel %vm2555, %v2504, 0
  %v2788 = vsel %vm2555, %v2505, 0
  %v2791 = vsel %vm2555, %v2506, 0
  %v2794 = vsel %vm2555, %v2507, 0
  %v2797 = vsel %vm2555, %v2508, 0
  %v2800 = vsel %vm2555, %v2509, 0
  %v2803 = vsel %vm2555, %v2510, 0
  %v2806 = vsel %vm2555, %v2511, 0
  %v2809 = vsel %vm2555, %v2512, 0
  %v2812 = vsel %vm2555, %v2513, 0
  %v2815 = vsel %vm2555, %v2514, 0
  %v2818 = vsel %vm2555, %v2515, 0
  %v2821 = vsel %vm2555, %v2516, 0
  %v2824 = vsel %vm2555, %v2517, 0
  %v2827 = vsel %vm2555, %v2518, 0
  %v2830 = vsel %vm2555, %v2519, 0
  %v2833 = vsel %vm2555, %v2520, 0
  %v2836 = vsel %vm2555, %v2521, 0
  %v2839 = vsel %vm2555, %v2522, 0
  %v2842 = vsel %vm2555, %v2523, 0
  %v2845 = vsel %vm2555, %v2524, 0
  %v2848 = vsel %vm2555, %v2525, 0
  %v2851 = vsel %vm2555, %v2526, 0
  %v2854 = vsel %vm2555, %v2527, 0
  %v2857 = vsel %vm2555, %v2528, 0
  %v2860 = vsel %vm2555, %v2529, 0
  %v2863 = vsel %vm2555, %v2530, 0
  %v2866 = vsel %vm2555, %v2531, 0
  %v2869 = vsel %vm2555, %v2532, 0
  %v2872 = vsel %vm2555, %v2533, 0
  %v2875 = vsel %vm2555, %v2534, 0
  %v2878 = vsel %vm2555, %v2535, 0
  %v2881 = vsel %vm2555, %v2536, 0
  %v2884 = vsel %vm2555, %v2537, 0
  %v2887 = vsel %vm2555, %v2538, 0
  %v2890 = vsel %vm2555, %v2539, 0
  %v2893 = vsel %vm2555, %v2540, 0
  %v2896 = vsel %vm2555, %v2541, 0
  %v2899 = vsel %vm2555, %v2542, 0
  %v2902 = vsel %vm2555, %v2543, 0
  %v2905 = vsel %vm2555, %v2544, 0
  %v2908 = vsel %vm2555, %v2545, 0
  %v2911 = vsel %vm2555, %v2546, 0
  %v2914 = vsel %vm2555, %v2547, 0
  %v2917 = vsel %vm2555, %v2548, 0
  %v2920 = vsel %vm2555, %v2549, 0
  %v2923 = vsel %vm2555, %v2550, 0
  %v2926 = vsel %vm2555, %v2551, 0
  %v2929 = vsel %vm2555, %v2552, 0
  %2931 = vmatprep.subr.mxu0 0.0
  %2932 = vmatpush1.msra.mxu0 %v2553
  %2933 = vmatprep.subr.mxu0 0.0
  %2934 = vmatpush1.msra.mxu0 %v2554
  %2935 = vmatprep.subr.mxu0 0.0
  %2936 = vmatpush1.msra.mxu0 0.0
  %2937 = vmatprep.subr.mxu0 0.0
  %2938 = vmatpush1.msra.mxu0 0.0
  %2939 = vmatprep.subr.mxu0 0.0
  %2940 = vmatpush1.msra.mxu0 0.0
  %2941 = vmatprep.subr.mxu0 0.0
  %2942 = vmatpush1.msra.mxu0 0.0
  %2943 = vmatprep.subr.mxu0 0.0
  %2944 = vmatpush1.msra.mxu0 0.0
  %2945 = vmatprep.subr.mxu0 0.0
  %2946 = vmatpush1.msra.mxu0 0.0
  %2947 = vmatprep.subr.mxu0 0.0
  %2948 = vmatpush1.msra.mxu0 0.0
  %2949 = vmatprep.subr.mxu0 0.0
  %2950 = vmatpush1.msra.mxu0 0.0
  %2951 = vmatprep.subr.mxu0 0.0
  %2952 = vmatpush1.msra.mxu0 0.0
  %2953 = vmatprep.subr.mxu0 0.0
  %2954 = vmatpush1.msra.mxu0 0.0
  %2955 = vmatprep.subr.mxu0 0.0
  %2956 = vmatpush1.msra.mxu0 0.0
  %2957 = vmatprep.subr.mxu0 0.0
  %2958 = vmatpush1.msra.mxu0 0.0
  %2959 = vmatprep.subr.mxu0 0.0
  %2960 = vmatpush1.msra.mxu0 0.0
  %2961 = vmatprep.subr.mxu0 0.0
  %2962 = vmatpush1.msra.mxu0 0.0
  %2963 = vmatprep.subr.mxu0 0.0
  %2964 = vmatpush1.msra.mxu0 0.0
  %2965 = vmatprep.subr.mxu0 0.0
  %2966 = vmatpush1.msra.mxu0 0.0
  %2967 = vmatprep.subr.mxu0 0.0
  %2968 = vmatpush1.msra.mxu0 0.0
  %2969 = vmatprep.subr.mxu0 0.0
  %2970 = vmatpush1.msra.mxu0 0.0
  %2971 = vmatprep.subr.mxu0 0.0
  %2972 = vmatpush1.msra.mxu0 0.0
  %2973 = vmatprep.subr.mxu0 0.0
  %2974 = vmatpush1.msra.mxu0 0.0
  %2975 = vmatprep.subr.mxu0 0.0
  %2976 = vmatpush1.msra.mxu0 0.0
  %2977 = vmatprep.subr.mxu0 0.0
  %2978 = vmatpush1.msra.mxu0 0.0
  %2979 = vmatprep.subr.mxu0 0.0
  %2980 = vmatpush1.msra.mxu0 0.0
  %2981 = vmatprep.subr.mxu0 0.0
  %2982 = vmatpush1.msra.mxu0 0.0
  %2983 = vmatprep.subr.mxu0 0.0
  %2984 = vmatpush1.msra.mxu0 0.0
  %2985 = vmatprep.subr.mxu0 0.0
  %2986 = vmatpush1.msra.mxu0 0.0
  %2987 = vmatprep.subr.mxu0 0.0
  %2988 = vmatpush1.msra.mxu0 0.0
  %2989 = vmatprep.subr.mxu0 0.0
  %2990 = vmatpush1.msra.mxu0 0.0
  %2991 = vmatprep.subr.mxu0 0.0
  %2992 = vmatpush1.msra.mxu0 0.0
  %2993 = vmatprep.subr.mxu0 0.0
  %2994 = vmatpush1.msra.mxu0 0.0
  %2995 = vmatprep.mubr.f32.mxu0 0.0
  %2996 = vmatmul.mubr.f32.gmra.mrb[0].mxu0 %v2557
  %v2997 = vpop.f32.mrb[0].mxu0
  %v2998 = vadd.f32 0.0, %v2997
  %v2999 = vpop.f32.mrb[0].mxu0
  %3000 = vmatprep.mubr.f32.mxu0 0.0
  %3001 = vmatmul.mubr.f32.gmra.mrb[0].mxu0 %v2560
  %v3002 = vpop.f32.mrb[0].mxu0
  %v3003 = vadd.f32 0.0, %v3002
  %v3004 = vpop.f32.mrb[0].mxu0
  %3005 = vmatprep.mubr.f32.mxu0 0.0
  %3006 = vmatmul.mubr.f32.gmra.mrb[0].mxu0 %v2563
  %v3007 = vpop.f32.mrb[0].mxu0
  %v3008 = vadd.f32 0.0, %v3007
  %v3009 = vpop.f32.mrb[0].mxu0
  %3010 = vmatprep.mubr.f32.mxu0 0.0
  %3011 = vmatmul.mubr.f32.gmra.mrb[0].mxu0 %v2566
  %v3012 = vpop.f32.mrb[0].mxu0
  %v3013 = vadd.f32 0.0, %v3012
  %v3014 = vpop.f32.mrb[0].mxu0
  %3015 = vmatprep.mubr.f32.mxu0 0.0
  %3016 = vmatmul.mubr.f32.gmra.mrb[0].mxu0 %v2569
  %v3017 = vpop.f32.mrb[0].mxu0
  %v3018 = vadd.f32 0.0, %v3017
  %v3019 = vpop.f32.mrb[0].mxu0
  %3020 = vmatprep.mubr.f32.mxu0 0.0
  %3021 = vmatmul.mubr.f32.gmra.mrb[0].mxu0 %v2572
  %v3022 = vpop.f32.mrb[0].mxu0
  %v3023 = vadd.f32 0.0, %v3022
  %v3024 = vpop.f32.mrb[0].mxu0
  %3025 = vmatprep.mubr.f32.mxu0 0.0
  %3026 = vmatmul.mubr.f32.gmra.mrb[0].mxu0 %v2575
  %v3027 = vpop.f32.mrb[0].mxu0
  %v3028 = vadd.f32 0.0, %v3027
  %v3029 = vpop.f32.mrb[0].mxu0
  %3030 = vmatprep.mubr.f32.mxu0 0.0
  %3031 = vmatmul.mubr.f32.gmra.mrb[0].mxu0 %v2578
  %v3032 = vpop.f32.mrb[0].mxu0
  %v3033 = vadd.f32 0.0, %v3032
  %v3034 = vpop.f32.mrb[0].mxu0
  %3035 = vmatprep.mubr.f32.mxu0 0.0
  %3036 = vmatmul.mubr.f32.gmra.mrb[0].mxu0 %v2581
  %v3037 = vpop.f32.mrb[0].mxu0
  %v3038 = vadd.f32 0.0, %v3037
  %v3039 = vpop.f32.mrb[0].mxu0
  %3040 = vmatprep.mubr.f32.mxu0 0.0
  %3041 = vmatmul.mubr.f32.gmra.mrb[0].mxu0 %v2584
  %v3042 = vpop.f32.mrb[0].mxu0
  %v3043 = vadd.f32 0.0, %v3042
  %v3044 = vpop.f32.mrb[0].mxu0
  %3045 = vmatprep.mubr.f32.mxu0 0.0
  %3046 = vmatmul.mubr.f32.gmra.mrb[0].mxu0 %v2587
  %v3047 = vpop.f32.mrb[0].mxu0
  %v3048 = vadd.f32 0.0, %v3047
  %v3049 = vpop.f32.mrb[0].mxu0
  %3050 = vmatprep.mubr.f32.mxu0 0.0
  %3051 = vmatmul.mubr.f32.gmra.mrb[0].mxu0 %v2590
  %v3052 = vpop.f32.mrb[0].mxu0
  %v3053 = vadd.f32 0.0, %v3052
  %v3054 = vpop.f32.mrb[0].mxu0
  %3055 = vmatprep.mubr.f32.mxu0 0.0
  %3056 = vmatmul.mubr.f32.gmra.mrb[0].mxu0 %v2593
  %v3057 = vpop.f32.mrb[0].mxu0
  %v3058 = vadd.f32 0.0, %v3057
  %v3059 = vpop.f32.mrb[0].mxu0
  %3060 = vmatprep.mubr.f32.mxu0 0.0
  %3061 = vmatmul.mubr.f32.gmra.mrb[0].mxu0 %v2596
  %v3062 = vpop.f32.mrb[0].mxu0
  %v3063 = vadd.f32 0.0, %v3062
  %v3064 = vpop.f32.mrb[0].mxu0
  %3065 = vmatprep.mubr.f32.mxu0 0.0
  %3066 = vmatmul.mubr.f32.gmra.mrb[0].mxu0 %v2599
  %v3067 = vpop.f32.mrb[0].mxu0
  %v3068 = vadd.f32 0.0, %v3067
  %v3069 = vpop.f32.mrb[0].mxu0
  %3070 = vmatprep.mubr.f32.mxu0 0.0
  %3071 = vmatmul.mubr.f32.gmra.mrb[0].mxu0 %v2602
  %v3072 = vpop.f32.mrb[0].mxu0
  %v3073 = vadd.f32 0.0, %v3072
  %v3074 = vpop.f32.mrb[0].mxu0
  %3075 = vmatprep.mubr.f32.mxu0 0.0
  %3076 = vmatmul.mubr.f32.gmra.mrb[0].mxu0 %v2605
  %v3077 = vpop.f32.mrb[0].mxu0
  %v3078 = vadd.f32 0.0, %v3077
  %v3079 = vpop.f32.mrb[0].mxu0
  %3080 = vmatprep.mubr.f32.mxu0 0.0
  %3081 = vmatmul.mubr.f32.gmra.mrb[0].mxu0 %v2608
  %v3082 = vpop.f32.mrb[0].mxu0
  %v3083 = vadd.f32 0.0, %v3082
  %v3084 = vpop.f32.mrb[0].mxu0
  %3085 = vmatprep.mubr.f32.mxu0 0.0
  %3086 = vmatmul.mubr.f32.gmra.mrb[0].mxu0 %v2611
  %v3087 = vpop.f32.mrb[0].mxu0
  %v3088 = vadd.f32 0.0, %v3087
  %v3089 = vpop.f32.mrb[0].mxu0
  %3090 = vmatprep.mubr.f32.mxu0 0.0
  %3091 = vmatmul.mubr.f32.gmra.mrb[0].mxu0 %v2614
  %v3092 = vpop.f32.mrb[0].mxu0
  %v3093 = vadd.f32 0.0, %v3092
  %v3094 = vpop.f32.mrb[0].mxu0
  %3095 = vmatprep.mubr.f32.mxu0 0.0
  %3096 = vmatmul.mubr.f32.gmra.mrb[0].mxu0 %v2617
  %v3097 = vpop.f32.mrb[0].mxu0
  %v3098 = vadd.f32 0.0, %v3097
  %v3099 = vpop.f32.mrb[0].mxu0
  %3100 = vmatprep.mubr.f32.mxu0 0.0
  %3101 = vmatmul.mubr.f32.gmra.mrb[0].mxu0 %v2620
  %v3102 = vpop.f32.mrb[0].mxu0
  %v3103 = vadd.f32 0.0, %v3102
  %v3104 = vpop.f32.mrb[0].mxu0
  %3105 = vmatprep.mubr.f32.mxu0 0.0
  %3106 = vmatmul.mubr.f32.gmra.mrb[0].mxu0 %v2623
  %v3107 = vpop.f32.mrb[0].mxu0
  %v3108 = vadd.f32 0.0, %v3107
  %v3109 = vpop.f32.mrb[0].mxu0
  %3110 = vmatprep.mubr.f32.mxu0 0.0
  %3111 = vmatmul.mubr.f32.gmra.mrb[0].mxu0 %v2626
  %v3112 = vpop.f32.mrb[0].mxu0
  %v3113 = vadd.f32 0.0, %v3112
  %v3114 = vpop.f32.mrb[0].mxu0
  %3115 = vmatprep.mubr.f32.mxu0 0.0
  %3116 = vmatmul.mubr.f32.gmra.mrb[0].mxu0 %v2629
  %v3117 = vpop.f32.mrb[0].mxu0
  %v3118 = vadd.f32 0.0, %v3117
  %v3119 = vpop.f32.mrb[0].mxu0
  %3120 = vmatprep.mubr.f32.mxu0 0.0
  %3121 = vmatmul.mubr.f32.gmra.mrb[0].mxu0 %v2632
  %v3122 = vpop.f32.mrb[0].mxu0
  %v3123 = vadd.f32 0.0, %v3122
  %v3124 = vpop.f32.mrb[0].mxu0
  %3125 = vmatprep.mubr.f32.mxu0 0.0
  %3126 = vmatmul.mubr.f32.gmra.mrb[0].mxu0 %v2635
  %v3127 = vpop.f32.mrb[0].mxu0
  %v3128 = vadd.f32 0.0, %v3127
  %v3129 = vpop.f32.mrb[0].mxu0
  %3130 = vmatprep.mubr.f32.mxu0 0.0
  %3131 = vmatmul.mubr.f32.gmra.mrb[0].mxu0 %v2638
  %v3132 = vpop.f32.mrb[0].mxu0
  %v3133 = vadd.f32 0.0, %v3132
  %v3134 = vpop.f32.mrb[0].mxu0
  %3135 = vmatprep.mubr.f32.mxu0 0.0
  %3136 = vmatmul.mubr.f32.gmra.mrb[0].mxu0 %v2641
  %v3137 = vpop.f32.mrb[0].mxu0
  %v3138 = vadd.f32 0.0, %v3137
  %v3139 = vpop.f32.mrb[0].mxu0
  %3140 = vmatprep.mubr.f32.mxu0 0.0
  %3141 = vmatmul.mubr.f32.gmra.mrb[0].mxu0 %v2644
  %v3142 = vpop.f32.mrb[0].mxu0
  %v3143 = vadd.f32 0.0, %v3142
  %v3144 = vpop.f32.mrb[0].mxu0
  %3145 = vmatprep.mubr.f32.mxu0 0.0
  %3146 = vmatmul.mubr.f32.gmra.mrb[0].mxu0 %v2647
  %v3147 = vpop.f32.mrb[0].mxu0
  %v3148 = vadd.f32 0.0, %v3147
  %v3149 = vpop.f32.mrb[0].mxu0
  %3150 = vmatprep.mubr.f32.mxu0 0.0
  %3151 = vmatmul.mubr.f32.gmra.mrb[0].mxu0 %v2650
  %v3152 = vpop.f32.mrb[0].mxu0
  %v3153 = vadd.f32 0.0, %v3152
  %v3154 = vpop.f32.mrb[0].mxu0
  %3155 = vmatprep.mubr.f32.mxu0 0.0
  %3156 = vmatmul.mubr.f32.gmra.mrb[0].mxu0 %v2653
  %v3157 = vpop.f32.mrb[0].mxu0
  %v3158 = vadd.f32 0.0, %v3157
  %v3159 = vpop.f32.mrb[0].mxu0
  %3160 = vmatprep.mubr.f32.mxu0 0.0
  %3161 = vmatmul.mubr.f32.gmra.mrb[0].mxu0 %v2656
  %v3162 = vpop.f32.mrb[0].mxu0
  %v3163 = vadd.f32 0.0, %v3162
  %v3164 = vpop.f32.mrb[0].mxu0
  %3165 = vmatprep.mubr.f32.mxu0 0.0
  %3166 = vmatmul.mubr.f32.gmra.mrb[0].mxu0 %v2659
  %v3167 = vpop.f32.mrb[0].mxu0
  %v3168 = vadd.f32 0.0, %v3167
  %v3169 = vpop.f32.mrb[0].mxu0
  %3170 = vmatprep.mubr.f32.mxu0 0.0
  %3171 = vmatmul.mubr.f32.gmra.mrb[0].mxu0 %v2662
  %v3172 = vpop.f32.mrb[0].mxu0
  %v3173 = vadd.f32 0.0, %v3172
  %v3174 = vpop.f32.mrb[0].mxu0
  %3175 = vmatprep.mubr.f32.mxu0 0.0
  %3176 = vmatmul.mubr.f32.gmra.mrb[0].mxu0 %v2665
  %v3177 = vpop.f32.mrb[0].mxu0
  %v3178 = vadd.f32 0.0, %v3177
  %v3179 = vpop.f32.mrb[0].mxu0
  %3180 = vmatprep.mubr.f32.mxu0 0.0
  %3181 = vmatmul.mubr.f32.gmra.mrb[0].mxu0 %v2668
  %v3182 = vpop.f32.mrb[0].mxu0
  %v3183 = vadd.f32 0.0, %v3182
  %v3184 = vpop.f32.mrb[0].mxu0
  %3185 = vmatprep.mubr.f32.mxu0 0.0
  %3186 = vmatmul.mubr.f32.gmra.mrb[0].mxu0 %v2671
  %v3187 = vpop.f32.mrb[0].mxu0
  %v3188 = vadd.f32 0.0, %v3187
  %v3189 = vpop.f32.mrb[0].mxu0
  %3190 = vmatprep.mubr.f32.mxu0 0.0
  %3191 = vmatmul.mubr.f32.gmra.mrb[0].mxu0 %v2674
  %v3192 = vpop.f32.mrb[0].mxu0
  %v3193 = vadd.f32 0.0, %v3192
  %v3194 = vpop.f32.mrb[0].mxu0
  %3195 = vmatprep.mubr.f32.mxu0 0.0
  %3196 = vmatmul.mubr.f32.gmra.mrb[0].mxu0 %v2677
  %v3197 = vpop.f32.mrb[0].mxu0
  %v3198 = vadd.f32 0.0, %v3197
  %v3199 = vpop.f32.mrb[0].mxu0
  %3200 = vmatprep.mubr.f32.mxu0 0.0
  %3201 = vmatmul.mubr.f32.gmra.mrb[0].mxu0 %v2680
  %v3202 = vpop.f32.mrb[0].mxu0
  %v3203 = vadd.f32 0.0, %v3202
  %v3204 = vpop.f32.mrb[0].mxu0
  %3205 = vmatprep.mubr.f32.mxu0 0.0
  %3206 = vmatmul.mubr.f32.gmra.mrb[0].mxu0 %v2683
  %v3207 = vpop.f32.mrb[0].mxu0
  %v3208 = vadd.f32 0.0, %v3207
  %v3209 = vpop.f32.mrb[0].mxu0
  %3210 = vmatprep.mubr.f32.mxu0 0.0
  %3211 = vmatmul.mubr.f32.gmra.mrb[0].mxu0 %v2686
  %v3212 = vpop.f32.mrb[0].mxu0
  %v3213 = vadd.f32 0.0, %v3212
  %v3214 = vpop.f32.mrb[0].mxu0
  %3215 = vmatprep.mubr.f32.mxu0 0.0
  %3216 = vmatmul.mubr.f32.gmra.mrb[0].mxu0 %v2689
  %v3217 = vpop.f32.mrb[0].mxu0
  %v3218 = vadd.f32 0.0, %v3217
  %v3219 = vpop.f32.mrb[0].mxu0
  %3220 = vmatprep.mubr.f32.mxu0 0.0
  %3221 = vmatmul.mubr.f32.gmra.mrb[0].mxu0 %v2692
  %v3222 = vpop.f32.mrb[0].mxu0
  %v3223 = vadd.f32 0.0, %v3222
  %v3224 = vpop.f32.mrb[0].mxu0
  %3225 = vmatprep.mubr.f32.mxu0 0.0
  %3226 = vmatmul.mubr.f32.gmra.mrb[0].mxu0 %v2695
  %v3227 = vpop.f32.mrb[0].mxu0
  %v3228 = vadd.f32 0.0, %v3227
  %v3229 = vpop.f32.mrb[0].mxu0
  %3230 = vmatprep.mubr.f32.mxu0 0.0
  %3231 = vmatmul.mubr.f32.gmra.mrb[0].mxu0 %v2698
  %v3232 = vpop.f32.mrb[0].mxu0
  %v3233 = vadd.f32 0.0, %v3232
  %v3234 = vpop.f32.mrb[0].mxu0
  %3235 = vmatprep.mubr.f32.mxu0 0.0
  %3236 = vmatmul.mubr.f32.gmra.mrb[0].mxu0 %v2701
  %v3237 = vpop.f32.mrb[0].mxu0
  %v3238 = vadd.f32 0.0, %v3237
  %v3239 = vpop.f32.mrb[0].mxu0
  %3240 = vmatprep.mubr.f32.mxu0 0.0
  %3241 = vmatmul.mubr.f32.gmra.mrb[0].mxu0 %v2704
  %v3242 = vpop.f32.mrb[0].mxu0
  %v3243 = vadd.f32 0.0, %v3242
  %v3244 = vpop.f32.mrb[0].mxu0
  %3245 = vmatprep.mubr.f32.mxu0 0.0
  %3246 = vmatmul.mubr.f32.gmra.mrb[0].mxu0 %v2707
  %v3247 = vpop.f32.mrb[0].mxu0
  %v3248 = vadd.f32 0.0, %v3247
  %v3249 = vpop.f32.mrb[0].mxu0
  %3250 = vmatprep.mubr.f32.mxu0 0.0
  %3251 = vmatmul.mubr.f32.gmra.mrb[0].mxu0 %v2710
  %v3252 = vpop.f32.mrb[0].mxu0
  %v3253 = vadd.f32 0.0, %v3252
  %v3254 = vpop.f32.mrb[0].mxu0
  %3255 = vmatprep.mubr.f32.mxu0 0.0
  %3256 = vmatmul.mubr.f32.gmra.mrb[0].mxu0 %v2713
  %v3257 = vpop.f32.mrb[0].mxu0
  %v3258 = vadd.f32 0.0, %v3257
  %v3259 = vpop.f32.mrb[0].mxu0
  %3260 = vmatprep.mubr.f32.mxu0 0.0
  %3261 = vmatmul.mubr.f32.gmra.mrb[0].mxu0 %v2716
  %v3262 = vpop.f32.mrb[0].mxu0
  %v3263 = vadd.f32 0.0, %v3262
  %v3264 = vpop.f32.mrb[0].mxu0
  %3265 = vmatprep.mubr.f32.mxu0 0.0
  %3266 = vmatmul.mubr.f32.gmra.mrb[0].mxu0 %v2719
  %v3267 = vpop.f32.mrb[0].mxu0
  %v3268 = vadd.f32 0.0, %v3267
  %v3269 = vpop.f32.mrb[0].mxu0
  %3270 = vmatprep.mubr.f32.mxu0 0.0
  %3271 = vmatmul.mubr.f32.gmra.mrb[0].mxu0 %v2722
  %v3272 = vpop.f32.mrb[0].mxu0
  %v3273 = vadd.f32 0.0, %v3272
  %v3274 = vpop.f32.mrb[0].mxu0
  %3275 = vmatprep.mubr.f32.mxu0 0.0
  %3276 = vmatmul.mubr.f32.gmra.mrb[0].mxu0 %v2725
  %v3277 = vpop.f32.mrb[0].mxu0
  %v3278 = vadd.f32 0.0, %v3277
  %v3279 = vpop.f32.mrb[0].mxu0
  %3280 = vmatprep.mubr.f32.mxu0 0.0
  %3281 = vmatmul.mubr.f32.gmra.mrb[0].mxu0 %v2728
  %v3282 = vpop.f32.mrb[0].mxu0
  %v3283 = vadd.f32 0.0, %v3282
  %v3284 = vpop.f32.mrb[0].mxu0
  %3285 = vmatprep.mubr.f32.mxu0 0.0
  %3286 = vmatmul.mubr.f32.gmra.mrb[0].mxu0 %v2731
  %v3287 = vpop.f32.mrb[0].mxu0
  %v3288 = vadd.f32 0.0, %v3287
  %v3289 = vpop.f32.mrb[0].mxu0
  %3290 = vmatprep.mubr.f32.mxu0 0.0
  %3291 = vmatmul.mubr.f32.gmra.mrb[0].mxu0 %v2734
  %v3292 = vpop.f32.mrb[0].mxu0
  %v3293 = vadd.f32 0.0, %v3292
  %v3294 = vpop.f32.mrb[0].mxu0
  %3295 = vmatprep.mubr.f32.mxu0 0.0
  %3296 = vmatmul.mubr.f32.gmra.mrb[0].mxu0 %v2737
  %v3297 = vpop.f32.mrb[0].mxu0
  %v3298 = vadd.f32 0.0, %v3297
  %v3299 = vpop.f32.mrb[0].mxu0
  %3300 = vmatprep.mubr.f32.mxu0 0.0
  %3301 = vmatmul.mubr.f32.gmra.mrb[0].mxu0 %v2740
  %v3302 = vpop.f32.mrb[0].mxu0
  %v3303 = vadd.f32 0.0, %v3302
  %v3304 = vpop.f32.mrb[0].mxu0
  %3305 = vmatprep.mubr.f32.mxu0 0.0
  %3306 = vmatmul.mubr.f32.gmra.mrb[0].mxu0 %v2743
  %v3307 = vpop.f32.mrb[0].mxu0
  %v3308 = vadd.f32 0.0, %v3307
  %v3309 = vpop.f32.mrb[0].mxu0
  %3310 = vmatprep.mubr.f32.mxu0 0.0
  %3311 = vmatmul.mubr.f32.gmra.mrb[0].mxu0 %v2746
  %v3312 = vpop.f32.mrb[0].mxu0
  %v3313 = vadd.f32 0.0, %v3312
  %v3314 = vpop.f32.mrb[0].mxu0
  %3315 = vmatprep.mubr.f32.mxu0 0.0
  %3316 = vmatmul.mubr.f32.gmra.mrb[0].mxu0 %v2749
  %v3317 = vpop.f32.mrb[0].mxu0
  %v3318 = vadd.f32 0.0, %v3317
  %v3319 = vpop.f32.mrb[0].mxu0
  %3320 = vmatprep.mubr.f32.mxu0 0.0
  %3321 = vmatmul.mubr.f32.gmra.mrb[0].mxu0 %v2752
  %v3322 = vpop.f32.mrb[0].mxu0
  %v3323 = vadd.f32 0.0, %v3322
  %v3324 = vpop.f32.mrb[0].mxu0
  %3325 = vmatprep.mubr.f32.mxu0 0.0
  %3326 = vmatmul.mubr.f32.gmra.mrb[0].mxu0 %v2755
  %v3327 = vpop.f32.mrb[0].mxu0
  %v3328 = vadd.f32 0.0, %v3327
  %v3329 = vpop.f32.mrb[0].mxu0
  %3330 = vmatprep.mubr.f32.mxu0 0.0
  %3331 = vmatmul.mubr.f32.gmra.mrb[0].mxu0 %v2758
  %v3332 = vpop.f32.mrb[0].mxu0
  %v3333 = vadd.f32 0.0, %v3332
  %v3334 = vpop.f32.mrb[0].mxu0
  %3335 = vmatprep.mubr.f32.mxu0 0.0
  %3336 = vmatmul.mubr.f32.gmra.mrb[0].mxu0 %v2761
  %v3337 = vpop.f32.mrb[0].mxu0
  %v3338 = vadd.f32 0.0, %v3337
  %v3339 = vpop.f32.mrb[0].mxu0
  %3340 = vmatprep.mubr.f32.mxu0 0.0
  %3341 = vmatmul.mubr.f32.gmra.mrb[0].mxu0 %v2764
  %v3342 = vpop.f32.mrb[0].mxu0
  %v3343 = vadd.f32 0.0, %v3342
  %v3344 = vpop.f32.mrb[0].mxu0
  %3345 = vmatprep.mubr.f32.mxu0 0.0
  %3346 = vmatmul.mubr.f32.gmra.mrb[0].mxu0 %v2767
  %v3347 = vpop.f32.mrb[0].mxu0
  %v3348 = vadd.f32 0.0, %v3347
  %v3349 = vpop.f32.mrb[0].mxu0
  %3350 = vmatprep.mubr.f32.mxu0 0.0
  %3351 = vmatmul.mubr.f32.gmra.mrb[0].mxu0 %v2770
  %v3352 = vpop.f32.mrb[0].mxu0
  %v3353 = vadd.f32 0.0, %v3352
  %v3354 = vpop.f32.mrb[0].mxu0
  %3355 = vmatprep.mubr.f32.mxu0 0.0
  %3356 = vmatmul.mubr.f32.gmra.mrb[0].mxu0 %v2773
  %v3357 = vpop.f32.mrb[0].mxu0
  %v3358 = vadd.f32 0.0, %v3357
  %v3359 = vpop.f32.mrb[0].mxu0
  %3360 = vmatprep.mubr.f32.mxu0 0.0
  %3361 = vmatmul.mubr.f32.gmra.mrb[0].mxu0 %v2776
  %v3362 = vpop.f32.mrb[0].mxu0
  %v3363 = vadd.f32 0.0, %v3362
  %v3364 = vpop.f32.mrb[0].mxu0
  %3365 = vmatprep.mubr.f32.mxu0 0.0
  %3366 = vmatmul.mubr.f32.gmra.mrb[0].mxu0 %v2779
  %v3367 = vpop.f32.mrb[0].mxu0
  %v3368 = vadd.f32 0.0, %v3367
  %v3369 = vpop.f32.mrb[0].mxu0
  %3370 = vmatprep.mubr.f32.mxu0 0.0
  %3371 = vmatmul.mubr.f32.gmra.mrb[0].mxu0 %v2782
  %v3372 = vpop.f32.mrb[0].mxu0
  %v3373 = vadd.f32 0.0, %v3372
  %v3374 = vpop.f32.mrb[0].mxu0
  %3375 = vmatprep.mubr.f32.mxu0 0.0
  %3376 = vmatmul.mubr.f32.gmra.mrb[0].mxu0 %v2785
  %v3377 = vpop.f32.mrb[0].mxu0
  %v3378 = vadd.f32 0.0, %v3377
  %v3379 = vpop.f32.mrb[0].mxu0
  %3380 = vmatprep.mubr.f32.mxu0 0.0
  %3381 = vmatmul.mubr.f32.gmra.mrb[0].mxu0 %v2788
  %v3382 = vpop.f32.mrb[0].mxu0
  %v3383 = vadd.f32 0.0, %v3382
  %v3384 = vpop.f32.mrb[0].mxu0
  %3385 = vmatprep.mubr.f32.mxu0 0.0
  %3386 = vmatmul.mubr.f32.gmra.mrb[0].mxu0 %v2791
  %v3387 = vpop.f32.mrb[0].mxu0
  %v3388 = vadd.f32 0.0, %v3387
  %v3389 = vpop.f32.mrb[0].mxu0
  %3390 = vmatprep.mubr.f32.mxu0 0.0
  %3391 = vmatmul.mubr.f32.gmra.mrb[0].mxu0 %v2794
  %v3392 = vpop.f32.mrb[0].mxu0
  %v3393 = vadd.f32 0.0, %v3392
  %v3394 = vpop.f32.mrb[0].mxu0
  %3395 = vmatprep.mubr.f32.mxu0 0.0
  %3396 = vmatmul.mubr.f32.gmra.mrb[0].mxu0 %v2797
  %v3397 = vpop.f32.mrb[0].mxu0
  %v3398 = vadd.f32 0.0, %v3397
  %v3399 = vpop.f32.mrb[0].mxu0
  %3400 = vmatprep.mubr.f32.mxu0 0.0
  %3401 = vmatmul.mubr.f32.gmra.mrb[0].mxu0 %v2800
  %v3402 = vpop.f32.mrb[0].mxu0
  %v3403 = vadd.f32 0.0, %v3402
  %v3404 = vpop.f32.mrb[0].mxu0
  %3405 = vmatprep.mubr.f32.mxu0 0.0
  %3406 = vmatmul.mubr.f32.gmra.mrb[0].mxu0 %v2803
  %v3407 = vpop.f32.mrb[0].mxu0
  %v3408 = vadd.f32 0.0, %v3407
  %v3409 = vpop.f32.mrb[0].mxu0
  %3410 = vmatprep.mubr.f32.mxu0 0.0
  %3411 = vmatmul.mubr.f32.gmra.mrb[0].mxu0 %v2806
  %v3412 = vpop.f32.mrb[0].mxu0
  %v3413 = vadd.f32 0.0, %v3412
  %v3414 = vpop.f32.mrb[0].mxu0
  %3415 = vmatprep.mubr.f32.mxu0 0.0
  %3416 = vmatmul.mubr.f32.gmra.mrb[0].mxu0 %v2809
  %v3417 = vpop.f32.mrb[0].mxu0
  %v3418 = vadd.f32 0.0, %v3417
  %v3419 = vpop.f32.mrb[0].mxu0
  %3420 = vmatprep.mubr.f32.mxu0 0.0
  %3421 = vmatmul.mubr.f32.gmra.mrb[0].mxu0 %v2812
  %v3422 = vpop.f32.mrb[0].mxu0
  %v3423 = vadd.f32 0.0, %v3422
  %v3424 = vpop.f32.mrb[0].mxu0
  %3425 = vmatprep.mubr.f32.mxu0 0.0
  %3426 = vmatmul.mubr.f32.gmra.mrb[0].mxu0 %v2815
  %v3427 = vpop.f32.mrb[0].mxu0
  %v3428 = vadd.f32 0.0, %v3427
  %v3429 = vpop.f32.mrb[0].mxu0
  %3430 = vmatprep.mubr.f32.mxu0 0.0
  %3431 = vmatmul.mubr.f32.gmra.mrb[0].mxu0 %v2818
  %v3432 = vpop.f32.mrb[0].mxu0
  %v3433 = vadd.f32 0.0, %v3432
  %v3434 = vpop.f32.mrb[0].mxu0
  %3435 = vmatprep.mubr.f32.mxu0 0.0
  %3436 = vmatmul.mubr.f32.gmra.mrb[0].mxu0 %v2821
  %v3437 = vpop.f32.mrb[0].mxu0
  %v3438 = vadd.f32 0.0, %v3437
  %v3439 = vpop.f32.mrb[0].mxu0
  %3440 = vmatprep.mubr.f32.mxu0 0.0
  %3441 = vmatmul.mubr.f32.gmra.mrb[0].mxu0 %v2824
  %v3442 = vpop.f32.mrb[0].mxu0
  %v3443 = vadd.f32 0.0, %v3442
  %v3444 = vpop.f32.mrb[0].mxu0
  %3445 = vmatprep.mubr.f32.mxu0 0.0
  %3446 = vmatmul.mubr.f32.gmra.mrb[0].mxu0 %v2827
  %v3447 = vpop.f32.mrb[0].mxu0
  %v3448 = vadd.f32 0.0, %v3447
  %v3449 = vpop.f32.mrb[0].mxu0
  %3450 = vmatprep.mubr.f32.mxu0 0.0
  %3451 = vmatmul.mubr.f32.gmra.mrb[0].mxu0 %v2830
  %v3452 = vpop.f32.mrb[0].mxu0
  %v3453 = vadd.f32 0.0, %v3452
  %v3454 = vpop.f32.mrb[0].mxu0
  %3455 = vmatprep.mubr.f32.mxu0 0.0
  %3456 = vmatmul.mubr.f32.gmra.mrb[0].mxu0 %v2833
  %v3457 = vpop.f32.mrb[0].mxu0
  %v3458 = vadd.f32 0.0, %v3457
  %v3459 = vpop.f32.mrb[0].mxu0
  %3460 = vmatprep.mubr.f32.mxu0 0.0
  %3461 = vmatmul.mubr.f32.gmra.mrb[0].mxu0 %v2836
  %v3462 = vpop.f32.mrb[0].mxu0
  %v3463 = vadd.f32 0.0, %v3462
  %v3464 = vpop.f32.mrb[0].mxu0
  %3465 = vmatprep.mubr.f32.mxu0 0.0
  %3466 = vmatmul.mubr.f32.gmra.mrb[0].mxu0 %v2839
  %v3467 = vpop.f32.mrb[0].mxu0
  %v3468 = vadd.f32 0.0, %v3467
  %v3469 = vpop.f32.mrb[0].mxu0
  %3470 = vmatprep.mubr.f32.mxu0 0.0
  %3471 = vmatmul.mubr.f32.gmra.mrb[0].mxu0 %v2842
  %v3472 = vpop.f32.mrb[0].mxu0
  %v3473 = vadd.f32 0.0, %v3472
  %v3474 = vpop.f32.mrb[0].mxu0
  %3475 = vmatprep.mubr.f32.mxu0 0.0
  %3476 = vmatmul.mubr.f32.gmra.mrb[0].mxu0 %v2845
  %v3477 = vpop.f32.mrb[0].mxu0
  %v3478 = vadd.f32 0.0, %v3477
  %v3479 = vpop.f32.mrb[0].mxu0
  %3480 = vmatprep.mubr.f32.mxu0 0.0
  %3481 = vmatmul.mubr.f32.gmra.mrb[0].mxu0 %v2848
  %v3482 = vpop.f32.mrb[0].mxu0
  %v3483 = vadd.f32 0.0, %v3482
  %v3484 = vpop.f32.mrb[0].mxu0
  %3485 = vmatprep.mubr.f32.mxu0 0.0
  %3486 = vmatmul.mubr.f32.gmra.mrb[0].mxu0 %v2851
  %v3487 = vpop.f32.mrb[0].mxu0
  %v3488 = vadd.f32 0.0, %v3487
  %v3489 = vpop.f32.mrb[0].mxu0
  %3490 = vmatprep.mubr.f32.mxu0 0.0
  %3491 = vmatmul.mubr.f32.gmra.mrb[0].mxu0 %v2854
  %v3492 = vpop.f32.mrb[0].mxu0
  %v3493 = vadd.f32 0.0, %v3492
  %v3494 = vpop.f32.mrb[0].mxu0
  %3495 = vmatprep.mubr.f32.mxu0 0.0
  %3496 = vmatmul.mubr.f32.gmra.mrb[0].mxu0 %v2857
  %v3497 = vpop.f32.mrb[0].mxu0
  %v3498 = vadd.f32 0.0, %v3497
  %v3499 = vpop.f32.mrb[0].mxu0
  %3500 = vmatprep.mubr.f32.mxu0 0.0
  %3501 = vmatmul.mubr.f32.gmra.mrb[0].mxu0 %v2860
  %v3502 = vpop.f32.mrb[0].mxu0
  %v3503 = vadd.f32 0.0, %v3502
  %v3504 = vpop.f32.mrb[0].mxu0
  %3505 = vmatprep.mubr.f32.mxu0 0.0
  %3506 = vmatmul.mubr.f32.gmra.mrb[0].mxu0 %v2863
  %v3507 = vpop.f32.mrb[0].mxu0
  %v3508 = vadd.f32 0.0, %v3507
  %v3509 = vpop.f32.mrb[0].mxu0
  %3510 = vmatprep.mubr.f32.mxu0 0.0
  %3511 = vmatmul.mubr.f32.gmra.mrb[0].mxu0 %v2866
  %v3512 = vpop.f32.mrb[0].mxu0
  %v3513 = vadd.f32 0.0, %v3512
  %v3514 = vpop.f32.mrb[0].mxu0
  %3515 = vmatprep.mubr.f32.mxu0 0.0
  %3516 = vmatmul.mubr.f32.gmra.mrb[0].mxu0 %v2869
  %v3517 = vpop.f32.mrb[0].mxu0
  %v3518 = vadd.f32 0.0, %v3517
  %v3519 = vpop.f32.mrb[0].mxu0
  %3520 = vmatprep.mubr.f32.mxu0 0.0
  %3521 = vmatmul.mubr.f32.gmra.mrb[0].mxu0 %v2872
  %v3522 = vpop.f32.mrb[0].mxu0
  %v3523 = vadd.f32 0.0, %v3522
  %v3524 = vpop.f32.mrb[0].mxu0
  %3525 = vmatprep.mubr.f32.mxu0 0.0
  %3526 = vmatmul.mubr.f32.gmra.mrb[0].mxu0 %v2875
  %v3527 = vpop.f32.mrb[0].mxu0
  %v3528 = vadd.f32 0.0, %v3527
  %v3529 = vpop.f32.mrb[0].mxu0
  %3530 = vmatprep.mubr.f32.mxu0 0.0
  %3531 = vmatmul.mubr.f32.gmra.mrb[0].mxu0 %v2878
  %v3532 = vpop.f32.mrb[0].mxu0
  %v3533 = vadd.f32 0.0, %v3532
  %v3534 = vpop.f32.mrb[0].mxu0
  %3535 = vmatprep.mubr.f32.mxu0 0.0
  %3536 = vmatmul.mubr.f32.gmra.mrb[0].mxu0 %v2881
  %v3537 = vpop.f32.mrb[0].mxu0
  %v3538 = vadd.f32 0.0, %v3537
  %v3539 = vpop.f32.mrb[0].mxu0
  %3540 = vmatprep.mubr.f32.mxu0 0.0
  %3541 = vmatmul.mubr.f32.gmra.mrb[0].mxu0 %v2884
  %v3542 = vpop.f32.mrb[0].mxu0
  %v3543 = vadd.f32 0.0, %v3542
  %v3544 = vpop.f32.mrb[0].mxu0
  %3545 = vmatprep.mubr.f32.mxu0 0.0
  %3546 = vmatmul.mubr.f32.gmra.mrb[0].mxu0 %v2887
  %v3547 = vpop.f32.mrb[0].mxu0
  %v3548 = vadd.f32 0.0, %v3547
  %v3549 = vpop.f32.mrb[0].mxu0
  %3550 = vmatprep.mubr.f32.mxu0 0.0
  %3551 = vmatmul.mubr.f32.gmra.mrb[0].mxu0 %v2890
  %v3552 = vpop.f32.mrb[0].mxu0
  %v3553 = vadd.f32 0.0, %v3552
  %v3554 = vpop.f32.mrb[0].mxu0
  %3555 = vmatprep.mubr.f32.mxu0 0.0
  %3556 = vmatmul.mubr.f32.gmra.mrb[0].mxu0 %v2893
  %v3557 = vpop.f32.mrb[0].mxu0
  %v3558 = vadd.f32 0.0, %v3557
  %v3559 = vpop.f32.mrb[0].mxu0
  %3560 = vmatprep.mubr.f32.mxu0 0.0
  %3561 = vmatmul.mubr.f32.gmra.mrb[0].mxu0 %v2896
  %v3562 = vpop.f32.mrb[0].mxu0
  %v3563 = vadd.f32 0.0, %v3562
  %v3564 = vpop.f32.mrb[0].mxu0
  %3565 = vmatprep.mubr.f32.mxu0 0.0
  %3566 = vmatmul.mubr.f32.gmra.mrb[0].mxu0 %v2899
  %v3567 = vpop.f32.mrb[0].mxu0
  %v3568 = vadd.f32 0.0, %v3567
  %v3569 = vpop.f32.mrb[0].mxu0
  %3570 = vmatprep.mubr.f32.mxu0 0.0
  %3571 = vmatmul.mubr.f32.gmra.mrb[0].mxu0 %v2902
  %v3572 = vpop.f32.mrb[0].mxu0
  %v3573 = vadd.f32 0.0, %v3572
  %v3574 = vpop.f32.mrb[0].mxu0
  %3575 = vmatprep.mubr.f32.mxu0 0.0
  %3576 = vmatmul.mubr.f32.gmra.mrb[0].mxu0 %v2905
  %v3577 = vpop.f32.mrb[0].mxu0
  %v3578 = vadd.f32 0.0, %v3577
  %v3579 = vpop.f32.mrb[0].mxu0
  %3580 = vmatprep.mubr.f32.mxu0 0.0
  %3581 = vmatmul.mubr.f32.gmra.mrb[0].mxu0 %v2908
  %v3582 = vpop.f32.mrb[0].mxu0
  %v3583 = vadd.f32 0.0, %v3582
  %v3584 = vpop.f32.mrb[0].mxu0
  %3585 = vmatprep.mubr.f32.mxu0 0.0
  %3586 = vmatmul.mubr.f32.gmra.mrb[0].mxu0 %v2911
  %v3587 = vpop.f32.mrb[0].mxu0
  %v3588 = vadd.f32 0.0, %v3587
  %v3589 = vpop.f32.mrb[0].mxu0
  %3590 = vmatprep.mubr.f32.mxu0 0.0
  %3591 = vmatmul.mubr.f32.gmra.mrb[0].mxu0 %v2914
  %v3592 = vpop.f32.mrb[0].mxu0
  %v3593 = vadd.f32 0.0, %v3592
  %v3594 = vpop.f32.mrb[0].mxu0
  %3595 = vmatprep.mubr.f32.mxu0 0.0
  %3596 = vmatmul.mubr.f32.gmra.mrb[0].mxu0 %v2917
  %v3597 = vpop.f32.mrb[0].mxu0
  %v3598 = vadd.f32 0.0, %v3597
  %v3599 = vpop.f32.mrb[0].mxu0
  %3600 = vmatprep.mubr.f32.mxu0 0.0
  %3601 = vmatmul.mubr.f32.gmra.mrb[0].mxu0 %v2920
  %v3602 = vpop.f32.mrb[0].mxu0
  %v3603 = vadd.f32 0.0, %v3602
  %v3604 = vpop.f32.mrb[0].mxu0
  %3605 = vmatprep.mubr.f32.mxu0 0.0
  %3606 = vmatmul.mubr.f32.gmra.mrb[0].mxu0 %v2923
  %v3607 = vpop.f32.mrb[0].mxu0
  %v3608 = vadd.f32 0.0, %v3607
  %v3609 = vpop.f32.mrb[0].mxu0
  %3610 = vmatprep.mubr.f32.mxu0 0.0
  %3611 = vmatmul.mubr.f32.gmra.mrb[0].mxu0 %v2926
  %v3612 = vpop.f32.mrb[0].mxu0
  %v3613 = vadd.f32 0.0, %v3612
  %v3614 = vpop.f32.mrb[0].mxu0
  %3615 = vmatprep.mubr.f32.mxu0 0.0
  %3616 = vmatmul.mubr.f32.gmra.mrb[0].mxu0 %v2929
  %v3617 = vpop.f32.mrb[0].mxu0
  %v3618 = vadd.f32 0.0, %v3617
  %v3619 = vpop.f32.mrb[0].mxu0
  %3620 = vdwg.mxu0
  %v3621 = vadd.f32 %v1805, %v2998
  %v3622 = vadd.f32 %v1810, %v3003
  %v3623 = vadd.f32 %v1815, %v3008
  %v3624 = vadd.f32 %v1820, %v3013
  %v3625 = vadd.f32 %v1825, %v3018
  %v3626 = vadd.f32 %v1830, %v3023
  %v3627 = vadd.f32 %v1835, %v3028
  %v3628 = vadd.f32 %v1840, %v3033
  %v3629 = vadd.f32 %v1845, %v3038
  %v3630 = vadd.f32 %v1850, %v3043
  %v3631 = vadd.f32 %v1855, %v3048
  %v3632 = vadd.f32 %v1860, %v3053
  %v3633 = vadd.f32 %v1865, %v3058
  %v3634 = vadd.f32 %v1870, %v3063
  %v3635 = vadd.f32 %v1875, %v3068
  %v3636 = vadd.f32 %v1880, %v3073
  %v3637 = vadd.f32 %v1885, %v3078
  %v3638 = vadd.f32 %v1890, %v3083
  %v3639 = vadd.f32 %v1895, %v3088
  %v3640 = vadd.f32 %v1900, %v3093
  %v3641 = vadd.f32 %v1905, %v3098
  %v3642 = vadd.f32 %v1910, %v3103
  %v3643 = vadd.f32 %v1915, %v3108
  %v3644 = vadd.f32 %v1920, %v3113
  %v3645 = vadd.f32 %v1925, %v3118
  %v3646 = vadd.f32 %v1930, %v3123
  %v3647 = vadd.f32 %v1935, %v3128
  %v3648 = vadd.f32 %v1940, %v3133
  %v3649 = vadd.f32 %v1945, %v3138
  %v3650 = vadd.f32 %v1950, %v3143
  %v3651 = vadd.f32 %v1955, %v3148
  %v3652 = vadd.f32 %v1960, %v3153
  %v3653 = vadd.f32 %v1965, %v3158
  %v3654 = vadd.f32 %v1970, %v3163
  %v3655 = vadd.f32 %v1975, %v3168
  %v3656 = vadd.f32 %v1980, %v3173
  %v3657 = vadd.f32 %v1985, %v3178
  %v3658 = vadd.f32 %v1990, %v3183
  %v3659 = vadd.f32 %v1995, %v3188
  %v3660 = vadd.f32 %v2000, %v3193
  %v3661 = vadd.f32 %v2005, %v3198
  %v3662 = vadd.f32 %v2010, %v3203
  %v3663 = vadd.f32 %v2015, %v3208
  %v3664 = vadd.f32 %v2020, %v3213
  %v3665 = vadd.f32 %v2025, %v3218
  %v3666 = vadd.f32 %v2030, %v3223
  %v3667 = vadd.f32 %v2035, %v3228
  %v3668 = vadd.f32 %v2040, %v3233
  %v3669 = vadd.f32 %v2045, %v3238
  %v3670 = vadd.f32 %v2050, %v3243
  %v3671 = vadd.f32 %v2055, %v3248
  %v3672 = vadd.f32 %v2060, %v3253
  %v3673 = vadd.f32 %v2065, %v3258
  %v3674 = vadd.f32 %v2070, %v3263
  %v3675 = vadd.f32 %v2075, %v3268
  %v3676 = vadd.f32 %v2080, %v3273
  %v3677 = vadd.f32 %v2085, %v3278
  %v3678 = vadd.f32 %v2090, %v3283
  %v3679 = vadd.f32 %v2095, %v3288
  %v3680 = vadd.f32 %v2100, %v3293
  %v3681 = vadd.f32 %v2105, %v3298
  %v3682 = vadd.f32 %v2110, %v3303
  %v3683 = vadd.f32 %v2115, %v3308
  %v3684 = vadd.f32 %v2120, %v3313
  %v3685 = vadd.f32 %v2125, %v3318
  %v3686 = vadd.f32 %v2130, %v3323
  %v3687 = vadd.f32 %v2135, %v3328
  %v3688 = vadd.f32 %v2140, %v3333
  %v3689 = vadd.f32 %v2145, %v3338
  %v3690 = vadd.f32 %v2150, %v3343
  %v3691 = vadd.f32 %v2155, %v3348
  %v3692 = vadd.f32 %v2160, %v3353
  %v3693 = vadd.f32 %v2165, %v3358
  %v3694 = vadd.f32 %v2170, %v3363
  %v3695 = vadd.f32 %v2175, %v3368
  %v3696 = vadd.f32 %v2180, %v3373
  %v3697 = vadd.f32 %v2185, %v3378
  %v3698 = vadd.f32 %v2190, %v3383
  %v3699 = vadd.f32 %v2195, %v3388
  %v3700 = vadd.f32 %v2200, %v3393
  %v3701 = vadd.f32 %v2205, %v3398
  %v3702 = vadd.f32 %v2210, %v3403
  %v3703 = vadd.f32 %v2215, %v3408
  %v3704 = vadd.f32 %v2220, %v3413
  %v3705 = vadd.f32 %v2225, %v3418
  %v3706 = vadd.f32 %v2230, %v3423
  %v3707 = vadd.f32 %v2235, %v3428
  %v3708 = vadd.f32 %v2240, %v3433
  %v3709 = vadd.f32 %v2245, %v3438
  %v3710 = vadd.f32 %v2250, %v3443
  %v3711 = vadd.f32 %v2255, %v3448
  %v3712 = vadd.f32 %v2260, %v3453
  %v3713 = vadd.f32 %v2265, %v3458
  %v3714 = vadd.f32 %v2270, %v3463
  %v3715 = vadd.f32 %v2275, %v3468
  %v3716 = vadd.f32 %v2280, %v3473
  %v3717 = vadd.f32 %v2285, %v3478
  %v3718 = vadd.f32 %v2290, %v3483
  %v3719 = vadd.f32 %v2295, %v3488
  %v3720 = vadd.f32 %v2300, %v3493
  %v3721 = vadd.f32 %v2305, %v3498
  %v3722 = vadd.f32 %v2310, %v3503
  %v3723 = vadd.f32 %v2315, %v3508
  %v3724 = vadd.f32 %v2320, %v3513
  %v3725 = vadd.f32 %v2325, %v3518
  %v3726 = vadd.f32 %v2330, %v3523
  %v3727 = vadd.f32 %v2335, %v3528
  %v3728 = vadd.f32 %v2340, %v3533
  %v3729 = vadd.f32 %v2345, %v3538
  %v3730 = vadd.f32 %v2350, %v3543
  %v3731 = vadd.f32 %v2355, %v3548
  %v3732 = vadd.f32 %v2360, %v3553
  %v3733 = vadd.f32 %v2365, %v3558
  %v3734 = vadd.f32 %v2370, %v3563
  %v3735 = vadd.f32 %v2375, %v3568
  %v3736 = vadd.f32 %v2380, %v3573
  %v3737 = vadd.f32 %v2385, %v3578
  %v3738 = vadd.f32 %v2390, %v3583
  %v3739 = vadd.f32 %v2395, %v3588
  %v3740 = vadd.f32 %v2400, %v3593
  %v3741 = vadd.f32 %v2405, %v3598
  %v3742 = vadd.f32 %v2410, %v3603
  %v3743 = vadd.f32 %v2415, %v3608
  %v3744 = vadd.f32 %v2420, %v3613
  %v3745 = vadd.f32 %v2425, %v3618
  %v3746 = vld [vmem:[%s6] sm:$0x1]
  %v3748 = vlaneseq
  %v3749 = vshrl.u32 %v3748, 7
  %v3750 = vsub.s32 0, %v3749
  %v3751 = vrot.slane %v3746, %v3750
  %v3753 = vadd.f32 %v3621, %v3751
  %v3754 = vadd.f32 %v3622, %v3751
  %v3755 = vadd.f32 %v3623, %v3751
  %v3756 = vadd.f32 %v3624, %v3751
  %v3757 = vadd.f32 %v3625, %v3751
  %v3758 = vadd.f32 %v3626, %v3751
  %v3759 = vadd.f32 %v3627, %v3751
  %v3760 = vadd.f32 %v3628, %v3751
  %v3761 = vadd.f32 %v3629, %v3751
  %v3762 = vadd.f32 %v3630, %v3751
  %v3763 = vadd.f32 %v3631, %v3751
  %v3764 = vadd.f32 %v3632, %v3751
  %v3765 = vadd.f32 %v3633, %v3751
  %v3766 = vadd.f32 %v3634, %v3751
  %v3767 = vadd.f32 %v3635, %v3751
  %v3768 = vadd.f32 %v3636, %v3751
  %v3769 = vadd.f32 %v3637, %v3751
  %v3770 = vadd.f32 %v3638, %v3751
  %v3771 = vadd.f32 %v3639, %v3751
  %v3772 = vadd.f32 %v3640, %v3751
  %v3773 = vadd.f32 %v3641, %v3751
  %v3774 = vadd.f32 %v3642, %v3751
  %v3775 = vadd.f32 %v3643, %v3751
  %v3776 = vadd.f32 %v3644, %v3751
  %v3777 = vadd.f32 %v3645, %v3751
  %v3778 = vadd.f32 %v3646, %v3751
  %v3779 = vadd.f32 %v3647, %v3751
  %v3780 = vadd.f32 %v3648, %v3751
  %v3781 = vadd.f32 %v3649, %v3751
  %v3782 = vadd.f32 %v3650, %v3751
  %v3783 = vadd.f32 %v3651, %v3751
  %v3784 = vadd.f32 %v3652, %v3751
  %v3785 = vadd.f32 %v3653, %v3751
  %v3786 = vadd.f32 %v3654, %v3751
  %v3787 = vadd.f32 %v3655, %v3751
  %v3788 = vadd.f32 %v3656, %v3751
  %v3789 = vadd.f32 %v3657, %v3751
  %v3790 = vadd.f32 %v3658, %v3751
  %v3791 = vadd.f32 %v3659, %v3751
  %v3792 = vadd.f32 %v3660, %v3751
  %v3793 = vadd.f32 %v3661, %v3751
  %v3794 = vadd.f32 %v3662, %v3751
  %v3795 = vadd.f32 %v3663, %v3751
  %v3796 = vadd.f32 %v3664, %v3751
  %v3797 = vadd.f32 %v3665, %v3751
  %v3798 = vadd.f32 %v3666, %v3751
  %v3799 = vadd.f32 %v3667, %v3751
  %v3800 = vadd.f32 %v3668, %v3751
  %v3801 = vadd.f32 %v3669, %v3751
  %v3802 = vadd.f32 %v3670, %v3751
  %v3803 = vadd.f32 %v3671, %v3751
  %v3804 = vadd.f32 %v3672, %v3751
  %v3805 = vadd.f32 %v3673, %v3751
  %v3806 = vadd.f32 %v3674, %v3751
  %v3807 = vadd.f32 %v3675, %v3751
  %v3808 = vadd.f32 %v3676, %v3751
  %v3809 = vadd.f32 %v3677, %v3751
  %v3810 = vadd.f32 %v3678, %v3751
  %v3811 = vadd.f32 %v3679, %v3751
  %v3812 = vadd.f32 %v3680, %v3751
  %v3813 = vadd.f32 %v3681, %v3751
  %v3814 = vadd.f32 %v3682, %v3751
  %v3815 = vadd.f32 %v3683, %v3751
  %v3816 = vadd.f32 %v3684, %v3751
  %v3817 = vadd.f32 %v3685, %v3751
  %v3818 = vadd.f32 %v3686, %v3751
  %v3819 = vadd.f32 %v3687, %v3751
  %v3820 = vadd.f32 %v3688, %v3751
  %v3821 = vadd.f32 %v3689, %v3751
  %v3822 = vadd.f32 %v3690, %v3751
  %v3823 = vadd.f32 %v3691, %v3751
  %v3824 = vadd.f32 %v3692, %v3751
  %v3825 = vadd.f32 %v3693, %v3751
  %v3826 = vadd.f32 %v3694, %v3751
  %v3827 = vadd.f32 %v3695, %v3751
  %v3828 = vadd.f32 %v3696, %v3751
  %v3829 = vadd.f32 %v3697, %v3751
  %v3830 = vadd.f32 %v3698, %v3751
  %v3831 = vadd.f32 %v3699, %v3751
  %v3832 = vadd.f32 %v3700, %v3751
  %v3833 = vadd.f32 %v3701, %v3751
  %v3834 = vadd.f32 %v3702, %v3751
  %v3835 = vadd.f32 %v3703, %v3751
  %v3836 = vadd.f32 %v3704, %v3751
  %v3837 = vadd.f32 %v3705, %v3751
  %v3838 = vadd.f32 %v3706, %v3751
  %v3839 = vadd.f32 %v3707, %v3751
  %v3840 = vadd.f32 %v3708, %v3751
  %v3841 = vadd.f32 %v3709, %v3751
  %v3842 = vadd.f32 %v3710, %v3751
  %v3843 = vadd.f32 %v3711, %v3751
  %v3844 = vadd.f32 %v3712, %v3751
  %v3845 = vadd.f32 %v3713, %v3751
  %v3846 = vadd.f32 %v3714, %v3751
  %v3847 = vadd.f32 %v3715, %v3751
  %v3848 = vadd.f32 %v3716, %v3751
  %v3849 = vadd.f32 %v3717, %v3751
  %v3850 = vadd.f32 %v3718, %v3751
  %v3851 = vadd.f32 %v3719, %v3751
  %v3852 = vadd.f32 %v3720, %v3751
  %v3853 = vadd.f32 %v3721, %v3751
  %v3854 = vadd.f32 %v3722, %v3751
  %v3855 = vadd.f32 %v3723, %v3751
  %v3856 = vadd.f32 %v3724, %v3751
  %v3857 = vadd.f32 %v3725, %v3751
  %v3858 = vadd.f32 %v3726, %v3751
  %v3859 = vadd.f32 %v3727, %v3751
  %v3860 = vadd.f32 %v3728, %v3751
  %v3861 = vadd.f32 %v3729, %v3751
  %v3862 = vadd.f32 %v3730, %v3751
  %v3863 = vadd.f32 %v3731, %v3751
  %v3864 = vadd.f32 %v3732, %v3751
  %v3865 = vadd.f32 %v3733, %v3751
  %v3866 = vadd.f32 %v3734, %v3751
  %v3867 = vadd.f32 %v3735, %v3751
  %v3868 = vadd.f32 %v3736, %v3751
  %v3869 = vadd.f32 %v3737, %v3751
  %v3870 = vadd.f32 %v3738, %v3751
  %v3871 = vadd.f32 %v3739, %v3751
  %v3872 = vadd.f32 %v3740, %v3751
  %v3873 = vadd.f32 %v3741, %v3751
  %v3874 = vadd.f32 %v3742, %v3751
  %v3875 = vadd.f32 %v3743, %v3751
  %v3876 = vadd.f32 %v3744, %v3751
  %v3877 = vadd.f32 %v3745, %v3751
  %v3878 = vmax.f32 %v3753, 0.0
  %v3879 = vmax.f32 %v3754, 0.0
  %v3880 = vmax.f32 %v3755, 0.0
  %v3881 = vmax.f32 %v3756, 0.0
  %v3882 = vmax.f32 %v3757, 0.0
  %v3883 = vmax.f32 %v3758, 0.0
  %v3884 = vmax.f32 %v3759, 0.0
  %v3885 = vmax.f32 %v3760, 0.0
  %v3886 = vmax.f32 %v3761, 0.0
  %v3887 = vmax.f32 %v3762, 0.0
  %v3888 = vmax.f32 %v3763, 0.0
  %v3889 = vmax.f32 %v3764, 0.0
  %v3890 = vmax.f32 %v3765, 0.0
  %v3891 = vmax.f32 %v3766, 0.0
  %v3892 = vmax.f32 %v3767, 0.0
  %v3893 = vmax.f32 %v3768, 0.0
  %v3894 = vmax.f32 %v3769, 0.0
  %v3895 = vmax.f32 %v3770, 0.0
  %v3896 = vmax.f32 %v3771, 0.0
  %v3897 = vmax.f32 %v3772, 0.0
  %v3898 = vmax.f32 %v3773, 0.0
  %v3899 = vmax.f32 %v3774, 0.0
  %v3900 = vmax.f32 %v3775, 0.0
  %v3901 = vmax.f32 %v3776, 0.0
  %v3902 = vmax.f32 %v3777, 0.0
  %v3903 = vmax.f32 %v3778, 0.0
  %v3904 = vmax.f32 %v3779, 0.0
  %v3905 = vmax.f32 %v3780, 0.0
  %v3906 = vmax.f32 %v3781, 0.0
  %v3907 = vmax.f32 %v3782, 0.0
  %v3908 = vmax.f32 %v3783, 0.0
  %v3909 = vmax.f32 %v3784, 0.0
  %v3910 = vmax.f32 %v3785, 0.0
  %v3911 = vmax.f32 %v3786, 0.0
  %v3912 = vmax.f32 %v3787, 0.0
  %v3913 = vmax.f32 %v3788, 0.0
  %v3914 = vmax.f32 %v3789, 0.0
  %v3915 = vmax.f32 %v3790, 0.0
  %v3916 = vmax.f32 %v3791, 0.0
  %v3917 = vmax.f32 %v3792, 0.0
  %v3918 = vmax.f32 %v3793, 0.0
  %v3919 = vmax.f32 %v3794, 0.0
  %v3920 = vmax.f32 %v3795, 0.0
  %v3921 = vmax.f32 %v3796, 0.0
  %v3922 = vmax.f32 %v3797, 0.0
  %v3923 = vmax.f32 %v3798, 0.0
  %v3924 = vmax.f32 %v3799, 0.0
  %v3925 = vmax.f32 %v3800, 0.0
  %v3926 = vmax.f32 %v3801, 0.0
  %v3927 = vmax.f32 %v3802, 0.0
  %v3928 = vmax.f32 %v3803, 0.0
  %v3929 = vmax.f32 %v3804, 0.0
  %v3930 = vmax.f32 %v3805, 0.0
  %v3931 = vmax.f32 %v3806, 0.0
  %v3932 = vmax.f32 %v3807, 0.0
  %v3933 = vmax.f32 %v3808, 0.0
  %v3934 = vmax.f32 %v3809, 0.0
  %v3935 = vmax.f32 %v3810, 0.0
  %v3936 = vmax.f32 %v3811, 0.0
  %v3937 = vmax.f32 %v3812, 0.0
  %v3938 = vmax.f32 %v3813, 0.0
  %v3939 = vmax.f32 %v3814, 0.0
  %v3940 = vmax.f32 %v3815, 0.0
  %v3941 = vmax.f32 %v3816, 0.0
  %v3942 = vmax.f32 %v3817, 0.0
  %v3943 = vmax.f32 %v3818, 0.0
  %v3944 = vmax.f32 %v3819, 0.0
  %v3945 = vmax.f32 %v3820, 0.0
  %v3946 = vmax.f32 %v3821, 0.0
  %v3947 = vmax.f32 %v3822, 0.0
  %v3948 = vmax.f32 %v3823, 0.0
  %v3949 = vmax.f32 %v3824, 0.0
  %v3950 = vmax.f32 %v3825, 0.0
  %v3951 = vmax.f32 %v3826, 0.0
  %v3952 = vmax.f32 %v3827, 0.0
  %v3953 = vmax.f32 %v3828, 0.0
  %v3954 = vmax.f32 %v3829, 0.0
  %v3955 = vmax.f32 %v3830, 0.0
  %v3956 = vmax.f32 %v3831, 0.0
  %v3957 = vmax.f32 %v3832, 0.0
  %v3958 = vmax.f32 %v3833, 0.0
  %v3959 = vmax.f32 %v3834, 0.0
  %v3960 = vmax.f32 %v3835, 0.0
  %v3961 = vmax.f32 %v3836, 0.0
  %v3962 = vmax.f32 %v3837, 0.0
  %v3963 = vmax.f32 %v3838, 0.0
  %v3964 = vmax.f32 %v3839, 0.0
  %v3965 = vmax.f32 %v3840, 0.0
  %v3966 = vmax.f32 %v3841, 0.0
  %v3967 = vmax.f32 %v3842, 0.0
  %v3968 = vmax.f32 %v3843, 0.0
  %v3969 = vmax.f32 %v3844, 0.0
  %v3970 = vmax.f32 %v3845, 0.0
  %v3971 = vmax.f32 %v3846, 0.0
  %v3972 = vmax.f32 %v3847, 0.0
  %v3973 = vmax.f32 %v3848, 0.0
  %v3974 = vmax.f32 %v3849, 0.0
  %v3975 = vmax.f32 %v3850, 0.0
  %v3976 = vmax.f32 %v3851, 0.0
  %v3977 = vmax.f32 %v3852, 0.0
  %v3978 = vmax.f32 %v3853, 0.0
  %v3979 = vmax.f32 %v3854, 0.0
  %v3980 = vmax.f32 %v3855, 0.0
  %v3981 = vmax.f32 %v3856, 0.0
  %v3982 = vmax.f32 %v3857, 0.0
  %v3983 = vmax.f32 %v3858, 0.0
  %v3984 = vmax.f32 %v3859, 0.0
  %v3985 = vmax.f32 %v3860, 0.0
  %v3986 = vmax.f32 %v3861, 0.0
  %v3987 = vmax.f32 %v3862, 0.0
  %v3988 = vmax.f32 %v3863, 0.0
  %v3989 = vmax.f32 %v3864, 0.0
  %v3990 = vmax.f32 %v3865, 0.0
  %v3991 = vmax.f32 %v3866, 0.0
  %v3992 = vmax.f32 %v3867, 0.0
  %v3993 = vmax.f32 %v3868, 0.0
  %v3994 = vmax.f32 %v3869, 0.0
  %v3995 = vmax.f32 %v3870, 0.0
  %v3996 = vmax.f32 %v3871, 0.0
  %v3997 = vmax.f32 %v3872, 0.0
  %v3998 = vmax.f32 %v3873, 0.0
  %v3999 = vmax.f32 %v3874, 0.0
  %v4000 = vmax.f32 %v3875, 0.0
  %v4001 = vmax.f32 %v3876, 0.0
  %v4002 = vmax.f32 %v3877, 0.0
  %v4003 = vld [vmem:[%s7] sm:$0xff]
  %v4004 = vld [vmem:[%s7 + $0x8] sm:$0xff]
  %v4005 = vld [vmem:[%s7 + $0x10] sm:$0xff]
  %v4006 = vld [vmem:[%s7 + $0x18] sm:$0xff]
  %v4007 = vld [vmem:[%s8] sm:$0x1]
  %v4009 = vlaneseq
  %v4010 = vshrl.u32 %v4009, 7
  %v4011 = vsub.s32 0, %v4010
  %v4012 = vrot.slane %v4007, %v4011
  %vm4014 = vcmask 261120
  %v4016 = vsel %vm4014, %v3878, 0
  %v4019 = vsel %vm4014, %v3879, 0
  %v4022 = vsel %vm4014, %v3880, 0
  %v4025 = vsel %vm4014, %v3881, 0
  %v4028 = vsel %vm4014, %v3882, 0
  %v4031 = vsel %vm4014, %v3883, 0
  %v4034 = vsel %vm4014, %v3884, 0
  %v4037 = vsel %vm4014, %v3885, 0
  %v4040 = vsel %vm4014, %v3886, 0
  %v4043 = vsel %vm4014, %v3887, 0
  %v4046 = vsel %vm4014, %v3888, 0
  %v4049 = vsel %vm4014, %v3889, 0
  %v4052 = vsel %vm4014, %v3890, 0
  %v4055 = vsel %vm4014, %v3891, 0
  %v4058 = vsel %vm4014, %v3892, 0
  %v4061 = vsel %vm4014, %v3893, 0
  %v4064 = vsel %vm4014, %v3894, 0
  %v4067 = vsel %vm4014, %v3895, 0
  %v4070 = vsel %vm4014, %v3896, 0
  %v4073 = vsel %vm4014, %v3897, 0
  %v4076 = vsel %vm4014, %v3898, 0
  %v4079 = vsel %vm4014, %v3899, 0
  %v4082 = vsel %vm4014, %v3900, 0
  %v4085 = vsel %vm4014, %v3901, 0
  %v4088 = vsel %vm4014, %v3902, 0
  %v4091 = vsel %vm4014, %v3903, 0
  %v4094 = vsel %vm4014, %v3904, 0
  %v4097 = vsel %vm4014, %v3905, 0
  %v4100 = vsel %vm4014, %v3906, 0
  %v4103 = vsel %vm4014, %v3907, 0
  %v4106 = vsel %vm4014, %v3908, 0
  %v4109 = vsel %vm4014, %v3909, 0
  %v4112 = vsel %vm4014, %v3910, 0
  %v4115 = vsel %vm4014, %v3911, 0
  %v4118 = vsel %vm4014, %v3912, 0
  %v4121 = vsel %vm4014, %v3913, 0
  %v4124 = vsel %vm4014, %v3914, 0
  %v4127 = vsel %vm4014, %v3915, 0
  %v4130 = vsel %vm4014, %v3916, 0
  %v4133 = vsel %vm4014, %v3917, 0
  %v4136 = vsel %vm4014, %v3918, 0
  %v4139 = vsel %vm4014, %v3919, 0
  %v4142 = vsel %vm4014, %v3920, 0
  %v4145 = vsel %vm4014, %v3921, 0
  %v4148 = vsel %vm4014, %v3922, 0
  %v4151 = vsel %vm4014, %v3923, 0
  %v4154 = vsel %vm4014, %v3924, 0
  %v4157 = vsel %vm4014, %v3925, 0
  %v4160 = vsel %vm4014, %v3926, 0
  %v4163 = vsel %vm4014, %v3927, 0
  %v4166 = vsel %vm4014, %v3928, 0
  %v4169 = vsel %vm4014, %v3929, 0
  %v4172 = vsel %vm4014, %v3930, 0
  %v4175 = vsel %vm4014, %v3931, 0
  %v4178 = vsel %vm4014, %v3932, 0
  %v4181 = vsel %vm4014, %v3933, 0
  %v4184 = vsel %vm4014, %v3934, 0
  %v4187 = vsel %vm4014, %v3935, 0
  %v4190 = vsel %vm4014, %v3936, 0
  %v4193 = vsel %vm4014, %v3937, 0
  %v4196 = vsel %vm4014, %v3938, 0
  %v4199 = vsel %vm4014, %v3939, 0
  %v4202 = vsel %vm4014, %v3940, 0
  %v4205 = vsel %vm4014, %v3941, 0
  %v4208 = vsel %vm4014, %v3942, 0
  %v4211 = vsel %vm4014, %v3943, 0
  %v4214 = vsel %vm4014, %v3944, 0
  %v4217 = vsel %vm4014, %v3945, 0
  %v4220 = vsel %vm4014, %v3946, 0
  %v4223 = vsel %vm4014, %v3947, 0
  %v4226 = vsel %vm4014, %v3948, 0
  %v4229 = vsel %vm4014, %v3949, 0
  %v4232 = vsel %vm4014, %v3950, 0
  %v4235 = vsel %vm4014, %v3951, 0
  %v4238 = vsel %vm4014, %v3952, 0
  %v4241 = vsel %vm4014, %v3953, 0
  %v4244 = vsel %vm4014, %v3954, 0
  %v4247 = vsel %vm4014, %v3955, 0
  %v4250 = vsel %vm4014, %v3956, 0
  %v4253 = vsel %vm4014, %v3957, 0
  %v4256 = vsel %vm4014, %v3958, 0
  %v4259 = vsel %vm4014, %v3959, 0
  %v4262 = vsel %vm4014, %v3960, 0
  %v4265 = vsel %vm4014, %v3961, 0
  %v4268 = vsel %vm4014, %v3962, 0
  %v4271 = vsel %vm4014, %v3963, 0
  %v4274 = vsel %vm4014, %v3964, 0
  %v4277 = vsel %vm4014, %v3965, 0
  %v4280 = vsel %vm4014, %v3966, 0
  %v4283 = vsel %vm4014, %v3967, 0
  %v4286 = vsel %vm4014, %v3968, 0
  %v4289 = vsel %vm4014, %v3969, 0
  %v4292 = vsel %vm4014, %v3970, 0
  %v4295 = vsel %vm4014, %v3971, 0
  %v4298 = vsel %vm4014, %v3972, 0
  %v4301 = vsel %vm4014, %v3973, 0
  %v4304 = vsel %vm4014, %v3974, 0
  %v4307 = vsel %vm4014, %v3975, 0
  %v4310 = vsel %vm4014, %v3976, 0
  %v4313 = vsel %vm4014, %v3977, 0
  %v4316 = vsel %vm4014, %v3978, 0
  %v4319 = vsel %vm4014, %v3979, 0
  %v4322 = vsel %vm4014, %v3980, 0
  %v4325 = vsel %vm4014, %v3981, 0
  %v4328 = vsel %vm4014, %v3982, 0
  %v4331 = vsel %vm4014, %v3983, 0
  %v4334 = vsel %vm4014, %v3984, 0
  %v4337 = vsel %vm4014, %v3985, 0
  %v4340 = vsel %vm4014, %v3986, 0
  %v4343 = vsel %vm4014, %v3987, 0
  %v4346 = vsel %vm4014, %v3988, 0
  %v4349 = vsel %vm4014, %v3989, 0
  %v4352 = vsel %vm4014, %v3990, 0
  %v4355 = vsel %vm4014, %v3991, 0
  %v4358 = vsel %vm4014, %v3992, 0
  %v4361 = vsel %vm4014, %v3993, 0
  %v4364 = vsel %vm4014, %v3994, 0
  %v4367 = vsel %vm4014, %v3995, 0
  %v4370 = vsel %vm4014, %v3996, 0
  %v4373 = vsel %vm4014, %v3997, 0
  %v4376 = vsel %vm4014, %v3998, 0
  %v4379 = vsel %vm4014, %v3999, 0
  %v4382 = vsel %vm4014, %v4000, 0
  %v4385 = vsel %vm4014, %v4001, 0
  %v4388 = vsel %vm4014, %v4002, 0
  %4390 = vmatprep.subr.mxu0 0.0
  %4391 = vmatpush1.msra.mxu0 %v4003
  %4392 = vmatprep.subr.mxu0 0.0
  %4393 = vmatpush1.msra.mxu0 %v4004
  %4394 = vmatprep.subr.mxu0 0.0
  %4395 = vmatpush1.msra.mxu0 %v4005
  %4396 = vmatprep.subr.mxu0 0.0
  %4397 = vmatpush1.msra.mxu0 %v4006
  %4398 = vmatprep.subr.mxu0 0.0
  %4399 = vmatpush1.msra.mxu0 0.0
  %4400 = vmatprep.subr.mxu0 0.0
  %4401 = vmatpush1.msra.mxu0 0.0
  %4402 = vmatprep.subr.mxu0 0.0
  %4403 = vmatpush1.msra.mxu0 0.0
  %4404 = vmatprep.subr.mxu0 0.0
  %4405 = vmatpush1.msra.mxu0 0.0
  %4406 = vmatprep.subr.mxu0 0.0
  %4407 = vmatpush1.msra.mxu0 0.0
  %4408 = vmatprep.subr.mxu0 0.0
  %4409 = vmatpush1.msra.mxu0 0.0
  %4410 = vmatprep.subr.mxu0 0.0
  %4411 = vmatpush1.msra.mxu0 0.0
  %4412 = vmatprep.subr.mxu0 0.0
  %4413 = vmatpush1.msra.mxu0 0.0
  %4414 = vmatprep.subr.mxu0 0.0
  %4415 = vmatpush1.msra.mxu0 0.0
  %4416 = vmatprep.subr.mxu0 0.0
  %4417 = vmatpush1.msra.mxu0 0.0
  %4418 = vmatprep.subr.mxu0 0.0
  %4419 = vmatpush1.msra.mxu0 0.0
  %4420 = vmatprep.subr.mxu0 0.0
  %4421 = vmatpush1.msra.mxu0 0.0
  %4422 = vmatprep.subr.mxu0 0.0
  %4423 = vmatpush1.msra.mxu0 0.0
  %4424 = vmatprep.subr.mxu0 0.0
  %4425 = vmatpush1.msra.mxu0 0.0
  %4426 = vmatprep.subr.mxu0 0.0
  %4427 = vmatpush1.msra.mxu0 0.0
  %4428 = vmatprep.subr.mxu0 0.0
  %4429 = vmatpush1.msra.mxu0 0.0
  %4430 = vmatprep.subr.mxu0 0.0
  %4431 = vmatpush1.msra.mxu0 0.0
  %4432 = vmatprep.subr.mxu0 0.0
  %4433 = vmatpush1.msra.mxu0 0.0
  %4434 = vmatprep.subr.mxu0 0.0
  %4435 = vmatpush1.msra.mxu0 0.0
  %4436 = vmatprep.subr.mxu0 0.0
  %4437 = vmatpush1.msra.mxu0 0.0
  %4438 = vmatprep.subr.mxu0 0.0
  %4439 = vmatpush1.msra.mxu0 0.0
  %4440 = vmatprep.subr.mxu0 0.0
  %4441 = vmatpush1.msra.mxu0 0.0
  %4442 = vmatprep.subr.mxu0 0.0
  %4443 = vmatpush1.msra.mxu0 0.0
  %4444 = vmatprep.subr.mxu0 0.0
  %4445 = vmatpush1.msra.mxu0 0.0
  %4446 = vmatprep.subr.mxu0 0.0
  %4447 = vmatpush1.msra.mxu0 0.0
  %4448 = vmatprep.subr.mxu0 0.0
  %4449 = vmatpush1.msra.mxu0 0.0
  %4450 = vmatprep.subr.mxu0 0.0
  %4451 = vmatpush1.msra.mxu0 0.0
  %4452 = vmatprep.subr.mxu0 0.0
  %4453 = vmatpush1.msra.mxu0 0.0
  %4454 = vmatprep.mubr.f32.mxu0 0.0
  %4455 = vmatmul.mubr.f32.gmra.mrb[0].mxu0 %v4016
  %v4456 = vpop.f32.mrb[0].mxu0
  %v4457 = vadd.f32 %v4012, %v4456
  %v4458 = vpop.f32.mrb[0].mxu0
  %4459 = vmatprep.mubr.f32.mxu0 0.0
  %4460 = vmatmul.mubr.f32.gmra.mrb[0].mxu0 %v4019
  %v4461 = vpop.f32.mrb[0].mxu0
  %v4462 = vadd.f32 %v4012, %v4461
  %v4463 = vpop.f32.mrb[0].mxu0
  %4464 = vmatprep.mubr.f32.mxu0 0.0
  %4465 = vmatmul.mubr.f32.gmra.mrb[0].mxu0 %v4022
  %v4466 = vpop.f32.mrb[0].mxu0
  %v4467 = vadd.f32 %v4012, %v4466
  %v4468 = vpop.f32.mrb[0].mxu0
  %4469 = vmatprep.mubr.f32.mxu0 0.0
  %4470 = vmatmul.mubr.f32.gmra.mrb[0].mxu0 %v4025
  %v4471 = vpop.f32.mrb[0].mxu0
  %v4472 = vadd.f32 %v4012, %v4471
  %v4473 = vpop.f32.mrb[0].mxu0
  %4474 = vmatprep.mubr.f32.mxu0 0.0
  %4475 = vmatmul.mubr.f32.gmra.mrb[0].mxu0 %v4028
  %v4476 = vpop.f32.mrb[0].mxu0
  %v4477 = vadd.f32 %v4012, %v4476
  %v4478 = vpop.f32.mrb[0].mxu0
  %4479 = vmatprep.mubr.f32.mxu0 0.0
  %4480 = vmatmul.mubr.f32.gmra.mrb[0].mxu0 %v4031
  %v4481 = vpop.f32.mrb[0].mxu0
  %v4482 = vadd.f32 %v4012, %v4481
  %v4483 = vpop.f32.mrb[0].mxu0
  %4484 = vmatprep.mubr.f32.mxu0 0.0
  %4485 = vmatmul.mubr.f32.gmra.mrb[0].mxu0 %v4034
  %v4486 = vpop.f32.mrb[0].mxu0
  %v4487 = vadd.f32 %v4012, %v4486
  %v4488 = vpop.f32.mrb[0].mxu0
  %4489 = vmatprep.mubr.f32.mxu0 0.0
  %4490 = vmatmul.mubr.f32.gmra.mrb[0].mxu0 %v4037
  %v4491 = vpop.f32.mrb[0].mxu0
  %v4492 = vadd.f32 %v4012, %v4491
  %v4493 = vpop.f32.mrb[0].mxu0
  %4494 = vmatprep.mubr.f32.mxu0 0.0
  %4495 = vmatmul.mubr.f32.gmra.mrb[0].mxu0 %v4040
  %v4496 = vpop.f32.mrb[0].mxu0
  %v4497 = vadd.f32 %v4012, %v4496
  %v4498 = vpop.f32.mrb[0].mxu0
  %4499 = vmatprep.mubr.f32.mxu0 0.0
  %4500 = vmatmul.mubr.f32.gmra.mrb[0].mxu0 %v4043
  %v4501 = vpop.f32.mrb[0].mxu0
  %v4502 = vadd.f32 %v4012, %v4501
  %v4503 = vpop.f32.mrb[0].mxu0
  %4504 = vmatprep.mubr.f32.mxu0 0.0
  %4505 = vmatmul.mubr.f32.gmra.mrb[0].mxu0 %v4046
  %v4506 = vpop.f32.mrb[0].mxu0
  %v4507 = vadd.f32 %v4012, %v4506
  %v4508 = vpop.f32.mrb[0].mxu0
  %4509 = vmatprep.mubr.f32.mxu0 0.0
  %4510 = vmatmul.mubr.f32.gmra.mrb[0].mxu0 %v4049
  %v4511 = vpop.f32.mrb[0].mxu0
  %v4512 = vadd.f32 %v4012, %v4511
  %v4513 = vpop.f32.mrb[0].mxu0
  %4514 = vmatprep.mubr.f32.mxu0 0.0
  %4515 = vmatmul.mubr.f32.gmra.mrb[0].mxu0 %v4052
  %v4516 = vpop.f32.mrb[0].mxu0
  %v4517 = vadd.f32 %v4012, %v4516
  %v4518 = vpop.f32.mrb[0].mxu0
  %4519 = vmatprep.mubr.f32.mxu0 0.0
  %4520 = vmatmul.mubr.f32.gmra.mrb[0].mxu0 %v4055
  %v4521 = vpop.f32.mrb[0].mxu0
  %v4522 = vadd.f32 %v4012, %v4521
  %v4523 = vpop.f32.mrb[0].mxu0
  %4524 = vmatprep.mubr.f32.mxu0 0.0
  %4525 = vmatmul.mubr.f32.gmra.mrb[0].mxu0 %v4058
  %v4526 = vpop.f32.mrb[0].mxu0
  %v4527 = vadd.f32 %v4012, %v4526
  %v4528 = vpop.f32.mrb[0].mxu0
  %4529 = vmatprep.mubr.f32.mxu0 0.0
  %4530 = vmatmul.mubr.f32.gmra.mrb[0].mxu0 %v4061
  %v4531 = vpop.f32.mrb[0].mxu0
  %v4532 = vadd.f32 %v4012, %v4531
  %v4533 = vpop.f32.mrb[0].mxu0
  %4534 = vmatprep.mubr.f32.mxu0 0.0
  %4535 = vmatmul.mubr.f32.gmra.mrb[0].mxu0 %v4064
  %v4536 = vpop.f32.mrb[0].mxu0
  %v4537 = vadd.f32 %v4012, %v4536
  %v4538 = vpop.f32.mrb[0].mxu0
  %4539 = vmatprep.mubr.f32.mxu0 0.0
  %4540 = vmatmul.mubr.f32.gmra.mrb[0].mxu0 %v4067
  %v4541 = vpop.f32.mrb[0].mxu0
  %v4542 = vadd.f32 %v4012, %v4541
  %v4543 = vpop.f32.mrb[0].mxu0
  %4544 = vmatprep.mubr.f32.mxu0 0.0
  %4545 = vmatmul.mubr.f32.gmra.mrb[0].mxu0 %v4070
  %v4546 = vpop.f32.mrb[0].mxu0
  %v4547 = vadd.f32 %v4012, %v4546
  %v4548 = vpop.f32.mrb[0].mxu0
  %4549 = vmatprep.mubr.f32.mxu0 0.0
  %4550 = vmatmul.mubr.f32.gmra.mrb[0].mxu0 %v4073
  %v4551 = vpop.f32.mrb[0].mxu0
  %v4552 = vadd.f32 %v4012, %v4551
  %v4553 = vpop.f32.mrb[0].mxu0
  %4554 = vmatprep.mubr.f32.mxu0 0.0
  %4555 = vmatmul.mubr.f32.gmra.mrb[0].mxu0 %v4076
  %v4556 = vpop.f32.mrb[0].mxu0
  %v4557 = vadd.f32 %v4012, %v4556
  %v4558 = vpop.f32.mrb[0].mxu0
  %4559 = vmatprep.mubr.f32.mxu0 0.0
  %4560 = vmatmul.mubr.f32.gmra.mrb[0].mxu0 %v4079
  %v4561 = vpop.f32.mrb[0].mxu0
  %v4562 = vadd.f32 %v4012, %v4561
  %v4563 = vpop.f32.mrb[0].mxu0
  %4564 = vmatprep.mubr.f32.mxu0 0.0
  %4565 = vmatmul.mubr.f32.gmra.mrb[0].mxu0 %v4082
  %v4566 = vpop.f32.mrb[0].mxu0
  %v4567 = vadd.f32 %v4012, %v4566
  %v4568 = vpop.f32.mrb[0].mxu0
  %4569 = vmatprep.mubr.f32.mxu0 0.0
  %4570 = vmatmul.mubr.f32.gmra.mrb[0].mxu0 %v4085
  %v4571 = vpop.f32.mrb[0].mxu0
  %v4572 = vadd.f32 %v4012, %v4571
  %v4573 = vpop.f32.mrb[0].mxu0
  %4574 = vmatprep.mubr.f32.mxu0 0.0
  %4575 = vmatmul.mubr.f32.gmra.mrb[0].mxu0 %v4088
  %v4576 = vpop.f32.mrb[0].mxu0
  %v4577 = vadd.f32 %v4012, %v4576
  %v4578 = vpop.f32.mrb[0].mxu0
  %4579 = vmatprep.mubr.f32.mxu0 0.0
  %4580 = vmatmul.mubr.f32.gmra.mrb[0].mxu0 %v4091
  %v4581 = vpop.f32.mrb[0].mxu0
  %v4582 = vadd.f32 %v4012, %v4581
  %v4583 = vpop.f32.mrb[0].mxu0
  %4584 = vmatprep.mubr.f32.mxu0 0.0
  %4585 = vmatmul.mubr.f32.gmra.mrb[0].mxu0 %v4094
  %v4586 = vpop.f32.mrb[0].mxu0
  %v4587 = vadd.f32 %v4012, %v4586
  %v4588 = vpop.f32.mrb[0].mxu0
  %4589 = vmatprep.mubr.f32.mxu0 0.0
  %4590 = vmatmul.mubr.f32.gmra.mrb[0].mxu0 %v4097
  %v4591 = vpop.f32.mrb[0].mxu0
  %v4592 = vadd.f32 %v4012, %v4591
  %v4593 = vpop.f32.mrb[0].mxu0
  %4594 = vmatprep.mubr.f32.mxu0 0.0
  %4595 = vmatmul.mubr.f32.gmra.mrb[0].mxu0 %v4100
  %v4596 = vpop.f32.mrb[0].mxu0
  %v4597 = vadd.f32 %v4012, %v4596
  %v4598 = vpop.f32.mrb[0].mxu0
  %4599 = vmatprep.mubr.f32.mxu0 0.0
  %4600 = vmatmul.mubr.f32.gmra.mrb[0].mxu0 %v4103
  %v4601 = vpop.f32.mrb[0].mxu0
  %v4602 = vadd.f32 %v4012, %v4601
  %v4603 = vpop.f32.mrb[0].mxu0
  %4604 = vmatprep.mubr.f32.mxu0 0.0
  %4605 = vmatmul.mubr.f32.gmra.mrb[0].mxu0 %v4106
  %v4606 = vpop.f32.mrb[0].mxu0
  %v4607 = vadd.f32 %v4012, %v4606
  %v4608 = vpop.f32.mrb[0].mxu0
  %4609 = vmatprep.mubr.f32.mxu0 0.0
  %4610 = vmatmul.mubr.f32.gmra.mrb[0].mxu0 %v4109
  %v4611 = vpop.f32.mrb[0].mxu0
  %v4612 = vadd.f32 %v4012, %v4611
  %v4613 = vpop.f32.mrb[0].mxu0
  %4614 = vmatprep.mubr.f32.mxu0 0.0
  %4615 = vmatmul.mubr.f32.gmra.mrb[0].mxu0 %v4112
  %v4616 = vpop.f32.mrb[0].mxu0
  %v4617 = vadd.f32 %v4012, %v4616
  %v4618 = vpop.f32.mrb[0].mxu0
  %4619 = vmatprep.mubr.f32.mxu0 0.0
  %4620 = vmatmul.mubr.f32.gmra.mrb[0].mxu0 %v4115
  %v4621 = vpop.f32.mrb[0].mxu0
  %v4622 = vadd.f32 %v4012, %v4621
  %v4623 = vpop.f32.mrb[0].mxu0
  %4624 = vmatprep.mubr.f32.mxu0 0.0
  %4625 = vmatmul.mubr.f32.gmra.mrb[0].mxu0 %v4118
  %v4626 = vpop.f32.mrb[0].mxu0
  %v4627 = vadd.f32 %v4012, %v4626
  %v4628 = vpop.f32.mrb[0].mxu0
  %4629 = vmatprep.mubr.f32.mxu0 0.0
  %4630 = vmatmul.mubr.f32.gmra.mrb[0].mxu0 %v4121
  %v4631 = vpop.f32.mrb[0].mxu0
  %v4632 = vadd.f32 %v4012, %v4631
  %v4633 = vpop.f32.mrb[0].mxu0
  %4634 = vmatprep.mubr.f32.mxu0 0.0
  %4635 = vmatmul.mubr.f32.gmra.mrb[0].mxu0 %v4124
  %v4636 = vpop.f32.mrb[0].mxu0
  %v4637 = vadd.f32 %v4012, %v4636
  %v4638 = vpop.f32.mrb[0].mxu0
  %4639 = vmatprep.mubr.f32.mxu0 0.0
  %4640 = vmatmul.mubr.f32.gmra.mrb[0].mxu0 %v4127
  %v4641 = vpop.f32.mrb[0].mxu0
  %v4642 = vadd.f32 %v4012, %v4641
  %v4643 = vpop.f32.mrb[0].mxu0
  %4644 = vmatprep.mubr.f32.mxu0 0.0
  %4645 = vmatmul.mubr.f32.gmra.mrb[0].mxu0 %v4130
  %v4646 = vpop.f32.mrb[0].mxu0
  %v4647 = vadd.f32 %v4012, %v4646
  %v4648 = vpop.f32.mrb[0].mxu0
  %4649 = vmatprep.mubr.f32.mxu0 0.0
  %4650 = vmatmul.mubr.f32.gmra.mrb[0].mxu0 %v4133
  %v4651 = vpop.f32.mrb[0].mxu0
  %v4652 = vadd.f32 %v4012, %v4651
  %v4653 = vpop.f32.mrb[0].mxu0
  %4654 = vmatprep.mubr.f32.mxu0 0.0
  %4655 = vmatmul.mubr.f32.gmra.mrb[0].mxu0 %v4136
  %v4656 = vpop.f32.mrb[0].mxu0
  %v4657 = vadd.f32 %v4012, %v4656
  %v4658 = vpop.f32.mrb[0].mxu0
  %4659 = vmatprep.mubr.f32.mxu0 0.0
  %4660 = vmatmul.mubr.f32.gmra.mrb[0].mxu0 %v4139
  %v4661 = vpop.f32.mrb[0].mxu0
  %v4662 = vadd.f32 %v4012, %v4661
  %v4663 = vpop.f32.mrb[0].mxu0
  %4664 = vmatprep.mubr.f32.mxu0 0.0
  %4665 = vmatmul.mubr.f32.gmra.mrb[0].mxu0 %v4142
  %v4666 = vpop.f32.mrb[0].mxu0
  %v4667 = vadd.f32 %v4012, %v4666
  %v4668 = vpop.f32.mrb[0].mxu0
  %4669 = vmatprep.mubr.f32.mxu0 0.0
  %4670 = vmatmul.mubr.f32.gmra.mrb[0].mxu0 %v4145
  %v4671 = vpop.f32.mrb[0].mxu0
  %v4672 = vadd.f32 %v4012, %v4671
  %v4673 = vpop.f32.mrb[0].mxu0
  %4674 = vmatprep.mubr.f32.mxu0 0.0
  %4675 = vmatmul.mubr.f32.gmra.mrb[0].mxu0 %v4148
  %v4676 = vpop.f32.mrb[0].mxu0
  %v4677 = vadd.f32 %v4012, %v4676
  %v4678 = vpop.f32.mrb[0].mxu0
  %4679 = vmatprep.mubr.f32.mxu0 0.0
  %4680 = vmatmul.mubr.f32.gmra.mrb[0].mxu0 %v4151
  %v4681 = vpop.f32.mrb[0].mxu0
  %v4682 = vadd.f32 %v4012, %v4681
  %v4683 = vpop.f32.mrb[0].mxu0
  %4684 = vmatprep.mubr.f32.mxu0 0.0
  %4685 = vmatmul.mubr.f32.gmra.mrb[0].mxu0 %v4154
  %v4686 = vpop.f32.mrb[0].mxu0
  %v4687 = vadd.f32 %v4012, %v4686
  %v4688 = vpop.f32.mrb[0].mxu0
  %4689 = vmatprep.mubr.f32.mxu0 0.0
  %4690 = vmatmul.mubr.f32.gmra.mrb[0].mxu0 %v4157
  %v4691 = vpop.f32.mrb[0].mxu0
  %v4692 = vadd.f32 %v4012, %v4691
  %v4693 = vpop.f32.mrb[0].mxu0
  %4694 = vmatprep.mubr.f32.mxu0 0.0
  %4695 = vmatmul.mubr.f32.gmra.mrb[0].mxu0 %v4160
  %v4696 = vpop.f32.mrb[0].mxu0
  %v4697 = vadd.f32 %v4012, %v4696
  %v4698 = vpop.f32.mrb[0].mxu0
  %4699 = vmatprep.mubr.f32.mxu0 0.0
  %4700 = vmatmul.mubr.f32.gmra.mrb[0].mxu0 %v4163
  %v4701 = vpop.f32.mrb[0].mxu0
  %v4702 = vadd.f32 %v4012, %v4701
  %v4703 = vpop.f32.mrb[0].mxu0
  %4704 = vmatprep.mubr.f32.mxu0 0.0
  %4705 = vmatmul.mubr.f32.gmra.mrb[0].mxu0 %v4166
  %v4706 = vpop.f32.mrb[0].mxu0
  %v4707 = vadd.f32 %v4012, %v4706
  %v4708 = vpop.f32.mrb[0].mxu0
  %4709 = vmatprep.mubr.f32.mxu0 0.0
  %4710 = vmatmul.mubr.f32.gmra.mrb[0].mxu0 %v4169
  %v4711 = vpop.f32.mrb[0].mxu0
  %v4712 = vadd.f32 %v4012, %v4711
  %v4713 = vpop.f32.mrb[0].mxu0
  %4714 = vmatprep.mubr.f32.mxu0 0.0
  %4715 = vmatmul.mubr.f32.gmra.mrb[0].mxu0 %v4172
  %v4716 = vpop.f32.mrb[0].mxu0
  %v4717 = vadd.f32 %v4012, %v4716
  %v4718 = vpop.f32.mrb[0].mxu0
  %4719 = vmatprep.mubr.f32.mxu0 0.0
  %4720 = vmatmul.mubr.f32.gmra.mrb[0].mxu0 %v4175
  %v4721 = vpop.f32.mrb[0].mxu0
  %v4722 = vadd.f32 %v4012, %v4721
  %v4723 = vpop.f32.mrb[0].mxu0
  %4724 = vmatprep.mubr.f32.mxu0 0.0
  %4725 = vmatmul.mubr.f32.gmra.mrb[0].mxu0 %v4178
  %v4726 = vpop.f32.mrb[0].mxu0
  %v4727 = vadd.f32 %v4012, %v4726
  %v4728 = vpop.f32.mrb[0].mxu0
  %4729 = vmatprep.mubr.f32.mxu0 0.0
  %4730 = vmatmul.mubr.f32.gmra.mrb[0].mxu0 %v4181
  %v4731 = vpop.f32.mrb[0].mxu0
  %v4732 = vadd.f32 %v4012, %v4731
  %v4733 = vpop.f32.mrb[0].mxu0
  %4734 = vmatprep.mubr.f32.mxu0 0.0
  %4735 = vmatmul.mubr.f32.gmra.mrb[0].mxu0 %v4184
  %v4736 = vpop.f32.mrb[0].mxu0
  %v4737 = vadd.f32 %v4012, %v4736
  %v4738 = vpop.f32.mrb[0].mxu0
  %4739 = vmatprep.mubr.f32.mxu0 0.0
  %4740 = vmatmul.mubr.f32.gmra.mrb[0].mxu0 %v4187
  %v4741 = vpop.f32.mrb[0].mxu0
  %v4742 = vadd.f32 %v4012, %v4741
  %v4743 = vpop.f32.mrb[0].mxu0
  %4744 = vmatprep.mubr.f32.mxu0 0.0
  %4745 = vmatmul.mubr.f32.gmra.mrb[0].mxu0 %v4190
  %v4746 = vpop.f32.mrb[0].mxu0
  %v4747 = vadd.f32 %v4012, %v4746
  %v4748 = vpop.f32.mrb[0].mxu0
  %4749 = vmatprep.mubr.f32.mxu0 0.0
  %4750 = vmatmul.mubr.f32.gmra.mrb[0].mxu0 %v4193
  %v4751 = vpop.f32.mrb[0].mxu0
  %v4752 = vadd.f32 %v4012, %v4751
  %v4753 = vpop.f32.mrb[0].mxu0
  %4754 = vmatprep.mubr.f32.mxu0 0.0
  %4755 = vmatmul.mubr.f32.gmra.mrb[0].mxu0 %v4196
  %v4756 = vpop.f32.mrb[0].mxu0
  %v4757 = vadd.f32 %v4012, %v4756
  %v4758 = vpop.f32.mrb[0].mxu0
  %4759 = vmatprep.mubr.f32.mxu0 0.0
  %4760 = vmatmul.mubr.f32.gmra.mrb[0].mxu0 %v4199
  %v4761 = vpop.f32.mrb[0].mxu0
  %v4762 = vadd.f32 %v4012, %v4761
  %v4763 = vpop.f32.mrb[0].mxu0
  %4764 = vmatprep.mubr.f32.mxu0 0.0
  %4765 = vmatmul.mubr.f32.gmra.mrb[0].mxu0 %v4202
  %v4766 = vpop.f32.mrb[0].mxu0
  %v4767 = vadd.f32 %v4012, %v4766
  %v4768 = vpop.f32.mrb[0].mxu0
  %4769 = vmatprep.mubr.f32.mxu0 0.0
  %4770 = vmatmul.mubr.f32.gmra.mrb[0].mxu0 %v4205
  %v4771 = vpop.f32.mrb[0].mxu0
  %v4772 = vadd.f32 %v4012, %v4771
  %v4773 = vpop.f32.mrb[0].mxu0
  %4774 = vmatprep.mubr.f32.mxu0 0.0
  %4775 = vmatmul.mubr.f32.gmra.mrb[0].mxu0 %v4208
  %v4776 = vpop.f32.mrb[0].mxu0
  %v4777 = vadd.f32 %v4012, %v4776
  %v4778 = vpop.f32.mrb[0].mxu0
  %4779 = vmatprep.mubr.f32.mxu0 0.0
  %4780 = vmatmul.mubr.f32.gmra.mrb[0].mxu0 %v4211
  %v4781 = vpop.f32.mrb[0].mxu0
  %v4782 = vadd.f32 %v4012, %v4781
  %v4783 = vpop.f32.mrb[0].mxu0
  %4784 = vmatprep.mubr.f32.mxu0 0.0
  %4785 = vmatmul.mubr.f32.gmra.mrb[0].mxu0 %v4214
  %v4786 = vpop.f32.mrb[0].mxu0
  %v4787 = vadd.f32 %v4012, %v4786
  %v4788 = vpop.f32.mrb[0].mxu0
  %4789 = vmatprep.mubr.f32.mxu0 0.0
  %4790 = vmatmul.mubr.f32.gmra.mrb[0].mxu0 %v4217
  %v4791 = vpop.f32.mrb[0].mxu0
  %v4792 = vadd.f32 %v4012, %v4791
  %v4793 = vpop.f32.mrb[0].mxu0
  %4794 = vmatprep.mubr.f32.mxu0 0.0
  %4795 = vmatmul.mubr.f32.gmra.mrb[0].mxu0 %v4220
  %v4796 = vpop.f32.mrb[0].mxu0
  %v4797 = vadd.f32 %v4012, %v4796
  %v4798 = vpop.f32.mrb[0].mxu0
  %4799 = vmatprep.mubr.f32.mxu0 0.0
  %4800 = vmatmul.mubr.f32.gmra.mrb[0].mxu0 %v4223
  %v4801 = vpop.f32.mrb[0].mxu0
  %v4802 = vadd.f32 %v4012, %v4801
  %v4803 = vpop.f32.mrb[0].mxu0
  %4804 = vmatprep.mubr.f32.mxu0 0.0
  %4805 = vmatmul.mubr.f32.gmra.mrb[0].mxu0 %v4226
  %v4806 = vpop.f32.mrb[0].mxu0
  %v4807 = vadd.f32 %v4012, %v4806
  %v4808 = vpop.f32.mrb[0].mxu0
  %4809 = vmatprep.mubr.f32.mxu0 0.0
  %4810 = vmatmul.mubr.f32.gmra.mrb[0].mxu0 %v4229
  %v4811 = vpop.f32.mrb[0].mxu0
  %v4812 = vadd.f32 %v4012, %v4811
  %v4813 = vpop.f32.mrb[0].mxu0
  %4814 = vmatprep.mubr.f32.mxu0 0.0
  %4815 = vmatmul.mubr.f32.gmra.mrb[0].mxu0 %v4232
  %v4816 = vpop.f32.mrb[0].mxu0
  %v4817 = vadd.f32 %v4012, %v4816
  %v4818 = vpop.f32.mrb[0].mxu0
  %4819 = vmatprep.mubr.f32.mxu0 0.0
  %4820 = vmatmul.mubr.f32.gmra.mrb[0].mxu0 %v4235
  %v4821 = vpop.f32.mrb[0].mxu0
  %v4822 = vadd.f32 %v4012, %v4821
  %v4823 = vpop.f32.mrb[0].mxu0
  %4824 = vmatprep.mubr.f32.mxu0 0.0
  %4825 = vmatmul.mubr.f32.gmra.mrb[0].mxu0 %v4238
  %v4826 = vpop.f32.mrb[0].mxu0
  %v4827 = vadd.f32 %v4012, %v4826
  %v4828 = vpop.f32.mrb[0].mxu0
  %4829 = vmatprep.mubr.f32.mxu0 0.0
  %4830 = vmatmul.mubr.f32.gmra.mrb[0].mxu0 %v4241
  %v4831 = vpop.f32.mrb[0].mxu0
  %v4832 = vadd.f32 %v4012, %v4831
  %v4833 = vpop.f32.mrb[0].mxu0
  %4834 = vmatprep.mubr.f32.mxu0 0.0
  %4835 = vmatmul.mubr.f32.gmra.mrb[0].mxu0 %v4244
  %v4836 = vpop.f32.mrb[0].mxu0
  %v4837 = vadd.f32 %v4012, %v4836
  %v4838 = vpop.f32.mrb[0].mxu0
  %4839 = vmatprep.mubr.f32.mxu0 0.0
  %4840 = vmatmul.mubr.f32.gmra.mrb[0].mxu0 %v4247
  %v4841 = vpop.f32.mrb[0].mxu0
  %v4842 = vadd.f32 %v4012, %v4841
  %v4843 = vpop.f32.mrb[0].mxu0
  %4844 = vmatprep.mubr.f32.mxu0 0.0
  %4845 = vmatmul.mubr.f32.gmra.mrb[0].mxu0 %v4250
  %v4846 = vpop.f32.mrb[0].mxu0
  %v4847 = vadd.f32 %v4012, %v4846
  %v4848 = vpop.f32.mrb[0].mxu0
  %4849 = vmatprep.mubr.f32.mxu0 0.0
  %4850 = vmatmul.mubr.f32.gmra.mrb[0].mxu0 %v4253
  %v4851 = vpop.f32.mrb[0].mxu0
  %v4852 = vadd.f32 %v4012, %v4851
  %v4853 = vpop.f32.mrb[0].mxu0
  %4854 = vmatprep.mubr.f32.mxu0 0.0
  %4855 = vmatmul.mubr.f32.gmra.mrb[0].mxu0 %v4256
  %v4856 = vpop.f32.mrb[0].mxu0
  %v4857 = vadd.f32 %v4012, %v4856
  %v4858 = vpop.f32.mrb[0].mxu0
  %4859 = vmatprep.mubr.f32.mxu0 0.0
  %4860 = vmatmul.mubr.f32.gmra.mrb[0].mxu0 %v4259
  %v4861 = vpop.f32.mrb[0].mxu0
  %v4862 = vadd.f32 %v4012, %v4861
  %v4863 = vpop.f32.mrb[0].mxu0
  %4864 = vmatprep.mubr.f32.mxu0 0.0
  %4865 = vmatmul.mubr.f32.gmra.mrb[0].mxu0 %v4262
  %v4866 = vpop.f32.mrb[0].mxu0
  %v4867 = vadd.f32 %v4012, %v4866
  %v4868 = vpop.f32.mrb[0].mxu0
  %4869 = vmatprep.mubr.f32.mxu0 0.0
  %4870 = vmatmul.mubr.f32.gmra.mrb[0].mxu0 %v4265
  %v4871 = vpop.f32.mrb[0].mxu0
  %v4872 = vadd.f32 %v4012, %v4871
  %v4873 = vpop.f32.mrb[0].mxu0
  %4874 = vmatprep.mubr.f32.mxu0 0.0
  %4875 = vmatmul.mubr.f32.gmra.mrb[0].mxu0 %v4268
  %v4876 = vpop.f32.mrb[0].mxu0
  %v4877 = vadd.f32 %v4012, %v4876
  %v4878 = vpop.f32.mrb[0].mxu0
  %4879 = vmatprep.mubr.f32.mxu0 0.0
  %4880 = vmatmul.mubr.f32.gmra.mrb[0].mxu0 %v4271
  %v4881 = vpop.f32.mrb[0].mxu0
  %v4882 = vadd.f32 %v4012, %v4881
  %v4883 = vpop.f32.mrb[0].mxu0
  %4884 = vmatprep.mubr.f32.mxu0 0.0
  %4885 = vmatmul.mubr.f32.gmra.mrb[0].mxu0 %v4274
  %v4886 = vpop.f32.mrb[0].mxu0
  %v4887 = vadd.f32 %v4012, %v4886
  %v4888 = vpop.f32.mrb[0].mxu0
  %4889 = vmatprep.mubr.f32.mxu0 0.0
  %4890 = vmatmul.mubr.f32.gmra.mrb[0].mxu0 %v4277
  %v4891 = vpop.f32.mrb[0].mxu0
  %v4892 = vadd.f32 %v4012, %v4891
  %v4893 = vpop.f32.mrb[0].mxu0
  %4894 = vmatprep.mubr.f32.mxu0 0.0
  %4895 = vmatmul.mubr.f32.gmra.mrb[0].mxu0 %v4280
  %v4896 = vpop.f32.mrb[0].mxu0
  %v4897 = vadd.f32 %v4012, %v4896
  %v4898 = vpop.f32.mrb[0].mxu0
  %4899 = vmatprep.mubr.f32.mxu0 0.0
  %4900 = vmatmul.mubr.f32.gmra.mrb[0].mxu0 %v4283
  %v4901 = vpop.f32.mrb[0].mxu0
  %v4902 = vadd.f32 %v4012, %v4901
  %v4903 = vpop.f32.mrb[0].mxu0
  %4904 = vmatprep.mubr.f32.mxu0 0.0
  %4905 = vmatmul.mubr.f32.gmra.mrb[0].mxu0 %v4286
  %v4906 = vpop.f32.mrb[0].mxu0
  %v4907 = vadd.f32 %v4012, %v4906
  %v4908 = vpop.f32.mrb[0].mxu0
  %4909 = vmatprep.mubr.f32.mxu0 0.0
  %4910 = vmatmul.mubr.f32.gmra.mrb[0].mxu0 %v4289
  %v4911 = vpop.f32.mrb[0].mxu0
  %v4912 = vadd.f32 %v4012, %v4911
  %v4913 = vpop.f32.mrb[0].mxu0
  %4914 = vmatprep.mubr.f32.mxu0 0.0
  %4915 = vmatmul.mubr.f32.gmra.mrb[0].mxu0 %v4292
  %v4916 = vpop.f32.mrb[0].mxu0
  %v4917 = vadd.f32 %v4012, %v4916
  %v4918 = vpop.f32.mrb[0].mxu0
  %4919 = vmatprep.mubr.f32.mxu0 0.0
  %4920 = vmatmul.mubr.f32.gmra.mrb[0].mxu0 %v4295
  %v4921 = vpop.f32.mrb[0].mxu0
  %v4922 = vadd.f32 %v4012, %v4921
  %v4923 = vpop.f32.mrb[0].mxu0
  %4924 = vmatprep.mubr.f32.mxu0 0.0
  %4925 = vmatmul.mubr.f32.gmra.mrb[0].mxu0 %v4298
  %v4926 = vpop.f32.mrb[0].mxu0
  %v4927 = vadd.f32 %v4012, %v4926
  %v4928 = vpop.f32.mrb[0].mxu0
  %4929 = vmatprep.mubr.f32.mxu0 0.0
  %4930 = vmatmul.mubr.f32.gmra.mrb[0].mxu0 %v4301
  %v4931 = vpop.f32.mrb[0].mxu0
  %v4932 = vadd.f32 %v4012, %v4931
  %v4933 = vpop.f32.mrb[0].mxu0
  %4934 = vmatprep.mubr.f32.mxu0 0.0
  %4935 = vmatmul.mubr.f32.gmra.mrb[0].mxu0 %v4304
  %v4936 = vpop.f32.mrb[0].mxu0
  %v4937 = vadd.f32 %v4012, %v4936
  %v4938 = vpop.f32.mrb[0].mxu0
  %4939 = vmatprep.mubr.f32.mxu0 0.0
  %4940 = vmatmul.mubr.f32.gmra.mrb[0].mxu0 %v4307
  %v4941 = vpop.f32.mrb[0].mxu0
  %v4942 = vadd.f32 %v4012, %v4941
  %v4943 = vpop.f32.mrb[0].mxu0
  %4944 = vmatprep.mubr.f32.mxu0 0.0
  %4945 = vmatmul.mubr.f32.gmra.mrb[0].mxu0 %v4310
  %v4946 = vpop.f32.mrb[0].mxu0
  %v4947 = vadd.f32 %v4012, %v4946
  %v4948 = vpop.f32.mrb[0].mxu0
  %4949 = vmatprep.mubr.f32.mxu0 0.0
  %4950 = vmatmul.mubr.f32.gmra.mrb[0].mxu0 %v4313
  %v4951 = vpop.f32.mrb[0].mxu0
  %v4952 = vadd.f32 %v4012, %v4951
  %v4953 = vpop.f32.mrb[0].mxu0
  %4954 = vmatprep.mubr.f32.mxu0 0.0
  %4955 = vmatmul.mubr.f32.gmra.mrb[0].mxu0 %v4316
  %v4956 = vpop.f32.mrb[0].mxu0
  %v4957 = vadd.f32 %v4012, %v4956
  %v4958 = vpop.f32.mrb[0].mxu0
  %4959 = vmatprep.mubr.f32.mxu0 0.0
  %4960 = vmatmul.mubr.f32.gmra.mrb[0].mxu0 %v4319
  %v4961 = vpop.f32.mrb[0].mxu0
  %v4962 = vadd.f32 %v4012, %v4961
  %v4963 = vpop.f32.mrb[0].mxu0
  %4964 = vmatprep.mubr.f32.mxu0 0.0
  %4965 = vmatmul.mubr.f32.gmra.mrb[0].mxu0 %v4322
  %v4966 = vpop.f32.mrb[0].mxu0
  %v4967 = vadd.f32 %v4012, %v4966
  %v4968 = vpop.f32.mrb[0].mxu0
  %4969 = vmatprep.mubr.f32.mxu0 0.0
  %4970 = vmatmul.mubr.f32.gmra.mrb[0].mxu0 %v4325
  %v4971 = vpop.f32.mrb[0].mxu0
  %v4972 = vadd.f32 %v4012, %v4971
  %v4973 = vpop.f32.mrb[0].mxu0
  %4974 = vmatprep.mubr.f32.mxu0 0.0
  %4975 = vmatmul.mubr.f32.gmra.mrb[0].mxu0 %v4328
  %v4976 = vpop.f32.mrb[0].mxu0
  %v4977 = vadd.f32 %v4012, %v4976
  %v4978 = vpop.f32.mrb[0].mxu0
  %4979 = vmatprep.mubr.f32.mxu0 0.0
  %4980 = vmatmul.mubr.f32.gmra.mrb[0].mxu0 %v4331
  %v4981 = vpop.f32.mrb[0].mxu0
  %v4982 = vadd.f32 %v4012, %v4981
  %v4983 = vpop.f32.mrb[0].mxu0
  %4984 = vmatprep.mubr.f32.mxu0 0.0
  %4985 = vmatmul.mubr.f32.gmra.mrb[0].mxu0 %v4334
  %v4986 = vpop.f32.mrb[0].mxu0
  %v4987 = vadd.f32 %v4012, %v4986
  %v4988 = vpop.f32.mrb[0].mxu0
  %4989 = vmatprep.mubr.f32.mxu0 0.0
  %4990 = vmatmul.mubr.f32.gmra.mrb[0].mxu0 %v4337
  %v4991 = vpop.f32.mrb[0].mxu0
  %v4992 = vadd.f32 %v4012, %v4991
  %v4993 = vpop.f32.mrb[0].mxu0
  %4994 = vmatprep.mubr.f32.mxu0 0.0
  %4995 = vmatmul.mubr.f32.gmra.mrb[0].mxu0 %v4340
  %v4996 = vpop.f32.mrb[0].mxu0
  %v4997 = vadd.f32 %v4012, %v4996
  %v4998 = vpop.f32.mrb[0].mxu0
  %4999 = vmatprep.mubr.f32.mxu0 0.0
  %5000 = vmatmul.mubr.f32.gmra.mrb[0].mxu0 %v4343
  %v5001 = vpop.f32.mrb[0].mxu0
  %v5002 = vadd.f32 %v4012, %v5001
  %v5003 = vpop.f32.mrb[0].mxu0
  %5004 = vmatprep.mubr.f32.mxu0 0.0
  %5005 = vmatmul.mubr.f32.gmra.mrb[0].mxu0 %v4346
  %v5006 = vpop.f32.mrb[0].mxu0
  %v5007 = vadd.f32 %v4012, %v5006
  %v5008 = vpop.f32.mrb[0].mxu0
  %5009 = vmatprep.mubr.f32.mxu0 0.0
  %5010 = vmatmul.mubr.f32.gmra.mrb[0].mxu0 %v4349
  %v5011 = vpop.f32.mrb[0].mxu0
  %v5012 = vadd.f32 %v4012, %v5011
  %v5013 = vpop.f32.mrb[0].mxu0
  %5014 = vmatprep.mubr.f32.mxu0 0.0
  %5015 = vmatmul.mubr.f32.gmra.mrb[0].mxu0 %v4352
  %v5016 = vpop.f32.mrb[0].mxu0
  %v5017 = vadd.f32 %v4012, %v5016
  %v5018 = vpop.f32.mrb[0].mxu0
  %5019 = vmatprep.mubr.f32.mxu0 0.0
  %5020 = vmatmul.mubr.f32.gmra.mrb[0].mxu0 %v4355
  %v5021 = vpop.f32.mrb[0].mxu0
  %v5022 = vadd.f32 %v4012, %v5021
  %v5023 = vpop.f32.mrb[0].mxu0
  %5024 = vmatprep.mubr.f32.mxu0 0.0
  %5025 = vmatmul.mubr.f32.gmra.mrb[0].mxu0 %v4358
  %v5026 = vpop.f32.mrb[0].mxu0
  %v5027 = vadd.f32 %v4012, %v5026
  %v5028 = vpop.f32.mrb[0].mxu0
  %5029 = vmatprep.mubr.f32.mxu0 0.0
  %5030 = vmatmul.mubr.f32.gmra.mrb[0].mxu0 %v4361
  %v5031 = vpop.f32.mrb[0].mxu0
  %v5032 = vadd.f32 %v4012, %v5031
  %v5033 = vpop.f32.mrb[0].mxu0
  %5034 = vmatprep.mubr.f32.mxu0 0.0
  %5035 = vmatmul.mubr.f32.gmra.mrb[0].mxu0 %v4364
  %v5036 = vpop.f32.mrb[0].mxu0
  %v5037 = vadd.f32 %v4012, %v5036
  %v5038 = vpop.f32.mrb[0].mxu0
  %5039 = vmatprep.mubr.f32.mxu0 0.0
  %5040 = vmatmul.mubr.f32.gmra.mrb[0].mxu0 %v4367
  %v5041 = vpop.f32.mrb[0].mxu0
  %v5042 = vadd.f32 %v4012, %v5041
  %v5043 = vpop.f32.mrb[0].mxu0
  %5044 = vmatprep.mubr.f32.mxu0 0.0
  %5045 = vmatmul.mubr.f32.gmra.mrb[0].mxu0 %v4370
  %v5046 = vpop.f32.mrb[0].mxu0
  %v5047 = vadd.f32 %v4012, %v5046
  %v5048 = vpop.f32.mrb[0].mxu0
  %5049 = vmatprep.mubr.f32.mxu0 0.0
  %5050 = vmatmul.mubr.f32.gmra.mrb[0].mxu0 %v4373
  %v5051 = vpop.f32.mrb[0].mxu0
  %v5052 = vadd.f32 %v4012, %v5051
  %v5053 = vpop.f32.mrb[0].mxu0
  %5054 = vmatprep.mubr.f32.mxu0 0.0
  %5055 = vmatmul.mubr.f32.gmra.mrb[0].mxu0 %v4376
  %v5056 = vpop.f32.mrb[0].mxu0
  %v5057 = vadd.f32 %v4012, %v5056
  %v5058 = vpop.f32.mrb[0].mxu0
  %5059 = vmatprep.mubr.f32.mxu0 0.0
  %5060 = vmatmul.mubr.f32.gmra.mrb[0].mxu0 %v4379
  %v5061 = vpop.f32.mrb[0].mxu0
  %v5062 = vadd.f32 %v4012, %v5061
  %v5063 = vpop.f32.mrb[0].mxu0
  %5064 = vmatprep.mubr.f32.mxu0 0.0
  %5065 = vmatmul.mubr.f32.gmra.mrb[0].mxu0 %v4382
  %v5066 = vpop.f32.mrb[0].mxu0
  %v5067 = vadd.f32 %v4012, %v5066
  %v5068 = vpop.f32.mrb[0].mxu0
  %5069 = vmatprep.mubr.f32.mxu0 0.0
  %5070 = vmatmul.mubr.f32.gmra.mrb[0].mxu0 %v4385
  %v5071 = vpop.f32.mrb[0].mxu0
  %v5072 = vadd.f32 %v4012, %v5071
  %v5073 = vpop.f32.mrb[0].mxu0
  %5074 = vmatprep.mubr.f32.mxu0 0.0
  %5075 = vmatmul.mubr.f32.gmra.mrb[0].mxu0 %v4388
  %v5076 = vpop.f32.mrb[0].mxu0
  %v5077 = vadd.f32 %v4012, %v5076
  %v5078 = vpop.f32.mrb[0].mxu0
  %5079 = vdwg.mxu0
  %v5080 = vmax.f32 %v4457, 0.0
  %v5081 = vmax.f32 %v4462, 0.0
  %v5082 = vmax.f32 %v4467, 0.0
  %v5083 = vmax.f32 %v4472, 0.0
  %v5084 = vmax.f32 %v4477, 0.0
  %v5085 = vmax.f32 %v4482, 0.0
  %v5086 = vmax.f32 %v4487, 0.0
  %v5087 = vmax.f32 %v4492, 0.0
  %v5088 = vmax.f32 %v4497, 0.0
  %v5089 = vmax.f32 %v4502, 0.0
  %v5090 = vmax.f32 %v4507, 0.0
  %v5091 = vmax.f32 %v4512, 0.0
  %v5092 = vmax.f32 %v4517, 0.0
  %v5093 = vmax.f32 %v4522, 0.0
  %v5094 = vmax.f32 %v4527, 0.0
  %v5095 = vmax.f32 %v4532, 0.0
  %v5096 = vmax.f32 %v4537, 0.0
  %v5097 = vmax.f32 %v4542, 0.0
  %v5098 = vmax.f32 %v4547, 0.0
  %v5099 = vmax.f32 %v4552, 0.0
  %v5100 = vmax.f32 %v4557, 0.0
  %v5101 = vmax.f32 %v4562, 0.0
  %v5102 = vmax.f32 %v4567, 0.0
  %v5103 = vmax.f32 %v4572, 0.0
  %v5104 = vmax.f32 %v4577, 0.0
  %v5105 = vmax.f32 %v4582, 0.0
  %v5106 = vmax.f32 %v4587, 0.0
  %v5107 = vmax.f32 %v4592, 0.0
  %v5108 = vmax.f32 %v4597, 0.0
  %v5109 = vmax.f32 %v4602, 0.0
  %v5110 = vmax.f32 %v4607, 0.0
  %v5111 = vmax.f32 %v4612, 0.0
  %v5112 = vmax.f32 %v4617, 0.0
  %v5113 = vmax.f32 %v4622, 0.0
  %v5114 = vmax.f32 %v4627, 0.0
  %v5115 = vmax.f32 %v4632, 0.0
  %v5116 = vmax.f32 %v4637, 0.0
  %v5117 = vmax.f32 %v4642, 0.0
  %v5118 = vmax.f32 %v4647, 0.0
  %v5119 = vmax.f32 %v4652, 0.0
  %v5120 = vmax.f32 %v4657, 0.0
  %v5121 = vmax.f32 %v4662, 0.0
  %v5122 = vmax.f32 %v4667, 0.0
  %v5123 = vmax.f32 %v4672, 0.0
  %v5124 = vmax.f32 %v4677, 0.0
  %v5125 = vmax.f32 %v4682, 0.0
  %v5126 = vmax.f32 %v4687, 0.0
  %v5127 = vmax.f32 %v4692, 0.0
  %v5128 = vmax.f32 %v4697, 0.0
  %v5129 = vmax.f32 %v4702, 0.0
  %v5130 = vmax.f32 %v4707, 0.0
  %v5131 = vmax.f32 %v4712, 0.0
  %v5132 = vmax.f32 %v4717, 0.0
  %v5133 = vmax.f32 %v4722, 0.0
  %v5134 = vmax.f32 %v4727, 0.0
  %v5135 = vmax.f32 %v4732, 0.0
  %v5136 = vmax.f32 %v4737, 0.0
  %v5137 = vmax.f32 %v4742, 0.0
  %v5138 = vmax.f32 %v4747, 0.0
  %v5139 = vmax.f32 %v4752, 0.0
  %v5140 = vmax.f32 %v4757, 0.0
  %v5141 = vmax.f32 %v4762, 0.0
  %v5142 = vmax.f32 %v4767, 0.0
  %v5143 = vmax.f32 %v4772, 0.0
  %v5144 = vmax.f32 %v4777, 0.0
  %v5145 = vmax.f32 %v4782, 0.0
  %v5146 = vmax.f32 %v4787, 0.0
  %v5147 = vmax.f32 %v4792, 0.0
  %v5148 = vmax.f32 %v4797, 0.0
  %v5149 = vmax.f32 %v4802, 0.0
  %v5150 = vmax.f32 %v4807, 0.0
  %v5151 = vmax.f32 %v4812, 0.0
  %v5152 = vmax.f32 %v4817, 0.0
  %v5153 = vmax.f32 %v4822, 0.0
  %v5154 = vmax.f32 %v4827, 0.0
  %v5155 = vmax.f32 %v4832, 0.0
  %v5156 = vmax.f32 %v4837, 0.0
  %v5157 = vmax.f32 %v4842, 0.0
  %v5158 = vmax.f32 %v4847, 0.0
  %v5159 = vmax.f32 %v4852, 0.0
  %v5160 = vmax.f32 %v4857, 0.0
  %v5161 = vmax.f32 %v4862, 0.0
  %v5162 = vmax.f32 %v4867, 0.0
  %v5163 = vmax.f32 %v4872, 0.0
  %v5164 = vmax.f32 %v4877, 0.0
  %v5165 = vmax.f32 %v4882, 0.0
  %v5166 = vmax.f32 %v4887, 0.0
  %v5167 = vmax.f32 %v4892, 0.0
  %v5168 = vmax.f32 %v4897, 0.0
  %v5169 = vmax.f32 %v4902, 0.0
  %v5170 = vmax.f32 %v4907, 0.0
  %v5171 = vmax.f32 %v4912, 0.0
  %v5172 = vmax.f32 %v4917, 0.0
  %v5173 = vmax.f32 %v4922, 0.0
  %v5174 = vmax.f32 %v4927, 0.0
  %v5175 = vmax.f32 %v4932, 0.0
  %v5176 = vmax.f32 %v4937, 0.0
  %v5177 = vmax.f32 %v4942, 0.0
  %v5178 = vmax.f32 %v4947, 0.0
  %v5179 = vmax.f32 %v4952, 0.0
  %v5180 = vmax.f32 %v4957, 0.0
  %v5181 = vmax.f32 %v4962, 0.0
  %v5182 = vmax.f32 %v4967, 0.0
  %v5183 = vmax.f32 %v4972, 0.0
  %v5184 = vmax.f32 %v4977, 0.0
  %v5185 = vmax.f32 %v4982, 0.0
  %v5186 = vmax.f32 %v4987, 0.0
  %v5187 = vmax.f32 %v4992, 0.0
  %v5188 = vmax.f32 %v4997, 0.0
  %v5189 = vmax.f32 %v5002, 0.0
  %v5190 = vmax.f32 %v5007, 0.0
  %v5191 = vmax.f32 %v5012, 0.0
  %v5192 = vmax.f32 %v5017, 0.0
  %v5193 = vmax.f32 %v5022, 0.0
  %v5194 = vmax.f32 %v5027, 0.0
  %v5195 = vmax.f32 %v5032, 0.0
  %v5196 = vmax.f32 %v5037, 0.0
  %v5197 = vmax.f32 %v5042, 0.0
  %v5198 = vmax.f32 %v5047, 0.0
  %v5199 = vmax.f32 %v5052, 0.0
  %v5200 = vmax.f32 %v5057, 0.0
  %v5201 = vmax.f32 %v5062, 0.0
  %v5202 = vmax.f32 %v5067, 0.0
  %v5203 = vmax.f32 %v5072, 0.0
  %v5204 = vmax.f32 %v5077, 0.0
  %v5205 = vld [vmem:[%s9] sm:$0xff]
  %v5206 = vld [vmem:[%s9 + $0x8] sm:$0xff]
  %v5207 = vld [vmem:[%s9 + $0x10] sm:$0xff]
  %v5208 = vld [vmem:[%s9 + $0x18] sm:$0xff]
  %v5210 = vsel %vm4014, %v5080, 0
  %v5213 = vsel %vm4014, %v5081, 0
  %v5216 = vsel %vm4014, %v5082, 0
  %v5219 = vsel %vm4014, %v5083, 0
  %v5222 = vsel %vm4014, %v5084, 0
  %v5225 = vsel %vm4014, %v5085, 0
  %v5228 = vsel %vm4014, %v5086, 0
  %v5231 = vsel %vm4014, %v5087, 0
  %v5234 = vsel %vm4014, %v5088, 0
  %v5237 = vsel %vm4014, %v5089, 0
  %v5240 = vsel %vm4014, %v5090, 0
  %v5243 = vsel %vm4014, %v5091, 0
  %v5246 = vsel %vm4014, %v5092, 0
  %v5249 = vsel %vm4014, %v5093, 0
  %v5252 = vsel %vm4014, %v5094, 0
  %v5255 = vsel %vm4014, %v5095, 0
  %v5258 = vsel %vm4014, %v5096, 0
  %v5261 = vsel %vm4014, %v5097, 0
  %v5264 = vsel %vm4014, %v5098, 0
  %v5267 = vsel %vm4014, %v5099, 0
  %v5270 = vsel %vm4014, %v5100, 0
  %v5273 = vsel %vm4014, %v5101, 0
  %v5276 = vsel %vm4014, %v5102, 0
  %v5279 = vsel %vm4014, %v5103, 0
  %v5282 = vsel %vm4014, %v5104, 0
  %v5285 = vsel %vm4014, %v5105, 0
  %v5288 = vsel %vm4014, %v5106, 0
  %v5291 = vsel %vm4014, %v5107, 0
  %v5294 = vsel %vm4014, %v5108, 0
  %v5297 = vsel %vm4014, %v5109, 0
  %v5300 = vsel %vm4014, %v5110, 0
  %v5303 = vsel %vm4014, %v5111, 0
  %v5306 = vsel %vm4014, %v5112, 0
  %v5309 = vsel %vm4014, %v5113, 0
  %v5312 = vsel %vm4014, %v5114, 0
  %v5315 = vsel %vm4014, %v5115, 0
  %v5318 = vsel %vm4014, %v5116, 0
  %v5321 = vsel %vm4014, %v5117, 0
  %v5324 = vsel %vm4014, %v5118, 0
  %v5327 = vsel %vm4014, %v5119, 0
  %v5330 = vsel %vm4014, %v5120, 0
  %v5333 = vsel %vm4014, %v5121, 0
  %v5336 = vsel %vm4014, %v5122, 0
  %v5339 = vsel %vm4014, %v5123, 0
  %v5342 = vsel %vm4014, %v5124, 0
  %v5345 = vsel %vm4014, %v5125, 0
  %v5348 = vsel %vm4014, %v5126, 0
  %v5351 = vsel %vm4014, %v5127, 0
  %v5354 = vsel %vm4014, %v5128, 0
  %v5357 = vsel %vm4014, %v5129, 0
  %v5360 = vsel %vm4014, %v5130, 0
  %v5363 = vsel %vm4014, %v5131, 0
  %v5366 = vsel %vm4014, %v5132, 0
  %v5369 = vsel %vm4014, %v5133, 0
  %v5372 = vsel %vm4014, %v5134, 0
  %v5375 = vsel %vm4014, %v5135, 0
  %v5378 = vsel %vm4014, %v5136, 0
  %v5381 = vsel %vm4014, %v5137, 0
  %v5384 = vsel %vm4014, %v5138, 0
  %v5387 = vsel %vm4014, %v5139, 0
  %v5390 = vsel %vm4014, %v5140, 0
  %v5393 = vsel %vm4014, %v5141, 0
  %v5396 = vsel %vm4014, %v5142, 0
  %v5399 = vsel %vm4014, %v5143, 0
  %v5402 = vsel %vm4014, %v5144, 0
  %v5405 = vsel %vm4014, %v5145, 0
  %v5408 = vsel %vm4014, %v5146, 0
  %v5411 = vsel %vm4014, %v5147, 0
  %v5414 = vsel %vm4014, %v5148, 0
  %v5417 = vsel %vm4014, %v5149, 0
  %v5420 = vsel %vm4014, %v5150, 0
  %v5423 = vsel %vm4014, %v5151, 0
  %v5426 = vsel %vm4014, %v5152, 0
  %v5429 = vsel %vm4014, %v5153, 0
  %v5432 = vsel %vm4014, %v5154, 0
  %v5435 = vsel %vm4014, %v5155, 0
  %v5438 = vsel %vm4014, %v5156, 0
  %v5441 = vsel %vm4014, %v5157, 0
  %v5444 = vsel %vm4014, %v5158, 0
  %v5447 = vsel %vm4014, %v5159, 0
  %v5450 = vsel %vm4014, %v5160, 0
  %v5453 = vsel %vm4014, %v5161, 0
  %v5456 = vsel %vm4014, %v5162, 0
  %v5459 = vsel %vm4014, %v5163, 0
  %v5462 = vsel %vm4014, %v5164, 0
  %v5465 = vsel %vm4014, %v5165, 0
  %v5468 = vsel %vm4014, %v5166, 0
  %v5471 = vsel %vm4014, %v5167, 0
  %v5474 = vsel %vm4014, %v5168, 0
  %v5477 = vsel %vm4014, %v5169, 0
  %v5480 = vsel %vm4014, %v5170, 0
  %v5483 = vsel %vm4014, %v5171, 0
  %v5486 = vsel %vm4014, %v5172, 0
  %v5489 = vsel %vm4014, %v5173, 0
  %v5492 = vsel %vm4014, %v5174, 0
  %v5495 = vsel %vm4014, %v5175, 0
  %v5498 = vsel %vm4014, %v5176, 0
  %v5501 = vsel %vm4014, %v5177, 0
  %v5504 = vsel %vm4014, %v5178, 0
  %v5507 = vsel %vm4014, %v5179, 0
  %v5510 = vsel %vm4014, %v5180, 0
  %v5513 = vsel %vm4014, %v5181, 0
  %v5516 = vsel %vm4014, %v5182, 0
  %v5519 = vsel %vm4014, %v5183, 0
  %v5522 = vsel %vm4014, %v5184, 0
  %v5525 = vsel %vm4014, %v5185, 0
  %v5528 = vsel %vm4014, %v5186, 0
  %v5531 = vsel %vm4014, %v5187, 0
  %v5534 = vsel %vm4014, %v5188, 0
  %v5537 = vsel %vm4014, %v5189, 0
  %v5540 = vsel %vm4014, %v5190, 0
  %v5543 = vsel %vm4014, %v5191, 0
  %v5546 = vsel %vm4014, %v5192, 0
  %v5549 = vsel %vm4014, %v5193, 0
  %v5552 = vsel %vm4014, %v5194, 0
  %v5555 = vsel %vm4014, %v5195, 0
  %v5558 = vsel %vm4014, %v5196, 0
  %v5561 = vsel %vm4014, %v5197, 0
  %v5564 = vsel %vm4014, %v5198, 0
  %v5567 = vsel %vm4014, %v5199, 0
  %v5570 = vsel %vm4014, %v5200, 0
  %v5573 = vsel %vm4014, %v5201, 0
  %v5576 = vsel %vm4014, %v5202, 0
  %v5579 = vsel %vm4014, %v5203, 0
  %v5582 = vsel %vm4014, %v5204, 0
  %5584 = vmatprep.subr.mxu0 0.0
  %5585 = vmatpush1.msra.mxu0 %v5205
  %5586 = vmatprep.subr.mxu0 0.0
  %5587 = vmatpush1.msra.mxu0 %v5206
  %5588 = vmatprep.subr.mxu0 0.0
  %5589 = vmatpush1.msra.mxu0 %v5207
  %5590 = vmatprep.subr.mxu0 0.0
  %5591 = vmatpush1.msra.mxu0 %v5208
  %5592 = vmatprep.subr.mxu0 0.0
  %5593 = vmatpush1.msra.mxu0 0.0
  %5594 = vmatprep.subr.mxu0 0.0
  %5595 = vmatpush1.msra.mxu0 0.0
  %5596 = vmatprep.subr.mxu0 0.0
  %5597 = vmatpush1.msra.mxu0 0.0
  %5598 = vmatprep.subr.mxu0 0.0
  %5599 = vmatpush1.msra.mxu0 0.0
  %5600 = vmatprep.subr.mxu0 0.0
  %5601 = vmatpush1.msra.mxu0 0.0
  %5602 = vmatprep.subr.mxu0 0.0
  %5603 = vmatpush1.msra.mxu0 0.0
  %5604 = vmatprep.subr.mxu0 0.0
  %5605 = vmatpush1.msra.mxu0 0.0
  %5606 = vmatprep.subr.mxu0 0.0
  %5607 = vmatpush1.msra.mxu0 0.0
  %5608 = vmatprep.subr.mxu0 0.0
  %5609 = vmatpush1.msra.mxu0 0.0
  %5610 = vmatprep.subr.mxu0 0.0
  %5611 = vmatpush1.msra.mxu0 0.0
  %5612 = vmatprep.subr.mxu0 0.0
  %5613 = vmatpush1.msra.mxu0 0.0
  %5614 = vmatprep.subr.mxu0 0.0
  %5615 = vmatpush1.msra.mxu0 0.0
  %5616 = vmatprep.subr.mxu0 0.0
  %5617 = vmatpush1.msra.mxu0 0.0
  %5618 = vmatprep.subr.mxu0 0.0
  %5619 = vmatpush1.msra.mxu0 0.0
  %5620 = vmatprep.subr.mxu0 0.0
  %5621 = vmatpush1.msra.mxu0 0.0
  %5622 = vmatprep.subr.mxu0 0.0
  %5623 = vmatpush1.msra.mxu0 0.0
  %5624 = vmatprep.subr.mxu0 0.0
  %5625 = vmatpush1.msra.mxu0 0.0
  %5626 = vmatprep.subr.mxu0 0.0
  %5627 = vmatpush1.msra.mxu0 0.0
  %5628 = vmatprep.subr.mxu0 0.0
  %5629 = vmatpush1.msra.mxu0 0.0
  %5630 = vmatprep.subr.mxu0 0.0
  %5631 = vmatpush1.msra.mxu0 0.0
  %5632 = vmatprep.subr.mxu0 0.0
  %5633 = vmatpush1.msra.mxu0 0.0
  %5634 = vmatprep.subr.mxu0 0.0
  %5635 = vmatpush1.msra.mxu0 0.0
  %5636 = vmatprep.subr.mxu0 0.0
  %5637 = vmatpush1.msra.mxu0 0.0
  %5638 = vmatprep.subr.mxu0 0.0
  %5639 = vmatpush1.msra.mxu0 0.0
  %5640 = vmatprep.subr.mxu0 0.0
  %5641 = vmatpush1.msra.mxu0 0.0
  %5642 = vmatprep.subr.mxu0 0.0
  %5643 = vmatpush1.msra.mxu0 0.0
  %5644 = vmatprep.subr.mxu0 0.0
  %5645 = vmatpush1.msra.mxu0 0.0
  %5646 = vmatprep.subr.mxu0 0.0
  %5647 = vmatpush1.msra.mxu0 0.0
  %5648 = vmatprep.mubr.f32.mxu0 0.0
  %5649 = vmatmul.mubr.f32.gmra.mrb[0].mxu0 %v5210
  %v5650 = vpop.f32.mrb[0].mxu0
  %v5651 = vadd.f32 0.0, %v5650
  %v5652 = vpop.f32.mrb[0].mxu0
  %5653 = vmatprep.mubr.f32.mxu0 0.0
  %5654 = vmatmul.mubr.f32.gmra.mrb[0].mxu0 %v5213
  %v5655 = vpop.f32.mrb[0].mxu0
  %v5656 = vadd.f32 0.0, %v5655
  %v5657 = vpop.f32.mrb[0].mxu0
  %5658 = vmatprep.mubr.f32.mxu0 0.0
  %5659 = vmatmul.mubr.f32.gmra.mrb[0].mxu0 %v5216
  %v5660 = vpop.f32.mrb[0].mxu0
  %v5661 = vadd.f32 0.0, %v5660
  %v5662 = vpop.f32.mrb[0].mxu0
  %5663 = vmatprep.mubr.f32.mxu0 0.0
  %5664 = vmatmul.mubr.f32.gmra.mrb[0].mxu0 %v5219
  %v5665 = vpop.f32.mrb[0].mxu0
  %v5666 = vadd.f32 0.0, %v5665
  %v5667 = vpop.f32.mrb[0].mxu0
  %5668 = vmatprep.mubr.f32.mxu0 0.0
  %5669 = vmatmul.mubr.f32.gmra.mrb[0].mxu0 %v5222
  %v5670 = vpop.f32.mrb[0].mxu0
  %v5671 = vadd.f32 0.0, %v5670
  %v5672 = vpop.f32.mrb[0].mxu0
  %5673 = vmatprep.mubr.f32.mxu0 0.0
  %5674 = vmatmul.mubr.f32.gmra.mrb[0].mxu0 %v5225
  %v5675 = vpop.f32.mrb[0].mxu0
  %v5676 = vadd.f32 0.0, %v5675
  %v5677 = vpop.f32.mrb[0].mxu0
  %5678 = vmatprep.mubr.f32.mxu0 0.0
  %5679 = vmatmul.mubr.f32.gmra.mrb[0].mxu0 %v5228
  %v5680 = vpop.f32.mrb[0].mxu0
  %v5681 = vadd.f32 0.0, %v5680
  %v5682 = vpop.f32.mrb[0].mxu0
  %5683 = vmatprep.mubr.f32.mxu0 0.0
  %5684 = vmatmul.mubr.f32.gmra.mrb[0].mxu0 %v5231
  %v5685 = vpop.f32.mrb[0].mxu0
  %v5686 = vadd.f32 0.0, %v5685
  %v5687 = vpop.f32.mrb[0].mxu0
  %5688 = vmatprep.mubr.f32.mxu0 0.0
  %5689 = vmatmul.mubr.f32.gmra.mrb[0].mxu0 %v5234
  %v5690 = vpop.f32.mrb[0].mxu0
  %v5691 = vadd.f32 0.0, %v5690
  %v5692 = vpop.f32.mrb[0].mxu0
  %5693 = vmatprep.mubr.f32.mxu0 0.0
  %5694 = vmatmul.mubr.f32.gmra.mrb[0].mxu0 %v5237
  %v5695 = vpop.f32.mrb[0].mxu0
  %v5696 = vadd.f32 0.0, %v5695
  %v5697 = vpop.f32.mrb[0].mxu0
  %5698 = vmatprep.mubr.f32.mxu0 0.0
  %5699 = vmatmul.mubr.f32.gmra.mrb[0].mxu0 %v5240
  %v5700 = vpop.f32.mrb[0].mxu0
  %v5701 = vadd.f32 0.0, %v5700
  %v5702 = vpop.f32.mrb[0].mxu0
  %5703 = vmatprep.mubr.f32.mxu0 0.0
  %5704 = vmatmul.mubr.f32.gmra.mrb[0].mxu0 %v5243
  %v5705 = vpop.f32.mrb[0].mxu0
  %v5706 = vadd.f32 0.0, %v5705
  %v5707 = vpop.f32.mrb[0].mxu0
  %5708 = vmatprep.mubr.f32.mxu0 0.0
  %5709 = vmatmul.mubr.f32.gmra.mrb[0].mxu0 %v5246
  %v5710 = vpop.f32.mrb[0].mxu0
  %v5711 = vadd.f32 0.0, %v5710
  %v5712 = vpop.f32.mrb[0].mxu0
  %5713 = vmatprep.mubr.f32.mxu0 0.0
  %5714 = vmatmul.mubr.f32.gmra.mrb[0].mxu0 %v5249
  %v5715 = vpop.f32.mrb[0].mxu0
  %v5716 = vadd.f32 0.0, %v5715
  %v5717 = vpop.f32.mrb[0].mxu0
  %5718 = vmatprep.mubr.f32.mxu0 0.0
  %5719 = vmatmul.mubr.f32.gmra.mrb[0].mxu0 %v5252
  %v5720 = vpop.f32.mrb[0].mxu0
  %v5721 = vadd.f32 0.0, %v5720
  %v5722 = vpop.f32.mrb[0].mxu0
  %5723 = vmatprep.mubr.f32.mxu0 0.0
  %5724 = vmatmul.mubr.f32.gmra.mrb[0].mxu0 %v5255
  %v5725 = vpop.f32.mrb[0].mxu0
  %v5726 = vadd.f32 0.0, %v5725
  %v5727 = vpop.f32.mrb[0].mxu0
  %5728 = vmatprep.mubr.f32.mxu0 0.0
  %5729 = vmatmul.mubr.f32.gmra.mrb[0].mxu0 %v5258
  %v5730 = vpop.f32.mrb[0].mxu0
  %v5731 = vadd.f32 0.0, %v5730
  %v5732 = vpop.f32.mrb[0].mxu0
  %5733 = vmatprep.mubr.f32.mxu0 0.0
  %5734 = vmatmul.mubr.f32.gmra.mrb[0].mxu0 %v5261
  %v5735 = vpop.f32.mrb[0].mxu0
  %v5736 = vadd.f32 0.0, %v5735
  %v5737 = vpop.f32.mrb[0].mxu0
  %5738 = vmatprep.mubr.f32.mxu0 0.0
  %5739 = vmatmul.mubr.f32.gmra.mrb[0].mxu0 %v5264
  %v5740 = vpop.f32.mrb[0].mxu0
  %v5741 = vadd.f32 0.0, %v5740
  %v5742 = vpop.f32.mrb[0].mxu0
  %5743 = vmatprep.mubr.f32.mxu0 0.0
  %5744 = vmatmul.mubr.f32.gmra.mrb[0].mxu0 %v5267
  %v5745 = vpop.f32.mrb[0].mxu0
  %v5746 = vadd.f32 0.0, %v5745
  %v5747 = vpop.f32.mrb[0].mxu0
  %5748 = vmatprep.mubr.f32.mxu0 0.0
  %5749 = vmatmul.mubr.f32.gmra.mrb[0].mxu0 %v5270
  %v5750 = vpop.f32.mrb[0].mxu0
  %v5751 = vadd.f32 0.0, %v5750
  %v5752 = vpop.f32.mrb[0].mxu0
  %5753 = vmatprep.mubr.f32.mxu0 0.0
  %5754 = vmatmul.mubr.f32.gmra.mrb[0].mxu0 %v5273
  %v5755 = vpop.f32.mrb[0].mxu0
  %v5756 = vadd.f32 0.0, %v5755
  %v5757 = vpop.f32.mrb[0].mxu0
  %5758 = vmatprep.mubr.f32.mxu0 0.0
  %5759 = vmatmul.mubr.f32.gmra.mrb[0].mxu0 %v5276
  %v5760 = vpop.f32.mrb[0].mxu0
  %v5761 = vadd.f32 0.0, %v5760
  %v5762 = vpop.f32.mrb[0].mxu0
  %5763 = vmatprep.mubr.f32.mxu0 0.0
  %5764 = vmatmul.mubr.f32.gmra.mrb[0].mxu0 %v5279
  %v5765 = vpop.f32.mrb[0].mxu0
  %v5766 = vadd.f32 0.0, %v5765
  %v5767 = vpop.f32.mrb[0].mxu0
  %5768 = vmatprep.mubr.f32.mxu0 0.0
  %5769 = vmatmul.mubr.f32.gmra.mrb[0].mxu0 %v5282
  %v5770 = vpop.f32.mrb[0].mxu0
  %v5771 = vadd.f32 0.0, %v5770
  %v5772 = vpop.f32.mrb[0].mxu0
  %5773 = vmatprep.mubr.f32.mxu0 0.0
  %5774 = vmatmul.mubr.f32.gmra.mrb[0].mxu0 %v5285
  %v5775 = vpop.f32.mrb[0].mxu0
  %v5776 = vadd.f32 0.0, %v5775
  %v5777 = vpop.f32.mrb[0].mxu0
  %5778 = vmatprep.mubr.f32.mxu0 0.0
  %5779 = vmatmul.mubr.f32.gmra.mrb[0].mxu0 %v5288
  %v5780 = vpop.f32.mrb[0].mxu0
  %v5781 = vadd.f32 0.0, %v5780
  %v5782 = vpop.f32.mrb[0].mxu0
  %5783 = vmatprep.mubr.f32.mxu0 0.0
  %5784 = vmatmul.mubr.f32.gmra.mrb[0].mxu0 %v5291
  %v5785 = vpop.f32.mrb[0].mxu0
  %v5786 = vadd.f32 0.0, %v5785
  %v5787 = vpop.f32.mrb[0].mxu0
  %5788 = vmatprep.mubr.f32.mxu0 0.0
  %5789 = vmatmul.mubr.f32.gmra.mrb[0].mxu0 %v5294
  %v5790 = vpop.f32.mrb[0].mxu0
  %v5791 = vadd.f32 0.0, %v5790
  %v5792 = vpop.f32.mrb[0].mxu0
  %5793 = vmatprep.mubr.f32.mxu0 0.0
  %5794 = vmatmul.mubr.f32.gmra.mrb[0].mxu0 %v5297
  %v5795 = vpop.f32.mrb[0].mxu0
  %v5796 = vadd.f32 0.0, %v5795
  %v5797 = vpop.f32.mrb[0].mxu0
  %5798 = vmatprep.mubr.f32.mxu0 0.0
  %5799 = vmatmul.mubr.f32.gmra.mrb[0].mxu0 %v5300
  %v5800 = vpop.f32.mrb[0].mxu0
  %v5801 = vadd.f32 0.0, %v5800
  %v5802 = vpop.f32.mrb[0].mxu0
  %5803 = vmatprep.mubr.f32.mxu0 0.0
  %5804 = vmatmul.mubr.f32.gmra.mrb[0].mxu0 %v5303
  %v5805 = vpop.f32.mrb[0].mxu0
  %v5806 = vadd.f32 0.0, %v5805
  %v5807 = vpop.f32.mrb[0].mxu0
  %5808 = vmatprep.mubr.f32.mxu0 0.0
  %5809 = vmatmul.mubr.f32.gmra.mrb[0].mxu0 %v5306
  %v5810 = vpop.f32.mrb[0].mxu0
  %v5811 = vadd.f32 0.0, %v5810
  %v5812 = vpop.f32.mrb[0].mxu0
  %5813 = vmatprep.mubr.f32.mxu0 0.0
  %5814 = vmatmul.mubr.f32.gmra.mrb[0].mxu0 %v5309
  %v5815 = vpop.f32.mrb[0].mxu0
  %v5816 = vadd.f32 0.0, %v5815
  %v5817 = vpop.f32.mrb[0].mxu0
  %5818 = vmatprep.mubr.f32.mxu0 0.0
  %5819 = vmatmul.mubr.f32.gmra.mrb[0].mxu0 %v5312
  %v5820 = vpop.f32.mrb[0].mxu0
  %v5821 = vadd.f32 0.0, %v5820
  %v5822 = vpop.f32.mrb[0].mxu0
  %5823 = vmatprep.mubr.f32.mxu0 0.0
  %5824 = vmatmul.mubr.f32.gmra.mrb[0].mxu0 %v5315
  %v5825 = vpop.f32.mrb[0].mxu0
  %v5826 = vadd.f32 0.0, %v5825
  %v5827 = vpop.f32.mrb[0].mxu0
  %5828 = vmatprep.mubr.f32.mxu0 0.0
  %5829 = vmatmul.mubr.f32.gmra.mrb[0].mxu0 %v5318
  %v5830 = vpop.f32.mrb[0].mxu0
  %v5831 = vadd.f32 0.0, %v5830
  %v5832 = vpop.f32.mrb[0].mxu0
  %5833 = vmatprep.mubr.f32.mxu0 0.0
  %5834 = vmatmul.mubr.f32.gmra.mrb[0].mxu0 %v5321
  %v5835 = vpop.f32.mrb[0].mxu0
  %v5836 = vadd.f32 0.0, %v5835
  %v5837 = vpop.f32.mrb[0].mxu0
  %5838 = vmatprep.mubr.f32.mxu0 0.0
  %5839 = vmatmul.mubr.f32.gmra.mrb[0].mxu0 %v5324
  %v5840 = vpop.f32.mrb[0].mxu0
  %v5841 = vadd.f32 0.0, %v5840
  %v5842 = vpop.f32.mrb[0].mxu0
  %5843 = vmatprep.mubr.f32.mxu0 0.0
  %5844 = vmatmul.mubr.f32.gmra.mrb[0].mxu0 %v5327
  %v5845 = vpop.f32.mrb[0].mxu0
  %v5846 = vadd.f32 0.0, %v5845
  %v5847 = vpop.f32.mrb[0].mxu0
  %5848 = vmatprep.mubr.f32.mxu0 0.0
  %5849 = vmatmul.mubr.f32.gmra.mrb[0].mxu0 %v5330
  %v5850 = vpop.f32.mrb[0].mxu0
  %v5851 = vadd.f32 0.0, %v5850
  %v5852 = vpop.f32.mrb[0].mxu0
  %5853 = vmatprep.mubr.f32.mxu0 0.0
  %5854 = vmatmul.mubr.f32.gmra.mrb[0].mxu0 %v5333
  %v5855 = vpop.f32.mrb[0].mxu0
  %v5856 = vadd.f32 0.0, %v5855
  %v5857 = vpop.f32.mrb[0].mxu0
  %5858 = vmatprep.mubr.f32.mxu0 0.0
  %5859 = vmatmul.mubr.f32.gmra.mrb[0].mxu0 %v5336
  %v5860 = vpop.f32.mrb[0].mxu0
  %v5861 = vadd.f32 0.0, %v5860
  %v5862 = vpop.f32.mrb[0].mxu0
  %5863 = vmatprep.mubr.f32.mxu0 0.0
  %5864 = vmatmul.mubr.f32.gmra.mrb[0].mxu0 %v5339
  %v5865 = vpop.f32.mrb[0].mxu0
  %v5866 = vadd.f32 0.0, %v5865
  %v5867 = vpop.f32.mrb[0].mxu0
  %5868 = vmatprep.mubr.f32.mxu0 0.0
  %5869 = vmatmul.mubr.f32.gmra.mrb[0].mxu0 %v5342
  %v5870 = vpop.f32.mrb[0].mxu0
  %v5871 = vadd.f32 0.0, %v5870
  %v5872 = vpop.f32.mrb[0].mxu0
  %5873 = vmatprep.mubr.f32.mxu0 0.0
  %5874 = vmatmul.mubr.f32.gmra.mrb[0].mxu0 %v5345
  %v5875 = vpop.f32.mrb[0].mxu0
  %v5876 = vadd.f32 0.0, %v5875
  %v5877 = vpop.f32.mrb[0].mxu0
  %5878 = vmatprep.mubr.f32.mxu0 0.0
  %5879 = vmatmul.mubr.f32.gmra.mrb[0].mxu0 %v5348
  %v5880 = vpop.f32.mrb[0].mxu0
  %v5881 = vadd.f32 0.0, %v5880
  %v5882 = vpop.f32.mrb[0].mxu0
  %5883 = vmatprep.mubr.f32.mxu0 0.0
  %5884 = vmatmul.mubr.f32.gmra.mrb[0].mxu0 %v5351
  %v5885 = vpop.f32.mrb[0].mxu0
  %v5886 = vadd.f32 0.0, %v5885
  %v5887 = vpop.f32.mrb[0].mxu0
  %5888 = vmatprep.mubr.f32.mxu0 0.0
  %5889 = vmatmul.mubr.f32.gmra.mrb[0].mxu0 %v5354
  %v5890 = vpop.f32.mrb[0].mxu0
  %v5891 = vadd.f32 0.0, %v5890
  %v5892 = vpop.f32.mrb[0].mxu0
  %5893 = vmatprep.mubr.f32.mxu0 0.0
  %5894 = vmatmul.mubr.f32.gmra.mrb[0].mxu0 %v5357
  %v5895 = vpop.f32.mrb[0].mxu0
  %v5896 = vadd.f32 0.0, %v5895
  %v5897 = vpop.f32.mrb[0].mxu0
  %5898 = vmatprep.mubr.f32.mxu0 0.0
  %5899 = vmatmul.mubr.f32.gmra.mrb[0].mxu0 %v5360
  %v5900 = vpop.f32.mrb[0].mxu0
  %v5901 = vadd.f32 0.0, %v5900
  %v5902 = vpop.f32.mrb[0].mxu0
  %5903 = vmatprep.mubr.f32.mxu0 0.0
  %5904 = vmatmul.mubr.f32.gmra.mrb[0].mxu0 %v5363
  %v5905 = vpop.f32.mrb[0].mxu0
  %v5906 = vadd.f32 0.0, %v5905
  %v5907 = vpop.f32.mrb[0].mxu0
  %5908 = vmatprep.mubr.f32.mxu0 0.0
  %5909 = vmatmul.mubr.f32.gmra.mrb[0].mxu0 %v5366
  %v5910 = vpop.f32.mrb[0].mxu0
  %v5911 = vadd.f32 0.0, %v5910
  %v5912 = vpop.f32.mrb[0].mxu0
  %5913 = vmatprep.mubr.f32.mxu0 0.0
  %5914 = vmatmul.mubr.f32.gmra.mrb[0].mxu0 %v5369
  %v5915 = vpop.f32.mrb[0].mxu0
  %v5916 = vadd.f32 0.0, %v5915
  %v5917 = vpop.f32.mrb[0].mxu0
  %5918 = vmatprep.mubr.f32.mxu0 0.0
  %5919 = vmatmul.mubr.f32.gmra.mrb[0].mxu0 %v5372
  %v5920 = vpop.f32.mrb[0].mxu0
  %v5921 = vadd.f32 0.0, %v5920
  %v5922 = vpop.f32.mrb[0].mxu0
  %5923 = vmatprep.mubr.f32.mxu0 0.0
  %5924 = vmatmul.mubr.f32.gmra.mrb[0].mxu0 %v5375
  %v5925 = vpop.f32.mrb[0].mxu0
  %v5926 = vadd.f32 0.0, %v5925
  %v5927 = vpop.f32.mrb[0].mxu0
  %5928 = vmatprep.mubr.f32.mxu0 0.0
  %5929 = vmatmul.mubr.f32.gmra.mrb[0].mxu0 %v5378
  %v5930 = vpop.f32.mrb[0].mxu0
  %v5931 = vadd.f32 0.0, %v5930
  %v5932 = vpop.f32.mrb[0].mxu0
  %5933 = vmatprep.mubr.f32.mxu0 0.0
  %5934 = vmatmul.mubr.f32.gmra.mrb[0].mxu0 %v5381
  %v5935 = vpop.f32.mrb[0].mxu0
  %v5936 = vadd.f32 0.0, %v5935
  %v5937 = vpop.f32.mrb[0].mxu0
  %5938 = vmatprep.mubr.f32.mxu0 0.0
  %5939 = vmatmul.mubr.f32.gmra.mrb[0].mxu0 %v5384
  %v5940 = vpop.f32.mrb[0].mxu0
  %v5941 = vadd.f32 0.0, %v5940
  %v5942 = vpop.f32.mrb[0].mxu0
  %5943 = vmatprep.mubr.f32.mxu0 0.0
  %5944 = vmatmul.mubr.f32.gmra.mrb[0].mxu0 %v5387
  %v5945 = vpop.f32.mrb[0].mxu0
  %v5946 = vadd.f32 0.0, %v5945
  %v5947 = vpop.f32.mrb[0].mxu0
  %5948 = vmatprep.mubr.f32.mxu0 0.0
  %5949 = vmatmul.mubr.f32.gmra.mrb[0].mxu0 %v5390
  %v5950 = vpop.f32.mrb[0].mxu0
  %v5951 = vadd.f32 0.0, %v5950
  %v5952 = vpop.f32.mrb[0].mxu0
  %5953 = vmatprep.mubr.f32.mxu0 0.0
  %5954 = vmatmul.mubr.f32.gmra.mrb[0].mxu0 %v5393
  %v5955 = vpop.f32.mrb[0].mxu0
  %v5956 = vadd.f32 0.0, %v5955
  %v5957 = vpop.f32.mrb[0].mxu0
  %5958 = vmatprep.mubr.f32.mxu0 0.0
  %5959 = vmatmul.mubr.f32.gmra.mrb[0].mxu0 %v5396
  %v5960 = vpop.f32.mrb[0].mxu0
  %v5961 = vadd.f32 0.0, %v5960
  %v5962 = vpop.f32.mrb[0].mxu0
  %5963 = vmatprep.mubr.f32.mxu0 0.0
  %5964 = vmatmul.mubr.f32.gmra.mrb[0].mxu0 %v5399
  %v5965 = vpop.f32.mrb[0].mxu0
  %v5966 = vadd.f32 0.0, %v5965
  %v5967 = vpop.f32.mrb[0].mxu0
  %5968 = vmatprep.mubr.f32.mxu0 0.0
  %5969 = vmatmul.mubr.f32.gmra.mrb[0].mxu0 %v5402
  %v5970 = vpop.f32.mrb[0].mxu0
  %v5971 = vadd.f32 0.0, %v5970
  %v5972 = vpop.f32.mrb[0].mxu0
  %5973 = vmatprep.mubr.f32.mxu0 0.0
  %5974 = vmatmul.mubr.f32.gmra.mrb[0].mxu0 %v5405
  %v5975 = vpop.f32.mrb[0].mxu0
  %v5976 = vadd.f32 0.0, %v5975
  %v5977 = vpop.f32.mrb[0].mxu0
  %5978 = vmatprep.mubr.f32.mxu0 0.0
  %5979 = vmatmul.mubr.f32.gmra.mrb[0].mxu0 %v5408
  %v5980 = vpop.f32.mrb[0].mxu0
  %v5981 = vadd.f32 0.0, %v5980
  %v5982 = vpop.f32.mrb[0].mxu0
  %5983 = vmatprep.mubr.f32.mxu0 0.0
  %5984 = vmatmul.mubr.f32.gmra.mrb[0].mxu0 %v5411
  %v5985 = vpop.f32.mrb[0].mxu0
  %v5986 = vadd.f32 0.0, %v5985
  %v5987 = vpop.f32.mrb[0].mxu0
  %5988 = vmatprep.mubr.f32.mxu0 0.0
  %5989 = vmatmul.mubr.f32.gmra.mrb[0].mxu0 %v5414
  %v5990 = vpop.f32.mrb[0].mxu0
  %v5991 = vadd.f32 0.0, %v5990
  %v5992 = vpop.f32.mrb[0].mxu0
  %5993 = vmatprep.mubr.f32.mxu0 0.0
  %5994 = vmatmul.mubr.f32.gmra.mrb[0].mxu0 %v5417
  %v5995 = vpop.f32.mrb[0].mxu0
  %v5996 = vadd.f32 0.0, %v5995
  %v5997 = vpop.f32.mrb[0].mxu0
  %5998 = vmatprep.mubr.f32.mxu0 0.0
  %5999 = vmatmul.mubr.f32.gmra.mrb[0].mxu0 %v5420
  %v6000 = vpop.f32.mrb[0].mxu0
  %v6001 = vadd.f32 0.0, %v6000
  %v6002 = vpop.f32.mrb[0].mxu0
  %6003 = vmatprep.mubr.f32.mxu0 0.0
  %6004 = vmatmul.mubr.f32.gmra.mrb[0].mxu0 %v5423
  %v6005 = vpop.f32.mrb[0].mxu0
  %v6006 = vadd.f32 0.0, %v6005
  %v6007 = vpop.f32.mrb[0].mxu0
  %6008 = vmatprep.mubr.f32.mxu0 0.0
  %6009 = vmatmul.mubr.f32.gmra.mrb[0].mxu0 %v5426
  %v6010 = vpop.f32.mrb[0].mxu0
  %v6011 = vadd.f32 0.0, %v6010
  %v6012 = vpop.f32.mrb[0].mxu0
  %6013 = vmatprep.mubr.f32.mxu0 0.0
  %6014 = vmatmul.mubr.f32.gmra.mrb[0].mxu0 %v5429
  %v6015 = vpop.f32.mrb[0].mxu0
  %v6016 = vadd.f32 0.0, %v6015
  %v6017 = vpop.f32.mrb[0].mxu0
  %6018 = vmatprep.mubr.f32.mxu0 0.0
  %6019 = vmatmul.mubr.f32.gmra.mrb[0].mxu0 %v5432
  %v6020 = vpop.f32.mrb[0].mxu0
  %v6021 = vadd.f32 0.0, %v6020
  %v6022 = vpop.f32.mrb[0].mxu0
  %6023 = vmatprep.mubr.f32.mxu0 0.0
  %6024 = vmatmul.mubr.f32.gmra.mrb[0].mxu0 %v5435
  %v6025 = vpop.f32.mrb[0].mxu0
  %v6026 = vadd.f32 0.0, %v6025
  %v6027 = vpop.f32.mrb[0].mxu0
  %6028 = vmatprep.mubr.f32.mxu0 0.0
  %6029 = vmatmul.mubr.f32.gmra.mrb[0].mxu0 %v5438
  %v6030 = vpop.f32.mrb[0].mxu0
  %v6031 = vadd.f32 0.0, %v6030
  %v6032 = vpop.f32.mrb[0].mxu0
  %6033 = vmatprep.mubr.f32.mxu0 0.0
  %6034 = vmatmul.mubr.f32.gmra.mrb[0].mxu0 %v5441
  %v6035 = vpop.f32.mrb[0].mxu0
  %v6036 = vadd.f32 0.0, %v6035
  %v6037 = vpop.f32.mrb[0].mxu0
  %6038 = vmatprep.mubr.f32.mxu0 0.0
  %6039 = vmatmul.mubr.f32.gmra.mrb[0].mxu0 %v5444
  %v6040 = vpop.f32.mrb[0].mxu0
  %v6041 = vadd.f32 0.0, %v6040
  %v6042 = vpop.f32.mrb[0].mxu0
  %6043 = vmatprep.mubr.f32.mxu0 0.0
  %6044 = vmatmul.mubr.f32.gmra.mrb[0].mxu0 %v5447
  %v6045 = vpop.f32.mrb[0].mxu0
  %v6046 = vadd.f32 0.0, %v6045
  %v6047 = vpop.f32.mrb[0].mxu0
  %6048 = vmatprep.mubr.f32.mxu0 0.0
  %6049 = vmatmul.mubr.f32.gmra.mrb[0].mxu0 %v5450
  %v6050 = vpop.f32.mrb[0].mxu0
  %v6051 = vadd.f32 0.0, %v6050
  %v6052 = vpop.f32.mrb[0].mxu0
  %6053 = vmatprep.mubr.f32.mxu0 0.0
  %6054 = vmatmul.mubr.f32.gmra.mrb[0].mxu0 %v5453
  %v6055 = vpop.f32.mrb[0].mxu0
  %v6056 = vadd.f32 0.0, %v6055
  %v6057 = vpop.f32.mrb[0].mxu0
  %6058 = vmatprep.mubr.f32.mxu0 0.0
  %6059 = vmatmul.mubr.f32.gmra.mrb[0].mxu0 %v5456
  %v6060 = vpop.f32.mrb[0].mxu0
  %v6061 = vadd.f32 0.0, %v6060
  %v6062 = vpop.f32.mrb[0].mxu0
  %6063 = vmatprep.mubr.f32.mxu0 0.0
  %6064 = vmatmul.mubr.f32.gmra.mrb[0].mxu0 %v5459
  %v6065 = vpop.f32.mrb[0].mxu0
  %v6066 = vadd.f32 0.0, %v6065
  %v6067 = vpop.f32.mrb[0].mxu0
  %6068 = vmatprep.mubr.f32.mxu0 0.0
  %6069 = vmatmul.mubr.f32.gmra.mrb[0].mxu0 %v5462
  %v6070 = vpop.f32.mrb[0].mxu0
  %v6071 = vadd.f32 0.0, %v6070
  %v6072 = vpop.f32.mrb[0].mxu0
  %6073 = vmatprep.mubr.f32.mxu0 0.0
  %6074 = vmatmul.mubr.f32.gmra.mrb[0].mxu0 %v5465
  %v6075 = vpop.f32.mrb[0].mxu0
  %v6076 = vadd.f32 0.0, %v6075
  %v6077 = vpop.f32.mrb[0].mxu0
  %6078 = vmatprep.mubr.f32.mxu0 0.0
  %6079 = vmatmul.mubr.f32.gmra.mrb[0].mxu0 %v5468
  %v6080 = vpop.f32.mrb[0].mxu0
  %v6081 = vadd.f32 0.0, %v6080
  %v6082 = vpop.f32.mrb[0].mxu0
  %6083 = vmatprep.mubr.f32.mxu0 0.0
  %6084 = vmatmul.mubr.f32.gmra.mrb[0].mxu0 %v5471
  %v6085 = vpop.f32.mrb[0].mxu0
  %v6086 = vadd.f32 0.0, %v6085
  %v6087 = vpop.f32.mrb[0].mxu0
  %6088 = vmatprep.mubr.f32.mxu0 0.0
  %6089 = vmatmul.mubr.f32.gmra.mrb[0].mxu0 %v5474
  %v6090 = vpop.f32.mrb[0].mxu0
  %v6091 = vadd.f32 0.0, %v6090
  %v6092 = vpop.f32.mrb[0].mxu0
  %6093 = vmatprep.mubr.f32.mxu0 0.0
  %6094 = vmatmul.mubr.f32.gmra.mrb[0].mxu0 %v5477
  %v6095 = vpop.f32.mrb[0].mxu0
  %v6096 = vadd.f32 0.0, %v6095
  %v6097 = vpop.f32.mrb[0].mxu0
  %6098 = vmatprep.mubr.f32.mxu0 0.0
  %6099 = vmatmul.mubr.f32.gmra.mrb[0].mxu0 %v5480
  %v6100 = vpop.f32.mrb[0].mxu0
  %v6101 = vadd.f32 0.0, %v6100
  %v6102 = vpop.f32.mrb[0].mxu0
  %6103 = vmatprep.mubr.f32.mxu0 0.0
  %6104 = vmatmul.mubr.f32.gmra.mrb[0].mxu0 %v5483
  %v6105 = vpop.f32.mrb[0].mxu0
  %v6106 = vadd.f32 0.0, %v6105
  %v6107 = vpop.f32.mrb[0].mxu0
  %6108 = vmatprep.mubr.f32.mxu0 0.0
  %6109 = vmatmul.mubr.f32.gmra.mrb[0].mxu0 %v5486
  %v6110 = vpop.f32.mrb[0].mxu0
  %v6111 = vadd.f32 0.0, %v6110
  %v6112 = vpop.f32.mrb[0].mxu0
  %6113 = vmatprep.mubr.f32.mxu0 0.0
  %6114 = vmatmul.mubr.f32.gmra.mrb[0].mxu0 %v5489
  %v6115 = vpop.f32.mrb[0].mxu0
  %v6116 = vadd.f32 0.0, %v6115
  %v6117 = vpop.f32.mrb[0].mxu0
  %6118 = vmatprep.mubr.f32.mxu0 0.0
  %6119 = vmatmul.mubr.f32.gmra.mrb[0].mxu0 %v5492
  %v6120 = vpop.f32.mrb[0].mxu0
  %v6121 = vadd.f32 0.0, %v6120
  %v6122 = vpop.f32.mrb[0].mxu0
  %6123 = vmatprep.mubr.f32.mxu0 0.0
  %6124 = vmatmul.mubr.f32.gmra.mrb[0].mxu0 %v5495
  %v6125 = vpop.f32.mrb[0].mxu0
  %v6126 = vadd.f32 0.0, %v6125
  %v6127 = vpop.f32.mrb[0].mxu0
  %6128 = vmatprep.mubr.f32.mxu0 0.0
  %6129 = vmatmul.mubr.f32.gmra.mrb[0].mxu0 %v5498
  %v6130 = vpop.f32.mrb[0].mxu0
  %v6131 = vadd.f32 0.0, %v6130
  %v6132 = vpop.f32.mrb[0].mxu0
  %6133 = vmatprep.mubr.f32.mxu0 0.0
  %6134 = vmatmul.mubr.f32.gmra.mrb[0].mxu0 %v5501
  %v6135 = vpop.f32.mrb[0].mxu0
  %v6136 = vadd.f32 0.0, %v6135
  %v6137 = vpop.f32.mrb[0].mxu0
  %6138 = vmatprep.mubr.f32.mxu0 0.0
  %6139 = vmatmul.mubr.f32.gmra.mrb[0].mxu0 %v5504
  %v6140 = vpop.f32.mrb[0].mxu0
  %v6141 = vadd.f32 0.0, %v6140
  %v6142 = vpop.f32.mrb[0].mxu0
  %6143 = vmatprep.mubr.f32.mxu0 0.0
  %6144 = vmatmul.mubr.f32.gmra.mrb[0].mxu0 %v5507
  %v6145 = vpop.f32.mrb[0].mxu0
  %v6146 = vadd.f32 0.0, %v6145
  %v6147 = vpop.f32.mrb[0].mxu0
  %6148 = vmatprep.mubr.f32.mxu0 0.0
  %6149 = vmatmul.mubr.f32.gmra.mrb[0].mxu0 %v5510
  %v6150 = vpop.f32.mrb[0].mxu0
  %v6151 = vadd.f32 0.0, %v6150
  %v6152 = vpop.f32.mrb[0].mxu0
  %6153 = vmatprep.mubr.f32.mxu0 0.0
  %6154 = vmatmul.mubr.f32.gmra.mrb[0].mxu0 %v5513
  %v6155 = vpop.f32.mrb[0].mxu0
  %v6156 = vadd.f32 0.0, %v6155
  %v6157 = vpop.f32.mrb[0].mxu0
  %6158 = vmatprep.mubr.f32.mxu0 0.0
  %6159 = vmatmul.mubr.f32.gmra.mrb[0].mxu0 %v5516
  %v6160 = vpop.f32.mrb[0].mxu0
  %v6161 = vadd.f32 0.0, %v6160
  %v6162 = vpop.f32.mrb[0].mxu0
  %6163 = vmatprep.mubr.f32.mxu0 0.0
  %6164 = vmatmul.mubr.f32.gmra.mrb[0].mxu0 %v5519
  %v6165 = vpop.f32.mrb[0].mxu0
  %v6166 = vadd.f32 0.0, %v6165
  %v6167 = vpop.f32.mrb[0].mxu0
  %6168 = vmatprep.mubr.f32.mxu0 0.0
  %6169 = vmatmul.mubr.f32.gmra.mrb[0].mxu0 %v5522
  %v6170 = vpop.f32.mrb[0].mxu0
  %v6171 = vadd.f32 0.0, %v6170
  %v6172 = vpop.f32.mrb[0].mxu0
  %6173 = vmatprep.mubr.f32.mxu0 0.0
  %6174 = vmatmul.mubr.f32.gmra.mrb[0].mxu0 %v5525
  %v6175 = vpop.f32.mrb[0].mxu0
  %v6176 = vadd.f32 0.0, %v6175
  %v6177 = vpop.f32.mrb[0].mxu0
  %6178 = vmatprep.mubr.f32.mxu0 0.0
  %6179 = vmatmul.mubr.f32.gmra.mrb[0].mxu0 %v5528
  %v6180 = vpop.f32.mrb[0].mxu0
  %v6181 = vadd.f32 0.0, %v6180
  %v6182 = vpop.f32.mrb[0].mxu0
  %6183 = vmatprep.mubr.f32.mxu0 0.0
  %6184 = vmatmul.mubr.f32.gmra.mrb[0].mxu0 %v5531
  %v6185 = vpop.f32.mrb[0].mxu0
  %v6186 = vadd.f32 0.0, %v6185
  %v6187 = vpop.f32.mrb[0].mxu0
  %6188 = vmatprep.mubr.f32.mxu0 0.0
  %6189 = vmatmul.mubr.f32.gmra.mrb[0].mxu0 %v5534
  %v6190 = vpop.f32.mrb[0].mxu0
  %v6191 = vadd.f32 0.0, %v6190
  %v6192 = vpop.f32.mrb[0].mxu0
  %6193 = vmatprep.mubr.f32.mxu0 0.0
  %6194 = vmatmul.mubr.f32.gmra.mrb[0].mxu0 %v5537
  %v6195 = vpop.f32.mrb[0].mxu0
  %v6196 = vadd.f32 0.0, %v6195
  %v6197 = vpop.f32.mrb[0].mxu0
  %6198 = vmatprep.mubr.f32.mxu0 0.0
  %6199 = vmatmul.mubr.f32.gmra.mrb[0].mxu0 %v5540
  %v6200 = vpop.f32.mrb[0].mxu0
  %v6201 = vadd.f32 0.0, %v6200
  %v6202 = vpop.f32.mrb[0].mxu0
  %6203 = vmatprep.mubr.f32.mxu0 0.0
  %6204 = vmatmul.mubr.f32.gmra.mrb[0].mxu0 %v5543
  %v6205 = vpop.f32.mrb[0].mxu0
  %v6206 = vadd.f32 0.0, %v6205
  %v6207 = vpop.f32.mrb[0].mxu0
  %6208 = vmatprep.mubr.f32.mxu0 0.0
  %6209 = vmatmul.mubr.f32.gmra.mrb[0].mxu0 %v5546
  %v6210 = vpop.f32.mrb[0].mxu0
  %v6211 = vadd.f32 0.0, %v6210
  %v6212 = vpop.f32.mrb[0].mxu0
  %6213 = vmatprep.mubr.f32.mxu0 0.0
  %6214 = vmatmul.mubr.f32.gmra.mrb[0].mxu0 %v5549
  %v6215 = vpop.f32.mrb[0].mxu0
  %v6216 = vadd.f32 0.0, %v6215
  %v6217 = vpop.f32.mrb[0].mxu0
  %6218 = vmatprep.mubr.f32.mxu0 0.0
  %6219 = vmatmul.mubr.f32.gmra.mrb[0].mxu0 %v5552
  %v6220 = vpop.f32.mrb[0].mxu0
  %v6221 = vadd.f32 0.0, %v6220
  %v6222 = vpop.f32.mrb[0].mxu0
  %6223 = vmatprep.mubr.f32.mxu0 0.0
  %6224 = vmatmul.mubr.f32.gmra.mrb[0].mxu0 %v5555
  %v6225 = vpop.f32.mrb[0].mxu0
  %v6226 = vadd.f32 0.0, %v6225
  %v6227 = vpop.f32.mrb[0].mxu0
  %6228 = vmatprep.mubr.f32.mxu0 0.0
  %6229 = vmatmul.mubr.f32.gmra.mrb[0].mxu0 %v5558
  %v6230 = vpop.f32.mrb[0].mxu0
  %v6231 = vadd.f32 0.0, %v6230
  %v6232 = vpop.f32.mrb[0].mxu0
  %6233 = vmatprep.mubr.f32.mxu0 0.0
  %6234 = vmatmul.mubr.f32.gmra.mrb[0].mxu0 %v5561
  %v6235 = vpop.f32.mrb[0].mxu0
  %v6236 = vadd.f32 0.0, %v6235
  %v6237 = vpop.f32.mrb[0].mxu0
  %6238 = vmatprep.mubr.f32.mxu0 0.0
  %6239 = vmatmul.mubr.f32.gmra.mrb[0].mxu0 %v5564
  %v6240 = vpop.f32.mrb[0].mxu0
  %v6241 = vadd.f32 0.0, %v6240
  %v6242 = vpop.f32.mrb[0].mxu0
  %6243 = vmatprep.mubr.f32.mxu0 0.0
  %6244 = vmatmul.mubr.f32.gmra.mrb[0].mxu0 %v5567
  %v6245 = vpop.f32.mrb[0].mxu0
  %v6246 = vadd.f32 0.0, %v6245
  %v6247 = vpop.f32.mrb[0].mxu0
  %6248 = vmatprep.mubr.f32.mxu0 0.0
  %6249 = vmatmul.mubr.f32.gmra.mrb[0].mxu0 %v5570
  %v6250 = vpop.f32.mrb[0].mxu0
  %v6251 = vadd.f32 0.0, %v6250
  %v6252 = vpop.f32.mrb[0].mxu0
  %6253 = vmatprep.mubr.f32.mxu0 0.0
  %6254 = vmatmul.mubr.f32.gmra.mrb[0].mxu0 %v5573
  %v6255 = vpop.f32.mrb[0].mxu0
  %v6256 = vadd.f32 0.0, %v6255
  %v6257 = vpop.f32.mrb[0].mxu0
  %6258 = vmatprep.mubr.f32.mxu0 0.0
  %6259 = vmatmul.mubr.f32.gmra.mrb[0].mxu0 %v5576
  %v6260 = vpop.f32.mrb[0].mxu0
  %v6261 = vadd.f32 0.0, %v6260
  %v6262 = vpop.f32.mrb[0].mxu0
  %6263 = vmatprep.mubr.f32.mxu0 0.0
  %6264 = vmatmul.mubr.f32.gmra.mrb[0].mxu0 %v5579
  %v6265 = vpop.f32.mrb[0].mxu0
  %v6266 = vadd.f32 0.0, %v6265
  %v6267 = vpop.f32.mrb[0].mxu0
  %6268 = vmatprep.mubr.f32.mxu0 0.0
  %6269 = vmatmul.mubr.f32.gmra.mrb[0].mxu0 %v5582
  %v6270 = vpop.f32.mrb[0].mxu0
  %v6271 = vadd.f32 0.0, %v6270
  %v6272 = vpop.f32.mrb[0].mxu0
  %6273 = vdwg.mxu0
  %v6274 = vmul.f32 %v5651, 0.5
  %v6275 = vmul.f32 %v5656, 0.5
  %v6276 = vmul.f32 %v5661, 0.5
  %v6277 = vmul.f32 %v5666, 0.5
  %v6278 = vmul.f32 %v5671, 0.5
  %v6279 = vmul.f32 %v5676, 0.5
  %v6280 = vmul.f32 %v5681, 0.5
  %v6281 = vmul.f32 %v5686, 0.5
  %v6282 = vmul.f32 %v5691, 0.5
  %v6283 = vmul.f32 %v5696, 0.5
  %v6284 = vmul.f32 %v5701, 0.5
  %v6285 = vmul.f32 %v5706, 0.5
  %v6286 = vmul.f32 %v5711, 0.5
  %v6287 = vmul.f32 %v5716, 0.5
  %v6288 = vmul.f32 %v5721, 0.5
  %v6289 = vmul.f32 %v5726, 0.5
  %v6290 = vmul.f32 %v5731, 0.5
  %v6291 = vmul.f32 %v5736, 0.5
  %v6292 = vmul.f32 %v5741, 0.5
  %v6293 = vmul.f32 %v5746, 0.5
  %v6294 = vmul.f32 %v5751, 0.5
  %v6295 = vmul.f32 %v5756, 0.5
  %v6296 = vmul.f32 %v5761, 0.5
  %v6297 = vmul.f32 %v5766, 0.5
  %v6298 = vmul.f32 %v5771, 0.5
  %v6299 = vmul.f32 %v5776, 0.5
  %v6300 = vmul.f32 %v5781, 0.5
  %v6301 = vmul.f32 %v5786, 0.5
  %v6302 = vmul.f32 %v5791, 0.5
  %v6303 = vmul.f32 %v5796, 0.5
  %v6304 = vmul.f32 %v5801, 0.5
  %v6305 = vmul.f32 %v5806, 0.5
  %v6306 = vmul.f32 %v5811, 0.5
  %v6307 = vmul.f32 %v5816, 0.5
  %v6308 = vmul.f32 %v5821, 0.5
  %v6309 = vmul.f32 %v5826, 0.5
  %v6310 = vmul.f32 %v5831, 0.5
  %v6311 = vmul.f32 %v5836, 0.5
  %v6312 = vmul.f32 %v5841, 0.5
  %v6313 = vmul.f32 %v5846, 0.5
  %v6314 = vmul.f32 %v5851, 0.5
  %v6315 = vmul.f32 %v5856, 0.5
  %v6316 = vmul.f32 %v5861, 0.5
  %v6317 = vmul.f32 %v5866, 0.5
  %v6318 = vmul.f32 %v5871, 0.5
  %v6319 = vmul.f32 %v5876, 0.5
  %v6320 = vmul.f32 %v5881, 0.5
  %v6321 = vmul.f32 %v5886, 0.5
  %v6322 = vmul.f32 %v5891, 0.5
  %v6323 = vmul.f32 %v5896, 0.5
  %v6324 = vmul.f32 %v5901, 0.5
  %v6325 = vmul.f32 %v5906, 0.5
  %v6326 = vmul.f32 %v5911, 0.5
  %v6327 = vmul.f32 %v5916, 0.5
  %v6328 = vmul.f32 %v5921, 0.5
  %v6329 = vmul.f32 %v5926, 0.5
  %v6330 = vmul.f32 %v5931, 0.5
  %v6331 = vmul.f32 %v5936, 0.5
  %v6332 = vmul.f32 %v5941, 0.5
  %v6333 = vmul.f32 %v5946, 0.5
  %v6334 = vmul.f32 %v5951, 0.5
  %v6335 = vmul.f32 %v5956, 0.5
  %v6336 = vmul.f32 %v5961, 0.5
  %v6337 = vmul.f32 %v5966, 0.5
  %v6338 = vmul.f32 %v5971, 0.5
  %v6339 = vmul.f32 %v5976, 0.5
  %v6340 = vmul.f32 %v5981, 0.5
  %v6341 = vmul.f32 %v5986, 0.5
  %v6342 = vmul.f32 %v5991, 0.5
  %v6343 = vmul.f32 %v5996, 0.5
  %v6344 = vmul.f32 %v6001, 0.5
  %v6345 = vmul.f32 %v6006, 0.5
  %v6346 = vmul.f32 %v6011, 0.5
  %v6347 = vmul.f32 %v6016, 0.5
  %v6348 = vmul.f32 %v6021, 0.5
  %v6349 = vmul.f32 %v6026, 0.5
  %v6350 = vmul.f32 %v6031, 0.5
  %v6351 = vmul.f32 %v6036, 0.5
  %v6352 = vmul.f32 %v6041, 0.5
  %v6353 = vmul.f32 %v6046, 0.5
  %v6354 = vmul.f32 %v6051, 0.5
  %v6355 = vmul.f32 %v6056, 0.5
  %v6356 = vmul.f32 %v6061, 0.5
  %v6357 = vmul.f32 %v6066, 0.5
  %v6358 = vmul.f32 %v6071, 0.5
  %v6359 = vmul.f32 %v6076, 0.5
  %v6360 = vmul.f32 %v6081, 0.5
  %v6361 = vmul.f32 %v6086, 0.5
  %v6362 = vmul.f32 %v6091, 0.5
  %v6363 = vmul.f32 %v6096, 0.5
  %v6364 = vmul.f32 %v6101, 0.5
  %v6365 = vmul.f32 %v6106, 0.5
  %v6366 = vmul.f32 %v6111, 0.5
  %v6367 = vmul.f32 %v6116, 0.5
  %v6368 = vmul.f32 %v6121, 0.5
  %v6369 = vmul.f32 %v6126, 0.5
  %v6370 = vmul.f32 %v6131, 0.5
  %v6371 = vmul.f32 %v6136, 0.5
  %v6372 = vmul.f32 %v6141, 0.5
  %v6373 = vmul.f32 %v6146, 0.5
  %v6374 = vmul.f32 %v6151, 0.5
  %v6375 = vmul.f32 %v6156, 0.5
  %v6376 = vmul.f32 %v6161, 0.5
  %v6377 = vmul.f32 %v6166, 0.5
  %v6378 = vmul.f32 %v6171, 0.5
  %v6379 = vmul.f32 %v6176, 0.5
  %v6380 = vmul.f32 %v6181, 0.5
  %v6381 = vmul.f32 %v6186, 0.5
  %v6382 = vmul.f32 %v6191, 0.5
  %v6383 = vmul.f32 %v6196, 0.5
  %v6384 = vmul.f32 %v6201, 0.5
  %v6385 = vmul.f32 %v6206, 0.5
  %v6386 = vmul.f32 %v6211, 0.5
  %v6387 = vmul.f32 %v6216, 0.5
  %v6388 = vmul.f32 %v6221, 0.5
  %v6389 = vmul.f32 %v6226, 0.5
  %v6390 = vmul.f32 %v6231, 0.5
  %v6391 = vmul.f32 %v6236, 0.5
  %v6392 = vmul.f32 %v6241, 0.5
  %v6393 = vmul.f32 %v6246, 0.5
  %v6394 = vmul.f32 %v6251, 0.5
  %v6395 = vmul.f32 %v6256, 0.5
  %v6396 = vmul.f32 %v6261, 0.5
  %v6397 = vmul.f32 %v6266, 0.5
  %v6398 = vmul.f32 %v6271, 0.5
  %6399 = vst.msk [vmem:[%s10] sm:$0xff] %vm1358, %v6274
  %6400 = vst.msk [vmem:[%s10 + $0x8] sm:$0xff] %vm1358, %v6275
  %6401 = vst.msk [vmem:[%s10 + $0x10] sm:$0xff] %vm1358, %v6276
  %6402 = vst.msk [vmem:[%s10 + $0x18] sm:$0xff] %vm1358, %v6277
  %6403 = vst.msk [vmem:[%s10 + $0x20] sm:$0xff] %vm1358, %v6278
  %6404 = vst.msk [vmem:[%s10 + $0x28] sm:$0xff] %vm1358, %v6279
  %6405 = vst.msk [vmem:[%s10 + $0x30] sm:$0xff] %vm1358, %v6280
  %6406 = vst.msk [vmem:[%s10 + $0x38] sm:$0xff] %vm1358, %v6281
  %6407 = vst.msk [vmem:[%s10 + $0x40] sm:$0xff] %vm1358, %v6282
  %6408 = vst.msk [vmem:[%s10 + $0x48] sm:$0xff] %vm1358, %v6283
  %6409 = vst.msk [vmem:[%s10 + $0x50] sm:$0xff] %vm1358, %v6284
  %6410 = vst.msk [vmem:[%s10 + $0x58] sm:$0xff] %vm1358, %v6285
  %6411 = vst.msk [vmem:[%s10 + $0x60] sm:$0xff] %vm1358, %v6286
  %6412 = vst.msk [vmem:[%s10 + $0x68] sm:$0xff] %vm1358, %v6287
  %6413 = vst.msk [vmem:[%s10 + $0x70] sm:$0xff] %vm1358, %v6288
  %6414 = vst.msk [vmem:[%s10 + $0x78] sm:$0xff] %vm1358, %v6289
  %6415 = vst.msk [vmem:[%s10 + $0x80] sm:$0xff] %vm1358, %v6290
  %6416 = vst.msk [vmem:[%s10 + $0x88] sm:$0xff] %vm1358, %v6291
  %6417 = vst.msk [vmem:[%s10 + $0x90] sm:$0xff] %vm1358, %v6292
  %6418 = vst.msk [vmem:[%s10 + $0x98] sm:$0xff] %vm1358, %v6293
  %6419 = vst.msk [vmem:[%s10 + $0xa0] sm:$0xff] %vm1358, %v6294
  %6420 = vst.msk [vmem:[%s10 + $0xa8] sm:$0xff] %vm1358, %v6295
  %6421 = vst.msk [vmem:[%s10 + $0xb0] sm:$0xff] %vm1358, %v6296
  %6422 = vst.msk [vmem:[%s10 + $0xb8] sm:$0xff] %vm1358, %v6297
  %6423 = vst.msk [vmem:[%s10 + $0xc0] sm:$0xff] %vm1358, %v6298
  %6424 = vst.msk [vmem:[%s10 + $0xc8] sm:$0xff] %vm1358, %v6299
  %6425 = vst.msk [vmem:[%s10 + $0xd0] sm:$0xff] %vm1358, %v6300
  %6426 = vst.msk [vmem:[%s10 + $0xd8] sm:$0xff] %vm1358, %v6301
  %6427 = vst.msk [vmem:[%s10 + $0xe0] sm:$0xff] %vm1358, %v6302
  %6428 = vst.msk [vmem:[%s10 + $0xe8] sm:$0xff] %vm1358, %v6303
  %6429 = vst.msk [vmem:[%s10 + $0xf0] sm:$0xff] %vm1358, %v6304
  %6430 = vst.msk [vmem:[%s10 + $0xf8] sm:$0xff] %vm1358, %v6305
  %6431 = vst.msk [vmem:[%s10 + $0x100] sm:$0xff] %vm1358, %v6306
  %6432 = vst.msk [vmem:[%s10 + $0x108] sm:$0xff] %vm1358, %v6307
  %6433 = vst.msk [vmem:[%s10 + $0x110] sm:$0xff] %vm1358, %v6308
  %6434 = vst.msk [vmem:[%s10 + $0x118] sm:$0xff] %vm1358, %v6309
  %6435 = vst.msk [vmem:[%s10 + $0x120] sm:$0xff] %vm1358, %v6310
  %6436 = vst.msk [vmem:[%s10 + $0x128] sm:$0xff] %vm1358, %v6311
  %6437 = vst.msk [vmem:[%s10 + $0x130] sm:$0xff] %vm1358, %v6312
  %6438 = vst.msk [vmem:[%s10 + $0x138] sm:$0xff] %vm1358, %v6313
  %6439 = vst.msk [vmem:[%s10 + $0x140] sm:$0xff] %vm1358, %v6314
  %6440 = vst.msk [vmem:[%s10 + $0x148] sm:$0xff] %vm1358, %v6315
  %6441 = vst.msk [vmem:[%s10 + $0x150] sm:$0xff] %vm1358, %v6316
  %6442 = vst.msk [vmem:[%s10 + $0x158] sm:$0xff] %vm1358, %v6317
  %6443 = vst.msk [vmem:[%s10 + $0x160] sm:$0xff] %vm1358, %v6318
  %6444 = vst.msk [vmem:[%s10 + $0x168] sm:$0xff] %vm1358, %v6319
  %6445 = vst.msk [vmem:[%s10 + $0x170] sm:$0xff] %vm1358, %v6320
  %6446 = vst.msk [vmem:[%s10 + $0x178] sm:$0xff] %vm1358, %v6321
  %6447 = vst.msk [vmem:[%s10 + $0x180] sm:$0xff] %vm1358, %v6322
  %6448 = vst.msk [vmem:[%s10 + $0x188] sm:$0xff] %vm1358, %v6323
  %6449 = vst.msk [vmem:[%s10 + $0x190] sm:$0xff] %vm1358, %v6324
  %6450 = vst.msk [vmem:[%s10 + $0x198] sm:$0xff] %vm1358, %v6325
  %6451 = vst.msk [vmem:[%s10 + $0x1a0] sm:$0xff] %vm1358, %v6326
  %6452 = vst.msk [vmem:[%s10 + $0x1a8] sm:$0xff] %vm1358, %v6327
  %6453 = vst.msk [vmem:[%s10 + $0x1b0] sm:$0xff] %vm1358, %v6328
  %6454 = vst.msk [vmem:[%s10 + $0x1b8] sm:$0xff] %vm1358, %v6329
  %6455 = vst.msk [vmem:[%s10 + $0x1c0] sm:$0xff] %vm1358, %v6330
  %6456 = vst.msk [vmem:[%s10 + $0x1c8] sm:$0xff] %vm1358, %v6331
  %6457 = vst.msk [vmem:[%s10 + $0x1d0] sm:$0xff] %vm1358, %v6332
  %6458 = vst.msk [vmem:[%s10 + $0x1d8] sm:$0xff] %vm1358, %v6333
  %6459 = vst.msk [vmem:[%s10 + $0x1e0] sm:$0xff] %vm1358, %v6334
  %6460 = vst.msk [vmem:[%s10 + $0x1e8] sm:$0xff] %vm1358, %v6335
  %6461 = vst.msk [vmem:[%s10 + $0x1f0] sm:$0xff] %vm1358, %v6336
  %6462 = vst.msk [vmem:[%s10 + $0x1f8] sm:$0xff] %vm1358, %v6337
  %6463 = vst.msk [vmem:[%s10 + $0x200] sm:$0xff] %vm1358, %v6338
  %6464 = vst.msk [vmem:[%s10 + $0x208] sm:$0xff] %vm1358, %v6339
  %6465 = vst.msk [vmem:[%s10 + $0x210] sm:$0xff] %vm1358, %v6340
  %6466 = vst.msk [vmem:[%s10 + $0x218] sm:$0xff] %vm1358, %v6341
  %6467 = vst.msk [vmem:[%s10 + $0x220] sm:$0xff] %vm1358, %v6342
  %6468 = vst.msk [vmem:[%s10 + $0x228] sm:$0xff] %vm1358, %v6343
  %6469 = vst.msk [vmem:[%s10 + $0x230] sm:$0xff] %vm1358, %v6344
  %6470 = vst.msk [vmem:[%s10 + $0x238] sm:$0xff] %vm1358, %v6345
  %6471 = vst.msk [vmem:[%s10 + $0x240] sm:$0xff] %vm1358, %v6346
  %6472 = vst.msk [vmem:[%s10 + $0x248] sm:$0xff] %vm1358, %v6347
  %6473 = vst.msk [vmem:[%s10 + $0x250] sm:$0xff] %vm1358, %v6348
  %6474 = vst.msk [vmem:[%s10 + $0x258] sm:$0xff] %vm1358, %v6349
  %6475 = vst.msk [vmem:[%s10 + $0x260] sm:$0xff] %vm1358, %v6350
  %6476 = vst.msk [vmem:[%s10 + $0x268] sm:$0xff] %vm1358, %v6351
  %6477 = vst.msk [vmem:[%s10 + $0x270] sm:$0xff] %vm1358, %v6352
  %6478 = vst.msk [vmem:[%s10 + $0x278] sm:$0xff] %vm1358, %v6353
  %6479 = vst.msk [vmem:[%s10 + $0x280] sm:$0xff] %vm1358, %v6354
  %6480 = vst.msk [vmem:[%s10 + $0x288] sm:$0xff] %vm1358, %v6355
  %6481 = vst.msk [vmem:[%s10 + $0x290] sm:$0xff] %vm1358, %v6356
  %6482 = vst.msk [vmem:[%s10 + $0x298] sm:$0xff] %vm1358, %v6357
  %6483 = vst.msk [vmem:[%s10 + $0x2a0] sm:$0xff] %vm1358, %v6358
  %6484 = vst.msk [vmem:[%s10 + $0x2a8] sm:$0xff] %vm1358, %v6359
  %6485 = vst.msk [vmem:[%s10 + $0x2b0] sm:$0xff] %vm1358, %v6360
  %6486 = vst.msk [vmem:[%s10 + $0x2b8] sm:$0xff] %vm1358, %v6361
  %6487 = vst.msk [vmem:[%s10 + $0x2c0] sm:$0xff] %vm1358, %v6362
  %6488 = vst.msk [vmem:[%s10 + $0x2c8] sm:$0xff] %vm1358, %v6363
  %6489 = vst.msk [vmem:[%s10 + $0x2d0] sm:$0xff] %vm1358, %v6364
  %6490 = vst.msk [vmem:[%s10 + $0x2d8] sm:$0xff] %vm1358, %v6365
  %6491 = vst.msk [vmem:[%s10 + $0x2e0] sm:$0xff] %vm1358, %v6366
  %6492 = vst.msk [vmem:[%s10 + $0x2e8] sm:$0xff] %vm1358, %v6367
  %6493 = vst.msk [vmem:[%s10 + $0x2f0] sm:$0xff] %vm1358, %v6368
  %6494 = vst.msk [vmem:[%s10 + $0x2f8] sm:$0xff] %vm1358, %v6369
  %6495 = vst.msk [vmem:[%s10 + $0x300] sm:$0xff] %vm1358, %v6370
  %6496 = vst.msk [vmem:[%s10 + $0x308] sm:$0xff] %vm1358, %v6371
  %6497 = vst.msk [vmem:[%s10 + $0x310] sm:$0xff] %vm1358, %v6372
  %6498 = vst.msk [vmem:[%s10 + $0x318] sm:$0xff] %vm1358, %v6373
  %6499 = vst.msk [vmem:[%s10 + $0x320] sm:$0xff] %vm1358, %v6374
  %6500 = vst.msk [vmem:[%s10 + $0x328] sm:$0xff] %vm1358, %v6375
  %6501 = vst.msk [vmem:[%s10 + $0x330] sm:$0xff] %vm1358, %v6376
  %6502 = vst.msk [vmem:[%s10 + $0x338] sm:$0xff] %vm1358, %v6377
  %6503 = vst.msk [vmem:[%s10 + $0x340] sm:$0xff] %vm1358, %v6378
  %6504 = vst.msk [vmem:[%s10 + $0x348] sm:$0xff] %vm1358, %v6379
  %6505 = vst.msk [vmem:[%s10 + $0x350] sm:$0xff] %vm1358, %v6380
  %6506 = vst.msk [vmem:[%s10 + $0x358] sm:$0xff] %vm1358, %v6381
  %6507 = vst.msk [vmem:[%s10 + $0x360] sm:$0xff] %vm1358, %v6382
  %6508 = vst.msk [vmem:[%s10 + $0x368] sm:$0xff] %vm1358, %v6383
  %6509 = vst.msk [vmem:[%s10 + $0x370] sm:$0xff] %vm1358, %v6384
  %6510 = vst.msk [vmem:[%s10 + $0x378] sm:$0xff] %vm1358, %v6385
  %6511 = vst.msk [vmem:[%s10 + $0x380] sm:$0xff] %vm1358, %v6386
  %6512 = vst.msk [vmem:[%s10 + $0x388] sm:$0xff] %vm1358, %v6387
  %6513 = vst.msk [vmem:[%s10 + $0x390] sm:$0xff] %vm1358, %v6388
  %6514 = vst.msk [vmem:[%s10 + $0x398] sm:$0xff] %vm1358, %v6389
  %6515 = vst.msk [vmem:[%s10 + $0x3a0] sm:$0xff] %vm1358, %v6390
  %6516 = vst.msk [vmem:[%s10 + $0x3a8] sm:$0xff] %vm1358, %v6391
  %6517 = vst.msk [vmem:[%s10 + $0x3b0] sm:$0xff] %vm1358, %v6392
  %6518 = vst.msk [vmem:[%s10 + $0x3b8] sm:$0xff] %vm1358, %v6393
  %6519 = vst.msk [vmem:[%s10 + $0x3c0] sm:$0xff] %vm1358, %v6394
  %6520 = vst.msk [vmem:[%s10 + $0x3c8] sm:$0xff] %vm1358, %v6395
  %6521 = vst.msk [vmem:[%s10 + $0x3d0] sm:$0xff] %vm1358, %v6396
  %6522 = vst.msk [vmem:[%s10 + $0x3d8] sm:$0xff] %vm1358, %v6397
  %6523 = vst.msk [vmem:[%s10 + $0x3e0] sm:$0xff] %vm1358, %v6398
  // Predicated region
  $region42: #{tpu_custom_call.1} parent=0 // pred_check
    _
  $region43: #{tpu_custom_call.1} parent=0 // pred_check_branch
    %6525 = sbr.rel (0) target = $region45
  $region44: #{tpu_custom_call.1} parent=0 // pred_region
    _
  $region45: #{tpu_custom_call.1} parent=0 // pred_fallthru
    _
  // Predicated region
  $region46: #{tpu_custom_call.1} parent=0 // pred_check
    _
  $region47: #{tpu_custom_call.1} parent=0 // pred_check_branch
    %6527 = sbr.rel (0) target = $region49
  $region48: #{tpu_custom_call.1} parent=0 // pred_region
    _
  $region49: #{tpu_custom_call.1} parent=0 // pred_fallthru
    _

</llo_original>
